<compile_context>
chip_gen: v7x
topology: tpu7x:2x2x1
jax: 0.10.0
libtpu: 0.0.40
codegen_flags: <defaults>
</compile_context>

<pallas_src>
import functools
import numpy as np
import jax
import jax.numpy as jnp
from jax import lax
from jax.experimental import pallas as pl
from jax.experimental.pallas import tpu as pltpu


def _leaky_relu(x, slope=0.01):
    # matches torch.nn.functional.leaky_relu default negative_slope=0.01
    return jnp.where(x > 0, x, slope * x)


# ----------------------------------------------------------------------------
# fused kernel
# ----------------------------------------------------------------------------
def _make_fused_kernel(bs, num_ensemble, dim_x, dim_z, noise_const, noise_init):
    en = num_ensemble
    scale = 1.0 / (en - 1)
    f32 = jnp.float32
    bf16 = jnp.bfloat16
    TN = (((0,), (0,)), ((), ()))  # contract dim 0 of both operands: A^T @ A

    def kernel(x_ref, obs_ref,
               pw1, pb1, pw3, pb3, pwm2, pbm2,
               sw2_hbm, sb2, sw3_hbm, sb3, sw5, sb5, sw6, sb6,
               nw1, nb1, nw2, nb2,
               state_out, small_out,
               w2_buf, w3_buf, dma_sem):
        # -- start DMA of the two big sensor weights; overlaps the process MLP.
        cp2 = pltpu.make_async_copy(sw2_hbm, w2_buf, dma_sem.at[0])
        cp3 = pltpu.make_async_copy(sw3_hbm, w3_buf, dma_sem.at[1])
        cp2.start()
        cp3.start()

        # ---------- process model: (win*dim_x) -> 256 -> 512 -> dim_x ----------
        # bf16 operands, f32 accumulation on the MXU.
        x = x_ref[...]                                                  # (bs*en, win*dim_x) bf16
        h = _leaky_relu(jnp.dot(x, pw1[...], preferred_element_type=f32) + pb1[...])
        h = _leaky_relu(jnp.dot(h.astype(bf16), pw3[...],
                                preferred_element_type=f32) + pb3[...])
        sp_all = (jnp.dot(h.astype(bf16), pwm2[...],
                          preferred_element_type=f32) + pbm2[...])      # (bs*en, dim_x) f32

        cp2.wait()
        cp3.wait()

        # ---------- sensor model on bs rows only (ensemble rows identical) -----
        o = obs_ref[...]                                                # (bs, win*input1) bf16
        s = _leaky_relu(jnp.dot(o, w2_buf[...], preferred_element_type=f32) + sb2[...])
        s = _leaky_relu(jnp.dot(s.astype(bf16), w3_buf[...],
                                preferred_element_type=f32) + sb3[...])
        s = _leaky_relu(jnp.dot(s.astype(bf16), sw5[...],
                                preferred_element_type=f32) + sb5[...])
        ez = (jnp.dot(s.astype(bf16), sw6[...],
                      preferred_element_type=f32) + sb6[...])           # (bs, dim_z) f32

        # ---------- observation noise diag: dim_z -> 32 -> dim_z (tiny, f32) ----
        nh = jnp.maximum(jnp.dot(ez, nw1[...], preferred_element_type=f32) + nb1[...],
                         0.0)
        d = jnp.dot(nh, nw2[...], preferred_element_type=f32) + nb2[...]
        dg = jnp.square(d + noise_const) + noise_init                   # (bs, dim_z)

        # ---------- EnKF update (H = identity, dim_x == dim_z) ------------------
        eye2 = (lax.broadcasted_iota(jnp.int32, (dim_x, dim_x), 0)
                == lax.broadcasted_iota(jnp.int32, (dim_x, dim_x), 1))
        row3 = lax.broadcasted_iota(jnp.int32, (1, dim_x, 1), 1)

        # Per-batch ensemble stats + C = scale * A^T A via one MXU op each
        # (iterations are independent -> the scheduler interleaves them).
        sp_list, mA_list, S_list, C_list = [], [], [], []
        for b in range(bs):
            sp_b = sp_all[b * en:(b + 1) * en, :]                       # (en, dim_x)
            mA_b = jnp.mean(sp_b, axis=0, keepdims=True)                # (1, dim_x)
            A_b = sp_b - mA_b
            C_b = lax.dot_general(A_b, A_b, TN,
                                  preferred_element_type=f32) * scale   # (dim_x, dim_x)
            S_b = C_b + jnp.where(eye2, dg[b:b + 1, :], 0.0)            # + diag(R)
            sp_list.append(sp_b)
            mA_list.append(mA_b)
            C_list.append(C_b[None])
            S_list.append(S_b[None])

        # Batched Gauss-Jordan sweep (shared pivot chain across the batch):
        # solves S_b @ KT_b = C_b for every batch.  S is SPD -> no pivoting.
        S3 = jnp.concatenate(S_list, axis=0)                            # (bs, dim_x, dim_x)
        B3 = jnp.concatenate(C_list, axis=0)                            # (bs, dim_x, dim_x)
        for k in range(dim_x):
            srow = S3[:, k:k + 1, :]                                    # (bs, 1, dim_x)
            brow = B3[:, k:k + 1, :]
            piv = srow[:, :, k:k + 1]                                   # (bs, 1, 1)
            r = pl.reciprocal(piv, approx=True)
            r = r * (2.0 - piv * r)                                     # one Newton step
            srow = srow * r
            brow = brow * r
            scol = S3[:, :, k:k + 1]                                    # (bs, dim_x, 1)
            is_piv = row3 == k
            S3 = jnp.where(is_piv, srow, S3 - scol * srow)
            B3 = jnp.where(is_piv, brow, B3 - scol * brow)
        # B3 = K^T = S^{-1} C  per batch (S, C symmetric)

        # gain / new state per batch; ensemble_z rows are identical (= ez_b).
        for b in range(bs):
            sp_b = sp_list[b]
            diff_b = ez[b:b + 1, :] - sp_b                              # (en, dim_x)
            gain_b = jnp.dot(diff_b, B3[b], preferred_element_type=f32)
            snew_b = sp_b + gain_b
            state_out[b * en:(b + 1) * en, :] = snew_b
            small_out[b:b + 1, :] = jnp.mean(snew_b, axis=0, keepdims=True)  # m_state_new
            small_out[bs + b:bs + b + 1, :] = mA_list[b]                     # m_state_pred
        small_out[2 * bs:3 * bs, :] = ez                                     # z (one store)

    return kernel


# ----------------------------------------------------------------------------
# full forward (KalmanSmartwatchModel.forward)
# ----------------------------------------------------------------------------
def kalman_forward(raw_obs, state_old, params, *, num_ensemble, dim_x, dim_z,
                   win_size):
    assert dim_x == dim_z, "EnKF update assumes identity H (dim_x == dim_z)"
    bs = state_old.shape[0]
    en = num_ensemble
    rows = bs * en
    f32, bf16 = jnp.float32, jnp.bfloat16

    x_state = state_old.reshape(rows, win_size * dim_x).astype(bf16)
    x_obs = raw_obs.reshape(bs, -1).astype(bf16)

    # observation-noise constants baked into the kernel (r_diag = 0.05 as in module)
    noise_const = 0.001
    noise_init = float(np.sqrt(0.05 * 0.05 - noise_const))

    kernel = _make_fused_kernel(bs, en, dim_x, dim_z, noise_const, noise_init)

    vmem = pl.BlockSpec(memory_space=pltpu.MemorySpace.VMEM)
    hbm = pl.BlockSpec(memory_space=pl.ANY)
    in_specs = [vmem] * 20
    in_specs[8] = hbm    # s_w2: manual DMA, overlapped with process MLP
    in_specs[10] = hbm   # s_w3: manual DMA, overlapped with process MLP

    out_state, out_small = pl.pallas_call(
        kernel,
        out_shape=(jax.ShapeDtypeStruct((rows, dim_x), f32),
                   jax.ShapeDtypeStruct((3 * bs, dim_x), f32)),
        in_specs=in_specs,
        out_specs=(vmem, vmem),
        scratch_shapes=[pltpu.VMEM(params["s_w2"].shape, bf16),
                        pltpu.VMEM(params["s_w3"].shape, bf16),
                        pltpu.SemaphoreType.DMA((2,))],
    )(x_state, x_obs,
      params["p_w1"].astype(bf16), params["p_b1"],
      params["p_w3"].astype(bf16), params["p_b3"],
      params["p_wm2"].astype(bf16), params["p_bm2"],
      params["s_w2"].astype(bf16), params["s_b2"],
      params["s_w3"].astype(bf16), params["s_b3"],
      params["s_w5"].astype(bf16), params["s_b5"],
      params["s_w6"].astype(bf16), params["s_b6"],
      params["n_w1"], params["n_b1"], params["n_w2"], params["n_b2"])

    state_new = out_state.reshape(bs, en, dim_x)
    m_state_new = out_small[0:bs].reshape(bs, 1, dim_x)
    m_state_pred = out_small[bs:2 * bs].reshape(bs, 1, dim_x)
    z = out_small[2 * bs:3 * bs].reshape(bs, 1, dim_z)
    # flipout mean weights -> all ensemble members of the sensor model identical
    ensemble_z = jnp.broadcast_to(z, (bs, en, dim_z))

    return (state_new.astype(f32), m_state_new.astype(f32),
            m_state_pred.astype(f32), z.astype(f32), ensemble_z.astype(f32))


# ----------------------------------------------------------------------------
# pure-JAX reference (same math / same bf16 weight-activation policy)
# ----------------------------------------------------------------------------
def kalman_forward_ref(raw_obs, state_old, params, *, num_ensemble, dim_x, dim_z,
                       win_size):
    bs = state_old.shape[0]
    en = num_ensemble
    f32, bf16 = jnp.float32, jnp.bfloat16
    hi = lax.Precision.HIGHEST

    def mm(a, w):  # bf16 operands, f32 accumulation -- mirrors the kernel
        return jnp.dot(a.astype(bf16), w.astype(bf16), precision=hi,
                       preferred_element_type=f32)

    x = state_old.reshape(bs * en, win_size * dim_x)
    h = _leaky_relu(mm(x, params["p_w1"]) + params["p_b1"])
    h = _leaky_relu(mm(h, params["p_w3"]) + params["p_b3"])
    state_pred = (mm(h, params["p_wm2"]) + params["p_bm2"]).reshape(bs, en, dim_x)

    o = raw_obs.reshape(bs, -1)
    o = jnp.broadcast_to(o[:, None, :], (bs, en, o.shape[-1])).reshape(bs * en, -1)
    s = _leaky_relu(mm(o, params["s_w2"]) + params["s_b2"])
    s = _leaky_relu(mm(s, params["s_w3"]) + params["s_b3"])
    s = _leaky_relu(mm(s, params["s_w5"]) + params["s_b5"])
    ensemble_z = (mm(s, params["s_w6"]) + params["s_b6"]).reshape(bs, en, dim_z)
    z = jnp.mean(ensemble_z, axis=1, keepdims=True)

    nh = jnp.maximum(jnp.dot(z.reshape(bs, dim_z), params["n_w1"], precision=hi)
                     + params["n_b1"], 0.0)
    d = jnp.dot(nh, params["n_w2"], precision=hi) + params["n_b2"]
    const = 0.001
    init = float(np.sqrt(0.05 * 0.05 - const))
    diag = jnp.square(d + const) + init
    R = diag[:, :, None] * jnp.eye(dim_z, dtype=f32)

    m_A = jnp.mean(state_pred, axis=1)
    A = state_pred - m_A[:, None, :]
    A_T = jnp.transpose(A, (0, 2, 1))
    H_A = A
    H_AT = A_T
    H_XT = jnp.transpose(state_pred, (0, 2, 1))
    y = jnp.transpose(ensemble_z, (0, 2, 1))
    scale = 1.0 / (en - 1)
    innovation = scale * jnp.matmul(H_AT, H_A, precision=hi) + R
    inv_innovation = jnp.linalg.inv(innovation)
    K = scale * jnp.matmul(jnp.matmul(A_T, H_A, precision=hi), inv_innovation,
                           precision=hi)
    gain = jnp.transpose(jnp.matmul(K, y - H_XT, precision=hi), (0, 2, 1))
    state_new = state_pred + gain
    m_state_new = jnp.mean(state_new, axis=1, keepdims=True)
    m_state_pred = m_A[:, None, :]
    return state_new, m_state_new, m_state_pred, z, ensemble_z


# ----------------------------------------------------------------------------
# deterministic parameter initialization (synthetic; shapes from __init__)
# ----------------------------------------------------------------------------
def init_params(key, win_size, dim_x, dim_z, input_size_1):
    keys = jax.random.split(key, 9)

    def lin(k, fin, fout):
        kw, kb = jax.random.split(k)
        s = 1.0 / np.sqrt(fin)
        w = jax.random.uniform(kw, (fin, fout), jnp.float32, -s, s)
        b = jax.random.uniform(kb, (1, fout), jnp.float32, -s, s)
        return w, b

    p = {}
    # ProcessModelSeqMLP
    p["p_w1"], p["p_b1"] = lin(keys[0], dim_x * win_size, 256)
    p["p_w3"], p["p_b3"] = lin(keys[1], 256, 512)
    p["p_wm2"], p["p_bm2"] = lin(keys[2], 512, dim_x)
    # SensorModelSeq
    p["s_w2"], p["s_b2"] = lin(keys[3], input_size_1 * win_size, 256)
    p["s_w3"], p["s_b3"] = lin(keys[4], 256, 256)
    p["s_w5"], p["s_b5"] = lin(keys[5], 256, 64)
    p["s_w6"], p["s_b6"] = lin(keys[6], 64, dim_z)
    # NewObservationNoise
    p["n_w1"], p["n_b1"] = lin(keys[7], dim_z, 32)
    p["n_w2"], p["n_b2"] = lin(keys[8], 32, dim_z)
    return p


# ----------------------------------------------------------------------------
if __name__ == "__main__":
    num_ensemble = 16
    win_size = 8
    dim_x = 8
    dim_z = 8
    input_size_1 = 16
    bs = 2

    key = jax.random.PRNGKey(0)
    k_obs, k_state = jax.random.split(key)
    raw_obs = jax.random.normal(k_obs, (bs, 1, win_size, input_size_1), jnp.float32)
    state_old = jax.random.normal(k_state, (bs, num_ensemble, win_size, dim_x),
                                  jnp.float32)

    params = init_params(jax.random.PRNGKey(42), win_size, dim_x, dim_z,
                         input_size_1)

    fwd = jax.jit(functools.partial(kalman_forward, num_ensemble=num_ensemble,
                                    dim_x=dim_x, dim_z=dim_z, win_size=win_size))
    out = fwd(raw_obs, state_old, params)
    jax.block_until_ready(out)

    state_new, m_state_new, m_state_pred, z, ensemble_z = out
    assert state_new.shape == (bs, num_ensemble, dim_x)
    assert m_state_new.shape == (bs, 1, dim_x)
    assert m_state_pred.shape == (bs, 1, dim_x)
    assert z.shape == (bs, 1, dim_z)
    assert ensemble_z.shape == (bs, num_ensemble, dim_z)

    # correctness check against a pure-JAX reference of the same math
    ref = kalman_forward_ref(raw_obs, state_old, params, num_ensemble=num_ensemble,
                             dim_x=dim_x, dim_z=dim_z, win_size=win_size)
    for got, want in zip(out, ref):
        np.testing.assert_allclose(np.asarray(got), np.asarray(want),
                                   rtol=1e-2, atol=1e-3)

    print("KERNEL_OK")
</pallas_src>

<mosaic_0001>
module attributes {stable_mosaic.version = 11 : i64} {
  func.func @kernel(%arg0: memref<32x64xbf16, #tpu.memory_space<vmem>>, %arg1: memref<2x128xbf16, #tpu.memory_space<vmem>>, %arg2: memref<64x256xbf16, #tpu.memory_space<vmem>>, %arg3: memref<1x256xf32, #tpu.memory_space<vmem>>, %arg4: memref<256x512xbf16, #tpu.memory_space<vmem>>, %arg5: memref<1x512xf32, #tpu.memory_space<vmem>>, %arg6: memref<512x8xbf16, #tpu.memory_space<vmem>>, %arg7: memref<1x8xf32, #tpu.memory_space<vmem>>, %arg8: memref<128x256xbf16, #tpu.memory_space<any>>, %arg9: memref<1x256xf32, #tpu.memory_space<vmem>>, %arg10: memref<256x256xbf16, #tpu.memory_space<any>>, %arg11: memref<1x256xf32, #tpu.memory_space<vmem>>, %arg12: memref<256x64xbf16, #tpu.memory_space<vmem>>, %arg13: memref<1x64xf32, #tpu.memory_space<vmem>>, %arg14: memref<64x8xbf16, #tpu.memory_space<vmem>>, %arg15: memref<1x8xf32, #tpu.memory_space<vmem>>, %arg16: memref<8x32xf32, #tpu.memory_space<vmem>>, %arg17: memref<1x32xf32, #tpu.memory_space<vmem>>, %arg18: memref<32x8xf32, #tpu.memory_space<vmem>>, %arg19: memref<1x8xf32, #tpu.memory_space<vmem>>, %arg20: memref<32x8xf32, #tpu.memory_space<vmem>>, %arg21: memref<6x8xf32, #tpu.memory_space<vmem>>, %arg22: memref<128x256xbf16, #tpu.memory_space<vmem>>, %arg23: memref<256x256xbf16, #tpu.memory_space<vmem>>, %arg24: memref<2x!tpu.dma_semaphore, #tpu.memory_space<semaphore_mem>>) attributes {dimension_semantics = [], scalar_prefetch = 0 : i64, scratch_operands = 3 : i64, tpu.core_type = #tpu.core_type<tc>} {
    %c0_i32 = arith.constant 0 : i32
    %0 = tpu.memref_slice %arg24[%c0_i32] : memref<2x!tpu.dma_semaphore, #tpu.memory_space<semaphore_mem>> -> memref<1x!tpu.dma_semaphore, #tpu.memory_space<semaphore_mem>>
    %1 = tpu.memref_squeeze %0 : memref<1x!tpu.dma_semaphore, #tpu.memory_space<semaphore_mem>> -> memref<!tpu.dma_semaphore, #tpu.memory_space<semaphore_mem>>
    tpu.enqueue_dma source(%arg8 : memref<128x256xbf16, #tpu.memory_space<any>>) target(%arg22 : memref<128x256xbf16, #tpu.memory_space<vmem>>) target_semaphore(%1 : memref<!tpu.dma_semaphore, #tpu.memory_space<semaphore_mem>>)
    %c1_i32 = arith.constant 1 : i32
    %2 = tpu.memref_slice %arg24[%c1_i32] : memref<2x!tpu.dma_semaphore, #tpu.memory_space<semaphore_mem>> -> memref<1x!tpu.dma_semaphore, #tpu.memory_space<semaphore_mem>>
    %3 = tpu.memref_squeeze %2 : memref<1x!tpu.dma_semaphore, #tpu.memory_space<semaphore_mem>> -> memref<!tpu.dma_semaphore, #tpu.memory_space<semaphore_mem>>
    tpu.enqueue_dma source(%arg10 : memref<256x256xbf16, #tpu.memory_space<any>>) target(%arg23 : memref<256x256xbf16, #tpu.memory_space<vmem>>) target_semaphore(%3 : memref<!tpu.dma_semaphore, #tpu.memory_space<semaphore_mem>>)
    %c0 = arith.constant 0 : index
    %c0_0 = arith.constant 0 : index
    %4 = vector.load %arg0[%c0, %c0_0] : memref<32x64xbf16, #tpu.memory_space<vmem>>, vector<32x64xbf16>
    %c0_1 = arith.constant 0 : index
    %c0_2 = arith.constant 0 : index
    %5 = vector.load %arg2[%c0_1, %c0_2] : memref<64x256xbf16, #tpu.memory_space<vmem>>, vector<64x256xbf16>
    %cst = arith.constant dense<0.000000e+00> : vector<32x256xf32>
    %6 = tpu.matmul %4, %5, %cst {dimension_numbers = #tpu.dot_dimension_numbers<[1], [0], [0], [1], [0, 0, 1, 1], [], []>} : vector<32x64xbf16>, vector<64x256xbf16>, vector<32x256xf32> -> vector<32x256xf32>
    %c0_3 = arith.constant 0 : index
    %c0_4 = arith.constant 0 : index
    %7 = vector.load %arg3[%c0_3, %c0_4] : memref<1x256xf32, #tpu.memory_space<vmem>>, vector<1x256xf32>
    %8 = vector.broadcast %7 : vector<1x256xf32> to vector<32x256xf32>
    %9 = arith.addf %6, %8 : vector<32x256xf32>
    %cst_5 = arith.constant 0.000000e+00 : f32
    %10 = vector.broadcast %cst_5 : f32 to vector<32x256xf32>
    %11 = arith.cmpf ogt, %9, %10 : vector<32x256xf32>
    %cst_6 = arith.constant 0.00999999977 : f32
    %12 = vector.broadcast %cst_6 : f32 to vector<32x256xf32>
    %13 = arith.mulf %12, %9 : vector<32x256xf32>
    %14 = arith.select %11, %9, %13 : vector<32x256xi1>, vector<32x256xf32>
    %15 = arith.truncf %14 : vector<32x256xf32> to vector<32x256xbf16>
    %c0_7 = arith.constant 0 : index
    %c0_8 = arith.constant 0 : index
    %16 = vector.load %arg4[%c0_7, %c0_8] : memref<256x512xbf16, #tpu.memory_space<vmem>>, vector<256x512xbf16>
    %cst_9 = arith.constant dense<0.000000e+00> : vector<32x512xf32>
    %17 = tpu.matmul %15, %16, %cst_9 {dimension_numbers = #tpu.dot_dimension_numbers<[1], [0], [0], [1], [0, 0, 1, 1], [], []>} : vector<32x256xbf16>, vector<256x512xbf16>, vector<32x512xf32> -> vector<32x512xf32>
    %c0_10 = arith.constant 0 : index
    %c0_11 = arith.constant 0 : index
    %18 = vector.load %arg5[%c0_10, %c0_11] : memref<1x512xf32, #tpu.memory_space<vmem>>, vector<1x512xf32>
    %19 = vector.broadcast %18 : vector<1x512xf32> to vector<32x512xf32>
    %20 = arith.addf %17, %19 : vector<32x512xf32>
    %cst_12 = arith.constant 0.000000e+00 : f32
    %21 = vector.broadcast %cst_12 : f32 to vector<32x512xf32>
    %22 = arith.cmpf ogt, %20, %21 : vector<32x512xf32>
    %cst_13 = arith.constant 0.00999999977 : f32
    %23 = vector.broadcast %cst_13 : f32 to vector<32x512xf32>
    %24 = arith.mulf %23, %20 : vector<32x512xf32>
    %25 = arith.select %22, %20, %24 : vector<32x512xi1>, vector<32x512xf32>
    %26 = arith.truncf %25 : vector<32x512xf32> to vector<32x512xbf16>
    %c0_14 = arith.constant 0 : index
    %c0_15 = arith.constant 0 : index
    %27 = vector.load %arg6[%c0_14, %c0_15] : memref<512x8xbf16, #tpu.memory_space<vmem>>, vector<512x8xbf16>
    %cst_16 = arith.constant dense<0.000000e+00> : vector<32x8xf32>
    %28 = tpu.matmul %26, %27, %cst_16 {dimension_numbers = #tpu.dot_dimension_numbers<[1], [0], [0], [1], [0, 0, 1, 1], [], []>} : vector<32x512xbf16>, vector<512x8xbf16>, vector<32x8xf32> -> vector<32x8xf32>
    %c0_17 = arith.constant 0 : index
    %c0_18 = arith.constant 0 : index
    %29 = vector.load %arg7[%c0_17, %c0_18] : memref<1x8xf32, #tpu.memory_space<vmem>>, vector<1x8xf32>
    %30 = vector.broadcast %29 : vector<1x8xf32> to vector<32x8xf32>
    %31 = arith.addf %28, %30 : vector<32x8xf32>
    %c0_i32_19 = arith.constant 0 : i32
    %32 = tpu.memref_slice %arg24[%c0_i32_19] : memref<2x!tpu.dma_semaphore, #tpu.memory_space<semaphore_mem>> -> memref<1x!tpu.dma_semaphore, #tpu.memory_space<semaphore_mem>>
    %33 = tpu.memref_squeeze %32 : memref<1x!tpu.dma_semaphore, #tpu.memory_space<semaphore_mem>> -> memref<!tpu.dma_semaphore, #tpu.memory_space<semaphore_mem>>
    tpu.wait_dma2 semaphore(%33 : memref<!tpu.dma_semaphore, #tpu.memory_space<semaphore_mem>>) src(%arg8 : memref<128x256xbf16, #tpu.memory_space<any>>) dst(%arg22 : memref<128x256xbf16, #tpu.memory_space<vmem>>)
    %c1_i32_20 = arith.constant 1 : i32
    %34 = tpu.memref_slice %arg24[%c1_i32_20] : memref<2x!tpu.dma_semaphore, #tpu.memory_space<semaphore_mem>> -> memref<1x!tpu.dma_semaphore, #tpu.memory_space<semaphore_mem>>
    %35 = tpu.memref_squeeze %34 : memref<1x!tpu.dma_semaphore, #tpu.memory_space<semaphore_mem>> -> memref<!tpu.dma_semaphore, #tpu.memory_space<semaphore_mem>>
    tpu.wait_dma2 semaphore(%35 : memref<!tpu.dma_semaphore, #tpu.memory_space<semaphore_mem>>) src(%arg10 : memref<256x256xbf16, #tpu.memory_space<any>>) dst(%arg23 : memref<256x256xbf16, #tpu.memory_space<vmem>>)
    %c0_21 = arith.constant 0 : index
    %c0_22 = arith.constant 0 : index
    %36 = vector.load %arg1[%c0_21, %c0_22] : memref<2x128xbf16, #tpu.memory_space<vmem>>, vector<2x128xbf16>
    %c0_23 = arith.constant 0 : index
    %c0_24 = arith.constant 0 : index
    %37 = vector.load %arg22[%c0_23, %c0_24] : memref<128x256xbf16, #tpu.memory_space<vmem>>, vector<128x256xbf16>
    %cst_25 = arith.constant dense<0.000000e+00> : vector<2x256xf32>
    %38 = tpu.matmul %36, %37, %cst_25 {dimension_numbers = #tpu.dot_dimension_numbers<[1], [0], [0], [1], [0, 0, 1, 1], [], []>} : vector<2x128xbf16>, vector<128x256xbf16>, vector<2x256xf32> -> vector<2x256xf32>
    %c0_26 = arith.constant 0 : index
    %c0_27 = arith.constant 0 : index
    %39 = vector.load %arg9[%c0_26, %c0_27] : memref<1x256xf32, #tpu.memory_space<vmem>>, vector<1x256xf32>
    %40 = vector.broadcast %39 : vector<1x256xf32> to vector<2x256xf32>
    %41 = arith.addf %38, %40 : vector<2x256xf32>
    %cst_28 = arith.constant 0.000000e+00 : f32
    %42 = vector.broadcast %cst_28 : f32 to vector<2x256xf32>
    %43 = arith.cmpf ogt, %41, %42 : vector<2x256xf32>
    %cst_29 = arith.constant 0.00999999977 : f32
    %44 = vector.broadcast %cst_29 : f32 to vector<2x256xf32>
    %45 = arith.mulf %44, %41 : vector<2x256xf32>
    %46 = arith.select %43, %41, %45 : vector<2x256xi1>, vector<2x256xf32>
    %47 = arith.truncf %46 : vector<2x256xf32> to vector<2x256xbf16>
    %c0_30 = arith.constant 0 : index
    %c0_31 = arith.constant 0 : index
    %48 = vector.load %arg23[%c0_30, %c0_31] : memref<256x256xbf16, #tpu.memory_space<vmem>>, vector<256x256xbf16>
    %cst_32 = arith.constant dense<0.000000e+00> : vector<2x256xf32>
    %49 = tpu.matmul %47, %48, %cst_32 {dimension_numbers = #tpu.dot_dimension_numbers<[1], [0], [0], [1], [0, 0, 1, 1], [], []>} : vector<2x256xbf16>, vector<256x256xbf16>, vector<2x256xf32> -> vector<2x256xf32>
    %c0_33 = arith.constant 0 : index
    %c0_34 = arith.constant 0 : index
    %50 = vector.load %arg11[%c0_33, %c0_34] : memref<1x256xf32, #tpu.memory_space<vmem>>, vector<1x256xf32>
    %51 = vector.broadcast %50 : vector<1x256xf32> to vector<2x256xf32>
    %52 = arith.addf %49, %51 : vector<2x256xf32>
    %cst_35 = arith.constant 0.000000e+00 : f32
    %53 = vector.broadcast %cst_35 : f32 to vector<2x256xf32>
    %54 = arith.cmpf ogt, %52, %53 : vector<2x256xf32>
    %cst_36 = arith.constant 0.00999999977 : f32
    %55 = vector.broadcast %cst_36 : f32 to vector<2x256xf32>
    %56 = arith.mulf %55, %52 : vector<2x256xf32>
    %57 = arith.select %54, %52, %56 : vector<2x256xi1>, vector<2x256xf32>
    %58 = arith.truncf %57 : vector<2x256xf32> to vector<2x256xbf16>
    %c0_37 = arith.constant 0 : index
    %c0_38 = arith.constant 0 : index
    %59 = vector.load %arg12[%c0_37, %c0_38] : memref<256x64xbf16, #tpu.memory_space<vmem>>, vector<256x64xbf16>
    %cst_39 = arith.constant dense<0.000000e+00> : vector<2x64xf32>
    %60 = tpu.matmul %58, %59, %cst_39 {dimension_numbers = #tpu.dot_dimension_numbers<[1], [0], [0], [1], [0, 0, 1, 1], [], []>} : vector<2x256xbf16>, vector<256x64xbf16>, vector<2x64xf32> -> vector<2x64xf32>
    %c0_40 = arith.constant 0 : index
    %c0_41 = arith.constant 0 : index
    %61 = vector.load %arg13[%c0_40, %c0_41] : memref<1x64xf32, #tpu.memory_space<vmem>>, vector<1x64xf32>
    %62 = vector.broadcast %61 : vector<1x64xf32> to vector<2x64xf32>
    %63 = arith.addf %60, %62 : vector<2x64xf32>
    %cst_42 = arith.constant 0.000000e+00 : f32
    %64 = vector.broadcast %cst_42 : f32 to vector<2x64xf32>
    %65 = arith.cmpf ogt, %63, %64 : vector<2x64xf32>
    %cst_43 = arith.constant 0.00999999977 : f32
    %66 = vector.broadcast %cst_43 : f32 to vector<2x64xf32>
    %67 = arith.mulf %66, %63 : vector<2x64xf32>
    %68 = arith.select %65, %63, %67 : vector<2x64xi1>, vector<2x64xf32>
    %69 = arith.truncf %68 : vector<2x64xf32> to vector<2x64xbf16>
    %c0_44 = arith.constant 0 : index
    %c0_45 = arith.constant 0 : index
    %70 = vector.load %arg14[%c0_44, %c0_45] : memref<64x8xbf16, #tpu.memory_space<vmem>>, vector<64x8xbf16>
    %cst_46 = arith.constant dense<0.000000e+00> : vector<2x8xf32>
    %71 = tpu.matmul %69, %70, %cst_46 {dimension_numbers = #tpu.dot_dimension_numbers<[1], [0], [0], [1], [0, 0, 1, 1], [], []>} : vector<2x64xbf16>, vector<64x8xbf16>, vector<2x8xf32> -> vector<2x8xf32>
    %c0_47 = arith.constant 0 : index
    %c0_48 = arith.constant 0 : index
    %72 = vector.load %arg15[%c0_47, %c0_48] : memref<1x8xf32, #tpu.memory_space<vmem>>, vector<1x8xf32>
    %73 = vector.broadcast %72 : vector<1x8xf32> to vector<2x8xf32>
    %74 = arith.addf %71, %73 : vector<2x8xf32>
    %c0_49 = arith.constant 0 : index
    %c0_50 = arith.constant 0 : index
    %75 = vector.load %arg16[%c0_49, %c0_50] : memref<8x32xf32, #tpu.memory_space<vmem>>, vector<8x32xf32>
    %cst_51 = arith.constant dense<0.000000e+00> : vector<2x32xf32>
    %76 = tpu.matmul %74, %75, %cst_51 {dimension_numbers = #tpu.dot_dimension_numbers<[1], [0], [0], [1], [0, 0, 1, 1], [], []>} : vector<2x8xf32>, vector<8x32xf32>, vector<2x32xf32> -> vector<2x32xf32>
    %c0_52 = arith.constant 0 : index
    %c0_53 = arith.constant 0 : index
    %77 = vector.load %arg17[%c0_52, %c0_53] : memref<1x32xf32, #tpu.memory_space<vmem>>, vector<1x32xf32>
    %78 = vector.broadcast %77 : vector<1x32xf32> to vector<2x32xf32>
    %79 = arith.addf %76, %78 : vector<2x32xf32>
    %cst_54 = arith.constant 0.000000e+00 : f32
    %80 = vector.broadcast %cst_54 : f32 to vector<2x32xf32>
    %81 = arith.maximumf %79, %80 : vector<2x32xf32>
    %c0_55 = arith.constant 0 : index
    %c0_56 = arith.constant 0 : index
    %82 = vector.load %arg18[%c0_55, %c0_56] : memref<32x8xf32, #tpu.memory_space<vmem>>, vector<32x8xf32>
    %cst_57 = arith.constant dense<0.000000e+00> : vector<2x8xf32>
    %83 = tpu.matmul %81, %82, %cst_57 {dimension_numbers = #tpu.dot_dimension_numbers<[1], [0], [0], [1], [0, 0, 1, 1], [], []>} : vector<2x32xf32>, vector<32x8xf32>, vector<2x8xf32> -> vector<2x8xf32>
    %c0_58 = arith.constant 0 : index
    %c0_59 = arith.constant 0 : index
    %84 = vector.load %arg19[%c0_58, %c0_59] : memref<1x8xf32, #tpu.memory_space<vmem>>, vector<1x8xf32>
    %85 = vector.broadcast %84 : vector<1x8xf32> to vector<2x8xf32>
    %86 = arith.addf %83, %85 : vector<2x8xf32>
    %cst_60 = arith.constant 1.000000e-03 : f32
    %87 = vector.broadcast %cst_60 : f32 to vector<2x8xf32>
    %88 = arith.addf %86, %87 : vector<2x8xf32>
    %89 = arith.mulf %88, %88 : vector<2x8xf32>
    %cst_61 = arith.constant 0.0387298353 : f32
    %90 = vector.broadcast %cst_61 : f32 to vector<2x8xf32>
    %91 = arith.addf %89, %90 : vector<2x8xf32>
    %92 = tpu.iota {dimensions = array<i32: 0>} : vector<8x8xi32>
    %93 = tpu.iota {dimensions = array<i32: 1>} : vector<8x8xi32>
    %94 = arith.cmpi eq, %92, %93 : vector<8x8xi32>
    %95 = tpu.iota {dimensions = array<i32: 1>} : vector<1x8x1xi32>
    %96 = vector.extract_strided_slice %31 {offsets = [0, 0], sizes = [16, 8], strides = [1, 1]} : vector<32x8xf32> to vector<16x8xf32>
    %cst_62 = arith.constant dense<0.000000e+00> : vector<8xf32>
    %97 = vector.multi_reduction <add>, %96, %cst_62 [0] : vector<16x8xf32> to vector<8xf32>
    %98 = vector.shape_cast %97 : vector<8xf32> to vector<1x8xf32>
    %cst_63 = arith.constant 1.600000e+01 : f32
    %99 = vector.broadcast %cst_63 : f32 to vector<1x8xf32>
    %100 = arith.divf %98, %99 : vector<1x8xf32>
    %101 = vector.broadcast %100 : vector<1x8xf32> to vector<16x8xf32>
    %102 = arith.subf %96, %101 : vector<16x8xf32>
    %cst_64 = arith.constant dense<0.000000e+00> : vector<8x8xf32>
    %103 = tpu.matmul %102, %102, %cst_64 {dimension_numbers = #tpu.dot_dimension_numbers<[0], [0], [1], [1], [0, 1, 1, 1], [], []>} : vector<16x8xf32>, vector<16x8xf32>, vector<8x8xf32> -> vector<8x8xf32>
    %cst_65 = arith.constant 0.0666666701 : f32
    %104 = vector.broadcast %cst_65 : f32 to vector<8x8xf32>
    %105 = arith.mulf %103, %104 : vector<8x8xf32>
    %106 = vector.extract_strided_slice %91 {offsets = [0, 0], sizes = [1, 8], strides = [1, 1]} : vector<2x8xf32> to vector<1x8xf32>
    %cst_66 = arith.constant 0.000000e+00 : f32
    %107 = vector.shape_cast %106 : vector<1x8xf32> to vector<1x8xf32>
    %108 = vector.broadcast %107 : vector<1x8xf32> to vector<8x8xf32>
    %109 = vector.broadcast %cst_66 : f32 to vector<8x8xf32>
    %110 = arith.select %94, %108, %109 : vector<8x8xi1>, vector<8x8xf32>
    %111 = arith.addf %105, %110 : vector<8x8xf32>
    %112 = vector.shape_cast %105 : vector<8x8xf32> to vector<1x8x8xf32>
    %113 = vector.shape_cast %111 : vector<8x8xf32> to vector<1x8x8xf32>
    %114 = vector.extract_strided_slice %31 {offsets = [16, 0], sizes = [16, 8], strides = [1, 1]} : vector<32x8xf32> to vector<16x8xf32>
    %cst_67 = arith.constant dense<0.000000e+00> : vector<8xf32>
    %115 = vector.multi_reduction <add>, %114, %cst_67 [0] : vector<16x8xf32> to vector<8xf32>
    %116 = vector.shape_cast %115 : vector<8xf32> to vector<1x8xf32>
    %cst_68 = arith.constant 1.600000e+01 : f32
    %117 = vector.broadcast %cst_68 : f32 to vector<1x8xf32>
    %118 = arith.divf %116, %117 : vector<1x8xf32>
    %119 = vector.broadcast %118 : vector<1x8xf32> to vector<16x8xf32>
    %120 = arith.subf %114, %119 : vector<16x8xf32>
    %cst_69 = arith.constant dense<0.000000e+00> : vector<8x8xf32>
    %121 = tpu.matmul %120, %120, %cst_69 {dimension_numbers = #tpu.dot_dimension_numbers<[0], [0], [1], [1], [0, 1, 1, 1], [], []>} : vector<16x8xf32>, vector<16x8xf32>, vector<8x8xf32> -> vector<8x8xf32>
    %cst_70 = arith.constant 0.0666666701 : f32
    %122 = vector.broadcast %cst_70 : f32 to vector<8x8xf32>
    %123 = arith.mulf %121, %122 : vector<8x8xf32>
    %124 = vector.extract_strided_slice %91 {offsets = [1, 0], sizes = [1, 8], strides = [1, 1]} : vector<2x8xf32> to vector<1x8xf32>
    %cst_71 = arith.constant 0.000000e+00 : f32
    %125 = vector.shape_cast %124 : vector<1x8xf32> to vector<1x8xf32>
    %126 = vector.broadcast %125 : vector<1x8xf32> to vector<8x8xf32>
    %127 = vector.broadcast %cst_71 : f32 to vector<8x8xf32>
    %128 = arith.select %94, %126, %127 : vector<8x8xi1>, vector<8x8xf32>
    %129 = arith.addf %123, %128 : vector<8x8xf32>
    %130 = vector.shape_cast %123 : vector<8x8xf32> to vector<1x8x8xf32>
    %131 = vector.shape_cast %129 : vector<8x8xf32> to vector<1x8x8xf32>
    %132 = tpu.concatenate %113, %131 in 0 : vector<1x8x8xf32>, vector<1x8x8xf32> -> vector<2x8x8xf32>
    %133 = tpu.concatenate %112, %130 in 0 : vector<1x8x8xf32>, vector<1x8x8xf32> -> vector<2x8x8xf32>
    %134 = vector.extract_strided_slice %132 {offsets = [0, 0, 0], sizes = [2, 1, 8], strides = [1, 1, 1]} : vector<2x8x8xf32> to vector<2x1x8xf32>
    %135 = vector.extract_strided_slice %133 {offsets = [0, 0, 0], sizes = [2, 1, 8], strides = [1, 1, 1]} : vector<2x8x8xf32> to vector<2x1x8xf32>
    %136 = vector.extract_strided_slice %134 {offsets = [0, 0, 0], sizes = [2, 1, 1], strides = [1, 1, 1]} : vector<2x1x8xf32> to vector<2x1x1xf32>
    %137 = tpu.reciprocal %136 {approx = true} : vector<2x1x1xf32> -> vector<2x1x1xf32>
    %138 = arith.mulf %136, %137 : vector<2x1x1xf32>
    %cst_72 = arith.constant 2.000000e+00 : f32
    %139 = vector.broadcast %cst_72 : f32 to vector<2x1x1xf32>
    %140 = arith.subf %139, %138 : vector<2x1x1xf32>
    %141 = arith.mulf %137, %140 : vector<2x1x1xf32>
    %142 = vector.broadcast %141 : vector<2x1x1xf32> to vector<2x1x8xf32>
    %143 = arith.mulf %134, %142 : vector<2x1x8xf32>
    %144 = vector.broadcast %141 : vector<2x1x1xf32> to vector<2x1x8xf32>
    %145 = arith.mulf %135, %144 : vector<2x1x8xf32>
    %146 = vector.extract_strided_slice %132 {offsets = [0, 0, 0], sizes = [2, 8, 1], strides = [1, 1, 1]} : vector<2x8x8xf32> to vector<2x8x1xf32>
    %c0_i32_73 = arith.constant 0 : i32
    %147 = vector.broadcast %c0_i32_73 : i32 to vector<1x8x1xi32>
    %148 = arith.cmpi eq, %95, %147 : vector<1x8x1xi32>
    %149 = vector.broadcast %146 : vector<2x8x1xf32> to vector<2x8x8xf32>
    %150 = vector.broadcast %143 : vector<2x1x8xf32> to vector<2x8x8xf32>
    %151 = arith.mulf %149, %150 : vector<2x8x8xf32>
    %152 = arith.subf %132, %151 : vector<2x8x8xf32>
    %153 = vector.shape_cast %148 : vector<1x8x1xi1> to vector<1x8x1xi1>
    %154 = vector.broadcast %153 : vector<1x8x1xi1> to vector<2x8x8xi1>
    %155 = vector.shape_cast %143 : vector<2x1x8xf32> to vector<2x1x8xf32>
    %156 = vector.broadcast %155 : vector<2x1x8xf32> to vector<2x8x8xf32>
    %157 = arith.select %154, %156, %152 : vector<2x8x8xi1>, vector<2x8x8xf32>
    %158 = vector.broadcast %146 : vector<2x8x1xf32> to vector<2x8x8xf32>
    %159 = vector.broadcast %145 : vector<2x1x8xf32> to vector<2x8x8xf32>
    %160 = arith.mulf %158, %159 : vector<2x8x8xf32>
    %161 = arith.subf %133, %160 : vector<2x8x8xf32>
    %162 = vector.shape_cast %148 : vector<1x8x1xi1> to vector<1x8x1xi1>
    %163 = vector.broadcast %162 : vector<1x8x1xi1> to vector<2x8x8xi1>
    %164 = vector.shape_cast %145 : vector<2x1x8xf32> to vector<2x1x8xf32>
    %165 = vector.broadcast %164 : vector<2x1x8xf32> to vector<2x8x8xf32>
    %166 = arith.select %163, %165, %161 : vector<2x8x8xi1>, vector<2x8x8xf32>
    %167 = vector.extract_strided_slice %157 {offsets = [0, 1, 0], sizes = [2, 1, 8], strides = [1, 1, 1]} : vector<2x8x8xf32> to vector<2x1x8xf32>
    %168 = vector.extract_strided_slice %166 {offsets = [0, 1, 0], sizes = [2, 1, 8], strides = [1, 1, 1]} : vector<2x8x8xf32> to vector<2x1x8xf32>
    %169 = vector.extract_strided_slice %167 {offsets = [0, 0, 1], sizes = [2, 1, 1], strides = [1, 1, 1]} : vector<2x1x8xf32> to vector<2x1x1xf32>
    %170 = tpu.reciprocal %169 {approx = true} : vector<2x1x1xf32> -> vector<2x1x1xf32>
    %171 = arith.mulf %169, %170 : vector<2x1x1xf32>
    %cst_74 = arith.constant 2.000000e+00 : f32
    %172 = vector.broadcast %cst_74 : f32 to vector<2x1x1xf32>
    %173 = arith.subf %172, %171 : vector<2x1x1xf32>
    %174 = arith.mulf %170, %173 : vector<2x1x1xf32>
    %175 = vector.broadcast %174 : vector<2x1x1xf32> to vector<2x1x8xf32>
    %176 = arith.mulf %167, %175 : vector<2x1x8xf32>
    %177 = vector.broadcast %174 : vector<2x1x1xf32> to vector<2x1x8xf32>
    %178 = arith.mulf %168, %177 : vector<2x1x8xf32>
    %179 = vector.extract_strided_slice %157 {offsets = [0, 0, 1], sizes = [2, 8, 1], strides = [1, 1, 1]} : vector<2x8x8xf32> to vector<2x8x1xf32>
    %c1_i32_75 = arith.constant 1 : i32
    %180 = vector.broadcast %c1_i32_75 : i32 to vector<1x8x1xi32>
    %181 = arith.cmpi eq, %95, %180 : vector<1x8x1xi32>
    %182 = vector.broadcast %179 : vector<2x8x1xf32> to vector<2x8x8xf32>
    %183 = vector.broadcast %176 : vector<2x1x8xf32> to vector<2x8x8xf32>
    %184 = arith.mulf %182, %183 : vector<2x8x8xf32>
    %185 = arith.subf %157, %184 : vector<2x8x8xf32>
    %186 = vector.shape_cast %181 : vector<1x8x1xi1> to vector<1x8x1xi1>
    %187 = vector.broadcast %186 : vector<1x8x1xi1> to vector<2x8x8xi1>
    %188 = vector.shape_cast %176 : vector<2x1x8xf32> to vector<2x1x8xf32>
    %189 = vector.broadcast %188 : vector<2x1x8xf32> to vector<2x8x8xf32>
    %190 = arith.select %187, %189, %185 : vector<2x8x8xi1>, vector<2x8x8xf32>
    %191 = vector.broadcast %179 : vector<2x8x1xf32> to vector<2x8x8xf32>
    %192 = vector.broadcast %178 : vector<2x1x8xf32> to vector<2x8x8xf32>
    %193 = arith.mulf %191, %192 : vector<2x8x8xf32>
    %194 = arith.subf %166, %193 : vector<2x8x8xf32>
    %195 = vector.shape_cast %181 : vector<1x8x1xi1> to vector<1x8x1xi1>
    %196 = vector.broadcast %195 : vector<1x8x1xi1> to vector<2x8x8xi1>
    %197 = vector.shape_cast %178 : vector<2x1x8xf32> to vector<2x1x8xf32>
    %198 = vector.broadcast %197 : vector<2x1x8xf32> to vector<2x8x8xf32>
    %199 = arith.select %196, %198, %194 : vector<2x8x8xi1>, vector<2x8x8xf32>
    %200 = vector.extract_strided_slice %190 {offsets = [0, 2, 0], sizes = [2, 1, 8], strides = [1, 1, 1]} : vector<2x8x8xf32> to vector<2x1x8xf32>
    %201 = vector.extract_strided_slice %199 {offsets = [0, 2, 0], sizes = [2, 1, 8], strides = [1, 1, 1]} : vector<2x8x8xf32> to vector<2x1x8xf32>
    %202 = vector.extract_strided_slice %200 {offsets = [0, 0, 2], sizes = [2, 1, 1], strides = [1, 1, 1]} : vector<2x1x8xf32> to vector<2x1x1xf32>
    %203 = tpu.reciprocal %202 {approx = true} : vector<2x1x1xf32> -> vector<2x1x1xf32>
    %204 = arith.mulf %202, %203 : vector<2x1x1xf32>
    %cst_76 = arith.constant 2.000000e+00 : f32
    %205 = vector.broadcast %cst_76 : f32 to vector<2x1x1xf32>
    %206 = arith.subf %205, %204 : vector<2x1x1xf32>
    %207 = arith.mulf %203, %206 : vector<2x1x1xf32>
    %208 = vector.broadcast %207 : vector<2x1x1xf32> to vector<2x1x8xf32>
    %209 = arith.mulf %200, %208 : vector<2x1x8xf32>
    %210 = vector.broadcast %207 : vector<2x1x1xf32> to vector<2x1x8xf32>
    %211 = arith.mulf %201, %210 : vector<2x1x8xf32>
    %212 = vector.extract_strided_slice %190 {offsets = [0, 0, 2], sizes = [2, 8, 1], strides = [1, 1, 1]} : vector<2x8x8xf32> to vector<2x8x1xf32>
    %c2_i32 = arith.constant 2 : i32
    %213 = vector.broadcast %c2_i32 : i32 to vector<1x8x1xi32>
    %214 = arith.cmpi eq, %95, %213 : vector<1x8x1xi32>
    %215 = vector.broadcast %212 : vector<2x8x1xf32> to vector<2x8x8xf32>
    %216 = vector.broadcast %209 : vector<2x1x8xf32> to vector<2x8x8xf32>
    %217 = arith.mulf %215, %216 : vector<2x8x8xf32>
    %218 = arith.subf %190, %217 : vector<2x8x8xf32>
    %219 = vector.shape_cast %214 : vector<1x8x1xi1> to vector<1x8x1xi1>
    %220 = vector.broadcast %219 : vector<1x8x1xi1> to vector<2x8x8xi1>
    %221 = vector.shape_cast %209 : vector<2x1x8xf32> to vector<2x1x8xf32>
    %222 = vector.broadcast %221 : vector<2x1x8xf32> to vector<2x8x8xf32>
    %223 = arith.select %220, %222, %218 : vector<2x8x8xi1>, vector<2x8x8xf32>
    %224 = vector.broadcast %212 : vector<2x8x1xf32> to vector<2x8x8xf32>
    %225 = vector.broadcast %211 : vector<2x1x8xf32> to vector<2x8x8xf32>
    %226 = arith.mulf %224, %225 : vector<2x8x8xf32>
    %227 = arith.subf %199, %226 : vector<2x8x8xf32>
    %228 = vector.shape_cast %214 : vector<1x8x1xi1> to vector<1x8x1xi1>
    %229 = vector.broadcast %228 : vector<1x8x1xi1> to vector<2x8x8xi1>
    %230 = vector.shape_cast %211 : vector<2x1x8xf32> to vector<2x1x8xf32>
    %231 = vector.broadcast %230 : vector<2x1x8xf32> to vector<2x8x8xf32>
    %232 = arith.select %229, %231, %227 : vector<2x8x8xi1>, vector<2x8x8xf32>
    %233 = vector.extract_strided_slice %223 {offsets = [0, 3, 0], sizes = [2, 1, 8], strides = [1, 1, 1]} : vector<2x8x8xf32> to vector<2x1x8xf32>
    %234 = vector.extract_strided_slice %232 {offsets = [0, 3, 0], sizes = [2, 1, 8], strides = [1, 1, 1]} : vector<2x8x8xf32> to vector<2x1x8xf32>
    %235 = vector.extract_strided_slice %233 {offsets = [0, 0, 3], sizes = [2, 1, 1], strides = [1, 1, 1]} : vector<2x1x8xf32> to vector<2x1x1xf32>
    %236 = tpu.reciprocal %235 {approx = true} : vector<2x1x1xf32> -> vector<2x1x1xf32>
    %237 = arith.mulf %235, %236 : vector<2x1x1xf32>
    %cst_77 = arith.constant 2.000000e+00 : f32
    %238 = vector.broadcast %cst_77 : f32 to vector<2x1x1xf32>
    %239 = arith.subf %238, %237 : vector<2x1x1xf32>
    %240 = arith.mulf %236, %239 : vector<2x1x1xf32>
    %241 = vector.broadcast %240 : vector<2x1x1xf32> to vector<2x1x8xf32>
    %242 = arith.mulf %233, %241 : vector<2x1x8xf32>
    %243 = vector.broadcast %240 : vector<2x1x1xf32> to vector<2x1x8xf32>
    %244 = arith.mulf %234, %243 : vector<2x1x8xf32>
    %245 = vector.extract_strided_slice %223 {offsets = [0, 0, 3], sizes = [2, 8, 1], strides = [1, 1, 1]} : vector<2x8x8xf32> to vector<2x8x1xf32>
    %c3_i32 = arith.constant 3 : i32
    %246 = vector.broadcast %c3_i32 : i32 to vector<1x8x1xi32>
    %247 = arith.cmpi eq, %95, %246 : vector<1x8x1xi32>
    %248 = vector.broadcast %245 : vector<2x8x1xf32> to vector<2x8x8xf32>
    %249 = vector.broadcast %242 : vector<2x1x8xf32> to vector<2x8x8xf32>
    %250 = arith.mulf %248, %249 : vector<2x8x8xf32>
    %251 = arith.subf %223, %250 : vector<2x8x8xf32>
    %252 = vector.shape_cast %247 : vector<1x8x1xi1> to vector<1x8x1xi1>
    %253 = vector.broadcast %252 : vector<1x8x1xi1> to vector<2x8x8xi1>
    %254 = vector.shape_cast %242 : vector<2x1x8xf32> to vector<2x1x8xf32>
    %255 = vector.broadcast %254 : vector<2x1x8xf32> to vector<2x8x8xf32>
    %256 = arith.select %253, %255, %251 : vector<2x8x8xi1>, vector<2x8x8xf32>
    %257 = vector.broadcast %245 : vector<2x8x1xf32> to vector<2x8x8xf32>
    %258 = vector.broadcast %244 : vector<2x1x8xf32> to vector<2x8x8xf32>
    %259 = arith.mulf %257, %258 : vector<2x8x8xf32>
    %260 = arith.subf %232, %259 : vector<2x8x8xf32>
    %261 = vector.shape_cast %247 : vector<1x8x1xi1> to vector<1x8x1xi1>
    %262 = vector.broadcast %261 : vector<1x8x1xi1> to vector<2x8x8xi1>
    %263 = vector.shape_cast %244 : vector<2x1x8xf32> to vector<2x1x8xf32>
    %264 = vector.broadcast %263 : vector<2x1x8xf32> to vector<2x8x8xf32>
    %265 = arith.select %262, %264, %260 : vector<2x8x8xi1>, vector<2x8x8xf32>
    %266 = vector.extract_strided_slice %256 {offsets = [0, 4, 0], sizes = [2, 1, 8], strides = [1, 1, 1]} : vector<2x8x8xf32> to vector<2x1x8xf32>
    %267 = vector.extract_strided_slice %265 {offsets = [0, 4, 0], sizes = [2, 1, 8], strides = [1, 1, 1]} : vector<2x8x8xf32> to vector<2x1x8xf32>
    %268 = vector.extract_strided_slice %266 {offsets = [0, 0, 4], sizes = [2, 1, 1], strides = [1, 1, 1]} : vector<2x1x8xf32> to vector<2x1x1xf32>
    %269 = tpu.reciprocal %268 {approx = true} : vector<2x1x1xf32> -> vector<2x1x1xf32>
    %270 = arith.mulf %268, %269 : vector<2x1x1xf32>
    %cst_78 = arith.constant 2.000000e+00 : f32
    %271 = vector.broadcast %cst_78 : f32 to vector<2x1x1xf32>
    %272 = arith.subf %271, %270 : vector<2x1x1xf32>
    %273 = arith.mulf %269, %272 : vector<2x1x1xf32>
    %274 = vector.broadcast %273 : vector<2x1x1xf32> to vector<2x1x8xf32>
    %275 = arith.mulf %266, %274 : vector<2x1x8xf32>
    %276 = vector.broadcast %273 : vector<2x1x1xf32> to vector<2x1x8xf32>
    %277 = arith.mulf %267, %276 : vector<2x1x8xf32>
    %278 = vector.extract_strided_slice %256 {offsets = [0, 0, 4], sizes = [2, 8, 1], strides = [1, 1, 1]} : vector<2x8x8xf32> to vector<2x8x1xf32>
    %c4_i32 = arith.constant 4 : i32
    %279 = vector.broadcast %c4_i32 : i32 to vector<1x8x1xi32>
    %280 = arith.cmpi eq, %95, %279 : vector<1x8x1xi32>
    %281 = vector.broadcast %278 : vector<2x8x1xf32> to vector<2x8x8xf32>
    %282 = vector.broadcast %275 : vector<2x1x8xf32> to vector<2x8x8xf32>
    %283 = arith.mulf %281, %282 : vector<2x8x8xf32>
    %284 = arith.subf %256, %283 : vector<2x8x8xf32>
    %285 = vector.shape_cast %280 : vector<1x8x1xi1> to vector<1x8x1xi1>
    %286 = vector.broadcast %285 : vector<1x8x1xi1> to vector<2x8x8xi1>
    %287 = vector.shape_cast %275 : vector<2x1x8xf32> to vector<2x1x8xf32>
    %288 = vector.broadcast %287 : vector<2x1x8xf32> to vector<2x8x8xf32>
    %289 = arith.select %286, %288, %284 : vector<2x8x8xi1>, vector<2x8x8xf32>
    %290 = vector.broadcast %278 : vector<2x8x1xf32> to vector<2x8x8xf32>
    %291 = vector.broadcast %277 : vector<2x1x8xf32> to vector<2x8x8xf32>
    %292 = arith.mulf %290, %291 : vector<2x8x8xf32>
    %293 = arith.subf %265, %292 : vector<2x8x8xf32>
    %294 = vector.shape_cast %280 : vector<1x8x1xi1> to vector<1x8x1xi1>
    %295 = vector.broadcast %294 : vector<1x8x1xi1> to vector<2x8x8xi1>
    %296 = vector.shape_cast %277 : vector<2x1x8xf32> to vector<2x1x8xf32>
    %297 = vector.broadcast %296 : vector<2x1x8xf32> to vector<2x8x8xf32>
    %298 = arith.select %295, %297, %293 : vector<2x8x8xi1>, vector<2x8x8xf32>
    %299 = vector.extract_strided_slice %289 {offsets = [0, 5, 0], sizes = [2, 1, 8], strides = [1, 1, 1]} : vector<2x8x8xf32> to vector<2x1x8xf32>
    %300 = vector.extract_strided_slice %298 {offsets = [0, 5, 0], sizes = [2, 1, 8], strides = [1, 1, 1]} : vector<2x8x8xf32> to vector<2x1x8xf32>
    %301 = vector.extract_strided_slice %299 {offsets = [0, 0, 5], sizes = [2, 1, 1], strides = [1, 1, 1]} : vector<2x1x8xf32> to vector<2x1x1xf32>
    %302 = tpu.reciprocal %301 {approx = true} : vector<2x1x1xf32> -> vector<2x1x1xf32>
    %303 = arith.mulf %301, %302 : vector<2x1x1xf32>
    %cst_79 = arith.constant 2.000000e+00 : f32
    %304 = vector.broadcast %cst_79 : f32 to vector<2x1x1xf32>
    %305 = arith.subf %304, %303 : vector<2x1x1xf32>
    %306 = arith.mulf %302, %305 : vector<2x1x1xf32>
    %307 = vector.broadcast %306 : vector<2x1x1xf32> to vector<2x1x8xf32>
    %308 = arith.mulf %299, %307 : vector<2x1x8xf32>
    %309 = vector.broadcast %306 : vector<2x1x1xf32> to vector<2x1x8xf32>
    %310 = arith.mulf %300, %309 : vector<2x1x8xf32>
    %311 = vector.extract_strided_slice %289 {offsets = [0, 0, 5], sizes = [2, 8, 1], strides = [1, 1, 1]} : vector<2x8x8xf32> to vector<2x8x1xf32>
    %c5_i32 = arith.constant 5 : i32
    %312 = vector.broadcast %c5_i32 : i32 to vector<1x8x1xi32>
    %313 = arith.cmpi eq, %95, %312 : vector<1x8x1xi32>
    %314 = vector.broadcast %311 : vector<2x8x1xf32> to vector<2x8x8xf32>
    %315 = vector.broadcast %308 : vector<2x1x8xf32> to vector<2x8x8xf32>
    %316 = arith.mulf %314, %315 : vector<2x8x8xf32>
    %317 = arith.subf %289, %316 : vector<2x8x8xf32>
    %318 = vector.shape_cast %313 : vector<1x8x1xi1> to vector<1x8x1xi1>
    %319 = vector.broadcast %318 : vector<1x8x1xi1> to vector<2x8x8xi1>
    %320 = vector.shape_cast %308 : vector<2x1x8xf32> to vector<2x1x8xf32>
    %321 = vector.broadcast %320 : vector<2x1x8xf32> to vector<2x8x8xf32>
    %322 = arith.select %319, %321, %317 : vector<2x8x8xi1>, vector<2x8x8xf32>
    %323 = vector.broadcast %311 : vector<2x8x1xf32> to vector<2x8x8xf32>
    %324 = vector.broadcast %310 : vector<2x1x8xf32> to vector<2x8x8xf32>
    %325 = arith.mulf %323, %324 : vector<2x8x8xf32>
    %326 = arith.subf %298, %325 : vector<2x8x8xf32>
    %327 = vector.shape_cast %313 : vector<1x8x1xi1> to vector<1x8x1xi1>
    %328 = vector.broadcast %327 : vector<1x8x1xi1> to vector<2x8x8xi1>
    %329 = vector.shape_cast %310 : vector<2x1x8xf32> to vector<2x1x8xf32>
    %330 = vector.broadcast %329 : vector<2x1x8xf32> to vector<2x8x8xf32>
    %331 = arith.select %328, %330, %326 : vector<2x8x8xi1>, vector<2x8x8xf32>
    %332 = vector.extract_strided_slice %322 {offsets = [0, 6, 0], sizes = [2, 1, 8], strides = [1, 1, 1]} : vector<2x8x8xf32> to vector<2x1x8xf32>
    %333 = vector.extract_strided_slice %331 {offsets = [0, 6, 0], sizes = [2, 1, 8], strides = [1, 1, 1]} : vector<2x8x8xf32> to vector<2x1x8xf32>
    %334 = vector.extract_strided_slice %332 {offsets = [0, 0, 6], sizes = [2, 1, 1], strides = [1, 1, 1]} : vector<2x1x8xf32> to vector<2x1x1xf32>
    %335 = tpu.reciprocal %334 {approx = true} : vector<2x1x1xf32> -> vector<2x1x1xf32>
    %336 = arith.mulf %334, %335 : vector<2x1x1xf32>
    %cst_80 = arith.constant 2.000000e+00 : f32
    %337 = vector.broadcast %cst_80 : f32 to vector<2x1x1xf32>
    %338 = arith.subf %337, %336 : vector<2x1x1xf32>
    %339 = arith.mulf %335, %338 : vector<2x1x1xf32>
    %340 = vector.broadcast %339 : vector<2x1x1xf32> to vector<2x1x8xf32>
    %341 = arith.mulf %332, %340 : vector<2x1x8xf32>
    %342 = vector.broadcast %339 : vector<2x1x1xf32> to vector<2x1x8xf32>
    %343 = arith.mulf %333, %342 : vector<2x1x8xf32>
    %344 = vector.extract_strided_slice %322 {offsets = [0, 0, 6], sizes = [2, 8, 1], strides = [1, 1, 1]} : vector<2x8x8xf32> to vector<2x8x1xf32>
    %c6_i32 = arith.constant 6 : i32
    %345 = vector.broadcast %c6_i32 : i32 to vector<1x8x1xi32>
    %346 = arith.cmpi eq, %95, %345 : vector<1x8x1xi32>
    %347 = vector.broadcast %344 : vector<2x8x1xf32> to vector<2x8x8xf32>
    %348 = vector.broadcast %341 : vector<2x1x8xf32> to vector<2x8x8xf32>
    %349 = arith.mulf %347, %348 : vector<2x8x8xf32>
    %350 = arith.subf %322, %349 : vector<2x8x8xf32>
    %351 = vector.shape_cast %346 : vector<1x8x1xi1> to vector<1x8x1xi1>
    %352 = vector.broadcast %351 : vector<1x8x1xi1> to vector<2x8x8xi1>
    %353 = vector.shape_cast %341 : vector<2x1x8xf32> to vector<2x1x8xf32>
    %354 = vector.broadcast %353 : vector<2x1x8xf32> to vector<2x8x8xf32>
    %355 = arith.select %352, %354, %350 : vector<2x8x8xi1>, vector<2x8x8xf32>
    %356 = vector.broadcast %344 : vector<2x8x1xf32> to vector<2x8x8xf32>
    %357 = vector.broadcast %343 : vector<2x1x8xf32> to vector<2x8x8xf32>
    %358 = arith.mulf %356, %357 : vector<2x8x8xf32>
    %359 = arith.subf %331, %358 : vector<2x8x8xf32>
    %360 = vector.shape_cast %346 : vector<1x8x1xi1> to vector<1x8x1xi1>
    %361 = vector.broadcast %360 : vector<1x8x1xi1> to vector<2x8x8xi1>
    %362 = vector.shape_cast %343 : vector<2x1x8xf32> to vector<2x1x8xf32>
    %363 = vector.broadcast %362 : vector<2x1x8xf32> to vector<2x8x8xf32>
    %364 = arith.select %361, %363, %359 : vector<2x8x8xi1>, vector<2x8x8xf32>
    %365 = vector.extract_strided_slice %355 {offsets = [0, 7, 0], sizes = [2, 1, 8], strides = [1, 1, 1]} : vector<2x8x8xf32> to vector<2x1x8xf32>
    %366 = vector.extract_strided_slice %364 {offsets = [0, 7, 0], sizes = [2, 1, 8], strides = [1, 1, 1]} : vector<2x8x8xf32> to vector<2x1x8xf32>
    %367 = vector.extract_strided_slice %365 {offsets = [0, 0, 7], sizes = [2, 1, 1], strides = [1, 1, 1]} : vector<2x1x8xf32> to vector<2x1x1xf32>
    %368 = tpu.reciprocal %367 {approx = true} : vector<2x1x1xf32> -> vector<2x1x1xf32>
    %369 = arith.mulf %367, %368 : vector<2x1x1xf32>
    %cst_81 = arith.constant 2.000000e+00 : f32
    %370 = vector.broadcast %cst_81 : f32 to vector<2x1x1xf32>
    %371 = arith.subf %370, %369 : vector<2x1x1xf32>
    %372 = arith.mulf %368, %371 : vector<2x1x1xf32>
    %373 = vector.broadcast %372 : vector<2x1x1xf32> to vector<2x1x8xf32>
    %374 = arith.mulf %366, %373 : vector<2x1x8xf32>
    %375 = vector.extract_strided_slice %355 {offsets = [0, 0, 7], sizes = [2, 8, 1], strides = [1, 1, 1]} : vector<2x8x8xf32> to vector<2x8x1xf32>
    %c7_i32 = arith.constant 7 : i32
    %376 = vector.broadcast %c7_i32 : i32 to vector<1x8x1xi32>
    %377 = arith.cmpi eq, %95, %376 : vector<1x8x1xi32>
    %378 = vector.broadcast %375 : vector<2x8x1xf32> to vector<2x8x8xf32>
    %379 = vector.broadcast %374 : vector<2x1x8xf32> to vector<2x8x8xf32>
    %380 = arith.mulf %378, %379 : vector<2x8x8xf32>
    %381 = arith.subf %364, %380 : vector<2x8x8xf32>
    %382 = vector.shape_cast %377 : vector<1x8x1xi1> to vector<1x8x1xi1>
    %383 = vector.broadcast %382 : vector<1x8x1xi1> to vector<2x8x8xi1>
    %384 = vector.shape_cast %374 : vector<2x1x8xf32> to vector<2x1x8xf32>
    %385 = vector.broadcast %384 : vector<2x1x8xf32> to vector<2x8x8xf32>
    %386 = arith.select %383, %385, %381 : vector<2x8x8xi1>, vector<2x8x8xf32>
    %387 = vector.extract_strided_slice %74 {offsets = [0, 0], sizes = [1, 8], strides = [1, 1]} : vector<2x8xf32> to vector<1x8xf32>
    %388 = vector.broadcast %387 : vector<1x8xf32> to vector<16x8xf32>
    %389 = arith.subf %388, %96 : vector<16x8xf32>
    %390 = vector.extract_strided_slice %386 {offsets = [0, 0, 0], sizes = [1, 8, 8], strides = [1, 1, 1]} : vector<2x8x8xf32> to vector<1x8x8xf32>
    %391 = vector.shape_cast %390 : vector<1x8x8xf32> to vector<8x8xf32>
    %cst_82 = arith.constant dense<0.000000e+00> : vector<16x8xf32>
    %392 = tpu.matmul %389, %391, %cst_82 {dimension_numbers = #tpu.dot_dimension_numbers<[1], [0], [0], [1], [0, 0, 1, 1], [], []>} : vector<16x8xf32>, vector<8x8xf32>, vector<16x8xf32> -> vector<16x8xf32>
    %393 = arith.addf %96, %392 : vector<16x8xf32>
    %c0_83 = arith.constant 0 : index
    %c0_84 = arith.constant 0 : index
    %394 = vector.load %arg20[%c0_83, %c0_84] : memref<32x8xf32, #tpu.memory_space<vmem>>, vector<16x8xf32>
    tpu.vector_store %arg20[%c0_83, %c0_84], %393 {strides = array<i32>} : memref<32x8xf32, #tpu.memory_space<vmem>>, vector<16x8xf32>,
    %cst_85 = arith.constant dense<0.000000e+00> : vector<8xf32>
    %395 = vector.multi_reduction <add>, %393, %cst_85 [0] : vector<16x8xf32> to vector<8xf32>
    %396 = vector.shape_cast %395 : vector<8xf32> to vector<1x8xf32>
    %cst_86 = arith.constant 1.600000e+01 : f32
    %397 = vector.broadcast %cst_86 : f32 to vector<1x8xf32>
    %398 = arith.divf %396, %397 : vector<1x8xf32>
    %c0_87 = arith.constant 0 : index
    %c0_88 = arith.constant 0 : index
    %399 = vector.load %arg21[%c0_87, %c0_88] : memref<6x8xf32, #tpu.memory_space<vmem>>, vector<1x8xf32>
    tpu.vector_store %arg21[%c0_87, %c0_88], %398 {strides = array<i32>} : memref<6x8xf32, #tpu.memory_space<vmem>>, vector<1x8xf32>,
    %c2 = arith.constant 2 : index
    %c0_89 = arith.constant 0 : index
    %400 = vector.load %arg21[%c2, %c0_89] : memref<6x8xf32, #tpu.memory_space<vmem>>, vector<1x8xf32>
    tpu.vector_store %arg21[%c2, %c0_89], %100 {strides = array<i32>} : memref<6x8xf32, #tpu.memory_space<vmem>>, vector<1x8xf32>,
    %401 = vector.extract_strided_slice %74 {offsets = [1, 0], sizes = [1, 8], strides = [1, 1]} : vector<2x8xf32> to vector<1x8xf32>
    %402 = vector.broadcast %401 : vector<1x8xf32> to vector<16x8xf32>
    %403 = arith.subf %402, %114 : vector<16x8xf32>
    %404 = vector.extract_strided_slice %386 {offsets = [1, 0, 0], sizes = [1, 8, 8], strides = [1, 1, 1]} : vector<2x8x8xf32> to vector<1x8x8xf32>
    %405 = vector.shape_cast %404 : vector<1x8x8xf32> to vector<8x8xf32>
    %cst_90 = arith.constant dense<0.000000e+00> : vector<16x8xf32>
    %406 = tpu.matmul %403, %405, %cst_90 {dimension_numbers = #tpu.dot_dimension_numbers<[1], [0], [0], [1], [0, 0, 1, 1], [], []>} : vector<16x8xf32>, vector<8x8xf32>, vector<16x8xf32> -> vector<16x8xf32>
    %407 = arith.addf %114, %406 : vector<16x8xf32>
    %c16 = arith.constant 16 : index
    %c0_91 = arith.constant 0 : index
    %408 = vector.load %arg20[%c16, %c0_91] : memref<32x8xf32, #tpu.memory_space<vmem>>, vector<16x8xf32>
    tpu.vector_store %arg20[%c16, %c0_91], %407 {strides = array<i32>} : memref<32x8xf32, #tpu.memory_space<vmem>>, vector<16x8xf32>,
    %cst_92 = arith.constant dense<0.000000e+00> : vector<8xf32>
    %409 = vector.multi_reduction <add>, %407, %cst_92 [0] : vector<16x8xf32> to vector<8xf32>
    %410 = vector.shape_cast %409 : vector<8xf32> to vector<1x8xf32>
    %cst_93 = arith.constant 1.600000e+01 : f32
    %411 = vector.broadcast %cst_93 : f32 to vector<1x8xf32>
    %412 = arith.divf %410, %411 : vector<1x8xf32>
    %c1 = arith.constant 1 : index
    %c0_94 = arith.constant 0 : index
    %413 = vector.load %arg21[%c1, %c0_94] : memref<6x8xf32, #tpu.memory_space<vmem>>, vector<1x8xf32>
    tpu.vector_store %arg21[%c1, %c0_94], %412 {strides = array<i32>} : memref<6x8xf32, #tpu.memory_space<vmem>>, vector<1x8xf32>,
    %c3 = arith.constant 3 : index
    %c0_95 = arith.constant 0 : index
    %414 = vector.load %arg21[%c3, %c0_95] : memref<6x8xf32, #tpu.memory_space<vmem>>, vector<1x8xf32>
    tpu.vector_store %arg21[%c3, %c0_95], %118 {strides = array<i32>} : memref<6x8xf32, #tpu.memory_space<vmem>>, vector<1x8xf32>,
    %c4 = arith.constant 4 : index
    %c0_96 = arith.constant 0 : index
    %415 = vector.load %arg21[%c4, %c0_96] : memref<6x8xf32, #tpu.memory_space<vmem>>, vector<2x8xf32>
    tpu.vector_store %arg21[%c4, %c0_96], %74 {strides = array<i32>} : memref<6x8xf32, #tpu.memory_space<vmem>>, vector<2x8xf32>,
    return
  }
}

</mosaic_0001>

<llo_original>
// kernel: kalman_forward.1
$region0: #{kalman_forward.1}
  #allocation0 [shape = 'u32[]', space=smem, size = 0x4, offset = 0x4, fixed_abs, tag = 'smem constant byte address 0x4 - core index']
  #allocation1 [shape = 'u32[144,128]{1,0:T(1,128)}', space=vmem, size = 0x12000, scoped, tag = 'internal scratch']
  #allocation2 [shape = 'bf16[128,256]{1,0:T(16,128)(2,1)}', space=vmem, size = 0x10000, scoped, tag = 'scratch operand']
  #allocation3 [shape = 'bf16[256,256]{1,0:T(16,128)(2,1)}', space=vmem, size = 0x20000, scoped, tag = 'scratch operand']
  #allocation4 [shape = 's32[2]{0}', space=sflag, size = 0x8, scoped, tag = 'scratch operand']
  #allocation5 [shape = 's32[]', space=sflag, size = 0x4, offset = 0, fixed_abs, tag = 'sflag constant byte address 0x0 - dummy sync flag']
  #allocation6 [shape = 's32[]', space=sflag, size = 0x4, offset = 0, fixed_abs, tag = 'sflag constant byte address 0x0 - dummy sync flag']
  %s0 = inlined_call_operand.vmem [shape: bf16[32,64], index: 0, kind: input, shape index: {}]
  %s1 = inlined_call_operand.vmem [shape: bf16[2,128], index: 1, kind: input, shape index: {}]
  %s2 = inlined_call_operand.vmem [shape: bf16[64,256], index: 2, kind: input, shape index: {}]
  %s3 = inlined_call_operand.vmem [shape: f32[1,256], index: 3, kind: input, shape index: {}]
  %s4 = inlined_call_operand.vmem [shape: bf16[256,512], index: 4, kind: input, shape index: {}]
  %s5 = inlined_call_operand.vmem [shape: f32[1,512], index: 5, kind: input, shape index: {}]
  %s6 = inlined_call_operand.vmem [shape: bf16[512,8], index: 6, kind: input, shape index: {}]
  %s7 = inlined_call_operand.vmem [shape: f32[1,8], index: 7, kind: input, shape index: {}]
  %s8 = inlined_call_operand.vmem [shape: bf16[128,256], index: 8, kind: input, shape index: {}]
  %s9 = inlined_call_operand.vmem [shape: f32[1,256], index: 9, kind: input, shape index: {}]
  %s10 = inlined_call_operand.vmem [shape: bf16[256,256], index: 10, kind: input, shape index: {}]
  %s11 = inlined_call_operand.vmem [shape: f32[1,256], index: 11, kind: input, shape index: {}]
  %s12 = inlined_call_operand.vmem [shape: bf16[256,64], index: 12, kind: input, shape index: {}]
  %s13 = inlined_call_operand.vmem [shape: f32[1,64], index: 13, kind: input, shape index: {}]
  %s14 = inlined_call_operand.vmem [shape: bf16[64,8], index: 14, kind: input, shape index: {}]
  %s15 = inlined_call_operand.vmem [shape: f32[1,8], index: 15, kind: input, shape index: {}]
  %s16 = inlined_call_operand.vmem [shape: f32[8,32], index: 16, kind: input, shape index: {}]
  %s17 = inlined_call_operand.vmem [shape: f32[1,32], index: 17, kind: input, shape index: {}]
  %s18 = inlined_call_operand.vmem [shape: f32[32,8], index: 18, kind: input, shape index: {}]
  %s19 = inlined_call_operand.vmem [shape: f32[1,8], index: 19, kind: input, shape index: {}]
  %s20 = inlined_call_operand.vmem [shape: f32[32,8], index: 20, kind: output, shape index: {0}]
  %s21 = inlined_call_operand.vmem [shape: f32[6,8], index: 21, kind: output, shape index: {1}]
  %22 = xla_tuple %s20, %s21
  %s23 = sld [smem:[#allocation0]]
  $region164: #{kalman_forward.1} parent=0
    _
  %s25 = ssub.s32 1, %s23
  %s26 = scalar_select 0, %s25, %s23
  // Predicated region
  $region2: #{kalman_forward.1} parent=0 // pred_check
    _
  $region3: #{kalman_forward.1} parent=0 // pred_check_branch
    %28 = sbr.rel (0) target = $region5
  $region4: #{kalman_forward.1} parent=0 // pred_region
    _
  $region5: #{kalman_forward.1} parent=0 // pred_fallthru
    _
  // Predicated region
  $region6: #{kalman_forward.1} parent=0 // pred_check
    _
  $region7: #{kalman_forward.1} parent=0 // pred_check_branch
    %30 = sbr.rel (0) target = $region9
  $region8: #{kalman_forward.1} parent=0 // pred_region
    _
  $region9: #{kalman_forward.1} parent=0 // pred_fallthru
    _
  // Predicated region
  $region10: #{kalman_forward.1} parent=0 // pred_check
    _
  $region11: #{kalman_forward.1} parent=0 // pred_check_branch
    %32 = sbr.rel (0) target = $region13
  $region12: #{kalman_forward.1} parent=0 // pred_region
    _
  $region13: #{kalman_forward.1} parent=0 // pred_fallthru
    _
  // Predicated region
  $region14: #{kalman_forward.1} parent=0 // pred_check
    _
  $region15: #{kalman_forward.1} parent=0 // pred_check_branch
    %34 = sbr.rel (0) target = $region17
  $region16: #{kalman_forward.1} parent=0 // pred_region
    _
  $region17: #{kalman_forward.1} parent=0 // pred_fallthru
    _
  // Predicated region
  $region18: #{kalman_forward.1} parent=0 // pred_check
    _
  $region19: #{kalman_forward.1} parent=0 // pred_check_branch
    %36 = sbr.rel (0) target = $region21
  $region20: #{kalman_forward.1} parent=0 // pred_region
    _
  $region21: #{kalman_forward.1} parent=0 // pred_fallthru
    _
  // Predicated region
  $region22: #{kalman_forward.1} parent=0 // pred_check
    _
  $region23: #{kalman_forward.1} parent=0 // pred_check_branch
    %38 = sbr.rel (0) target = $region25
  $region24: #{kalman_forward.1} parent=0 // pred_region
    _
  $region25: #{kalman_forward.1} parent=0 // pred_fallthru
    _
  // Predicated region
  $region26: #{kalman_forward.1} parent=0 // pred_check
    _
  $region27: #{kalman_forward.1} parent=0 // pred_check_branch
    %40 = sbr.rel (0) target = $region29
  $region28: #{kalman_forward.1} parent=0 // pred_region
    _
  $region29: #{kalman_forward.1} parent=0 // pred_fallthru
    _
  // Predicated region
  $region30: #{kalman_forward.1} parent=0 // pred_check
    _
  $region31: #{kalman_forward.1} parent=0 // pred_check_branch
    %42 = sbr.rel (0) target = $region33
  $region32: #{kalman_forward.1} parent=0 // pred_region
    _
  $region33: #{kalman_forward.1} parent=0 // pred_fallthru
    _
  // Predicated region
  $region34: #{kalman_forward.1} parent=0 // pred_check
    _
  $region35: #{kalman_forward.1} parent=0 // pred_check_branch
    %44 = sbr.rel (0) target = $region37
  $region36: #{kalman_forward.1} parent=0 // pred_region
    _
  $region37: #{kalman_forward.1} parent=0 // pred_fallthru
    _
  // Predicated region
  $region38: #{kalman_forward.1} parent=0 // pred_check
    _
  $region39: #{kalman_forward.1} parent=0 // pred_check_branch
    %46 = sbr.rel (0) target = $region41
  $region40: #{kalman_forward.1} parent=0 // pred_region
    _
  $region41: #{kalman_forward.1} parent=0 // pred_fallthru
    _
  // Predicated region
  $region42: #{kalman_forward.1} parent=0 // pred_check
    _
  $region43: #{kalman_forward.1} parent=0 // pred_check_branch
    %48 = sbr.rel (0) target = $region45
  $region44: #{kalman_forward.1} parent=0 // pred_region
    _
  $region45: #{kalman_forward.1} parent=0 // pred_fallthru
    _
  // Predicated region
  $region46: #{kalman_forward.1} parent=0 // pred_check
    _
  $region47: #{kalman_forward.1} parent=0 // pred_check_branch
    %50 = sbr.rel (0) target = $region49
  $region48: #{kalman_forward.1} parent=0 // pred_region
    _
  $region49: #{kalman_forward.1} parent=0 // pred_fallthru
    _
  // Predicated region
  $region50: #{kalman_forward.1} parent=0 // pred_check
    _
  $region51: #{kalman_forward.1} parent=0 // pred_check_branch
    %52 = sbr.rel (0) target = $region53
  $region52: #{kalman_forward.1} parent=0 // pred_region
    _
  $region53: #{kalman_forward.1} parent=0 // pred_fallthru
    _
  // Predicated region
  $region54: #{kalman_forward.1} parent=0 // pred_check
    _
  $region55: #{kalman_forward.1} parent=0 // pred_check_branch
    %54 = sbr.rel (0) target = $region57
  $region56: #{kalman_forward.1} parent=0 // pred_region
    _
  $region57: #{kalman_forward.1} parent=0 // pred_fallthru
    _
  // Predicated region
  $region58: #{kalman_forward.1} parent=0 // pred_check
    _
  $region59: #{kalman_forward.1} parent=0 // pred_check_branch
    %56 = sbr.rel (0) target = $region61
  $region60: #{kalman_forward.1} parent=0 // pred_region
    _
  $region61: #{kalman_forward.1} parent=0 // pred_fallthru
    _
  // Predicated region
  $region62: #{kalman_forward.1} parent=0 // pred_check
    _
  $region63: #{kalman_forward.1} parent=0 // pred_check_branch
    %58 = sbr.rel (0) target = $region65
  $region64: #{kalman_forward.1} parent=0 // pred_region
    _
  $region65: #{kalman_forward.1} parent=0 // pred_fallthru
    _
  // Predicated region
  $region66: #{kalman_forward.1} parent=0 // pred_check
    _
  $region67: #{kalman_forward.1} parent=0 // pred_check_branch
    %60 = sbr.rel (0) target = $region69
  $region68: #{kalman_forward.1} parent=0 // pred_region
    _
  $region69: #{kalman_forward.1} parent=0 // pred_fallthru
    _
  // Predicated region
  $region70: #{kalman_forward.1} parent=0 // pred_check
    _
  $region71: #{kalman_forward.1} parent=0 // pred_check_branch
    %62 = sbr.rel (0) target = $region73
  $region72: #{kalman_forward.1} parent=0 // pred_region
    _
  $region73: #{kalman_forward.1} parent=0 // pred_fallthru
    _
  %p65 = scmp.lt.u32.totalorder 4, 8
  %p66 = pneg %p65
  // Predicated region
  $region74: #{kalman_forward.1} parent=0 // pred_check
    _
  $region75: #{kalman_forward.1} parent=0 // pred_check_branch
    %68 = sbr.rel (%p65) target = $region77
  $region76: #{kalman_forward.1} parent=0 // pred_region
    %s145 = sand.u32 4, 7
    %p146 = scmp.eq.s32.totalorder %s145, 0
    %p147 = pneg %p146
    // Predicated region
    $region89: #{kalman_forward.1} parent=76 // pred_check
      _
    $region90: #{kalman_forward.1} parent=76 // pred_check_branch
      %149 = sbr.rel (%p146) target = $region92
    $region91: #{kalman_forward.1} parent=76 // pred_region
      %s150 = sand.u32 4, 7
      %s151 = ssub.s32 4, %s150
      %s152 = scalar_lea.vmem %s8, %s151
      %s153 = ssub.s32 4, %s150
      %s154 = scalar_lea.vmem [#allocation2], %s153
      loop: start=0, step=1, limit=1
      $region93: #{kalman_forward.1} parent=91 // loop_pre_header
        _
      $region94: #{kalman_forward.1} parent=91 // loop_header
        %s156 = sphi 0, %s160
        %p157 = scmp.ge.s32.totalorder %s156, 1
        %s161 = sphi %s8, %s8
        %s162 = sphi [#allocation2], [#allocation2]
      $region95: #{kalman_forward.1} parent=91 // loop_header_branch
        %159 = sbr.rel (%p157) target = $region99
      $region96: #{kalman_forward.1} parent=91 // loop_body
        _
      $region97: #{kalman_forward.1} parent=91 // loop_footer
        %s160 = sadd.s32 1, %s156
      $region98: #{kalman_forward.1} parent=91 // loop_footer_branch
        %155 = sbr.rel target = $region94
      $region99: #{kalman_forward.1} parent=91 // loop_exit
        _
      %s163 = sshllo.u32 0, %s150
      loop: start=0, step=1, limit=1
      $region100: #{kalman_forward.1} parent=91 // loop_pre_header
        _
      $region101: #{kalman_forward.1} parent=91 // loop_header
        %s165 = sphi 0, %s169
        %p166 = scmp.ge.s32.totalorder %s165, 1
        %s170 = sphi %s152, %s152
        %s171 = sphi %s154, %s154
      $region102: #{kalman_forward.1} parent=91 // loop_header_branch
        %168 = sbr.rel (%p166) target = $region106
      $region103: #{kalman_forward.1} parent=91 // loop_body
        %v172 = vld [vmem:[%s170] sm:%s163]
        %173 = vst [vmem:[%s171] sm:%s163] %v172
        %v174 = vld [vmem:[%s170 + $0x8] sm:%s163]
        %175 = vst [vmem:[%s171 + $0x4] sm:%s163] %v174
        %v176 = vld [vmem:[%s170 + $0x4] sm:%s163]
        %177 = vst [vmem:[%s171 + $0x8] sm:%s163] %v176
        %v178 = vld [vmem:[%s170 + $0xc] sm:%s163]
        %179 = vst [vmem:[%s171 + $0xc] sm:%s163] %v178
        %v180 = vld [vmem:[%s170 + $0x10] sm:%s163]
        %181 = vst [vmem:[%s171 + $0x10] sm:%s163] %v180
        %v182 = vld [vmem:[%s170 + $0x18] sm:%s163]
        %183 = vst [vmem:[%s171 + $0x14] sm:%s163] %v182
        %v184 = vld [vmem:[%s170 + $0x14] sm:%s163]
        %185 = vst [vmem:[%s171 + $0x18] sm:%s163] %v184
        %v186 = vld [vmem:[%s170 + $0x1c] sm:%s163]
        %187 = vst [vmem:[%s171 + $0x1c] sm:%s163] %v186
        %v188 = vld [vmem:[%s170 + $0x20] sm:%s163]
        %189 = vst [vmem:[%s171 + $0x20] sm:%s163] %v188
        %v190 = vld [vmem:[%s170 + $0x28] sm:%s163]
        %191 = vst [vmem:[%s171 + $0x24] sm:%s163] %v190
        %v192 = vld [vmem:[%s170 + $0x24] sm:%s163]
        %193 = vst [vmem:[%s171 + $0x28] sm:%s163] %v192
        %v194 = vld [vmem:[%s170 + $0x2c] sm:%s163]
        %195 = vst [vmem:[%s171 + $0x2c] sm:%s163] %v194
        %v196 = vld [vmem:[%s170 + $0x30] sm:%s163]
        %197 = vst [vmem:[%s171 + $0x30] sm:%s163] %v196
        %v198 = vld [vmem:[%s170 + $0x38] sm:%s163]
        %199 = vst [vmem:[%s171 + $0x34] sm:%s163] %v198
        %v200 = vld [vmem:[%s170 + $0x34] sm:%s163]
        %201 = vst [vmem:[%s171 + $0x38] sm:%s163] %v200
        %v202 = vld [vmem:[%s170 + $0x3c] sm:%s163]
        %203 = vst [vmem:[%s171 + $0x3c] sm:%s163] %v202
        %v204 = vld [vmem:[%s170 + $0x40] sm:%s163]
        %205 = vst [vmem:[%s171 + $0x40] sm:%s163] %v204
        %v206 = vld [vmem:[%s170 + $0x48] sm:%s163]
        %207 = vst [vmem:[%s171 + $0x44] sm:%s163] %v206
        %v208 = vld [vmem:[%s170 + $0x44] sm:%s163]
        %209 = vst [vmem:[%s171 + $0x48] sm:%s163] %v208
        %v210 = vld [vmem:[%s170 + $0x4c] sm:%s163]
        %211 = vst [vmem:[%s171 + $0x4c] sm:%s163] %v210
        %v212 = vld [vmem:[%s170 + $0x50] sm:%s163]
        %213 = vst [vmem:[%s171 + $0x50] sm:%s163] %v212
        %v214 = vld [vmem:[%s170 + $0x58] sm:%s163]
        %215 = vst [vmem:[%s171 + $0x54] sm:%s163] %v214
        %v216 = vld [vmem:[%s170 + $0x54] sm:%s163]
        %217 = vst [vmem:[%s171 + $0x58] sm:%s163] %v216
        %v218 = vld [vmem:[%s170 + $0x5c] sm:%s163]
        %219 = vst [vmem:[%s171 + $0x5c] sm:%s163] %v218
        %v220 = vld [vmem:[%s170 + $0x60] sm:%s163]
        %221 = vst [vmem:[%s171 + $0x60] sm:%s163] %v220
        %v222 = vld [vmem:[%s170 + $0x68] sm:%s163]
        %223 = vst [vmem:[%s171 + $0x64] sm:%s163] %v222
        %v224 = vld [vmem:[%s170 + $0x64] sm:%s163]
        %225 = vst [vmem:[%s171 + $0x68] sm:%s163] %v224
        %v226 = vld [vmem:[%s170 + $0x6c] sm:%s163]
        %227 = vst [vmem:[%s171 + $0x6c] sm:%s163] %v226
        %v228 = vld [vmem:[%s170 + $0x70] sm:%s163]
        %229 = vst [vmem:[%s171 + $0x70] sm:%s163] %v228
        %v230 = vld [vmem:[%s170 + $0x78] sm:%s163]
        %231 = vst [vmem:[%s171 + $0x74] sm:%s163] %v230
        %v232 = vld [vmem:[%s170 + $0x74] sm:%s163]
        %233 = vst [vmem:[%s171 + $0x78] sm:%s163] %v232
        %v234 = vld [vmem:[%s170 + $0x7c] sm:%s163]
        %235 = vst [vmem:[%s171 + $0x7c] sm:%s163] %v234
      $region104: #{kalman_forward.1} parent=91 // loop_footer
        %s169 = sadd.s32 1, %s165
      $region105: #{kalman_forward.1} parent=91 // loop_footer_branch
        %164 = sbr.rel target = $region101
      $region106: #{kalman_forward.1} parent=91 // loop_exit
        _
    $region92: #{kalman_forward.1} parent=76 // pred_fallthru
      _
  $region77: #{kalman_forward.1} parent=0 // pred_fallthru
    _
  // Predicated region
  $region78: #{kalman_forward.1} parent=0 // pred_check
    %p69 = pneg %p65
  $region79: #{kalman_forward.1} parent=0 // pred_check_branch
    %71 = sbr.rel (%p69) target = $region81
  $region80: #{kalman_forward.1} parent=0 // pred_region
    %s72 = sshllo.u32 0, 4
    loop: start=0, step=1, limit=1
    $region82: #{kalman_forward.1} parent=80 // loop_pre_header
      _
    $region83: #{kalman_forward.1} parent=80 // loop_header
      %s74 = sphi 0, %s78
      %p75 = scmp.ge.s32.totalorder %s74, 1
      %s79 = sphi %s8, %s8
      %s80 = sphi [#allocation2], [#allocation2]
    $region84: #{kalman_forward.1} parent=80 // loop_header_branch
      %77 = sbr.rel (%p75) target = $region88
    $region85: #{kalman_forward.1} parent=80 // loop_body
      %v81 = vld [vmem:[%s79] sm:%s72]
      %82 = vst [vmem:[%s80] sm:%s72] %v81
      %v83 = vld [vmem:[%s79 + $0x8] sm:%s72]
      %84 = vst [vmem:[%s80 + $0x4] sm:%s72] %v83
      %v85 = vld [vmem:[%s79 + $0x4] sm:%s72]
      %86 = vst [vmem:[%s80 + $0x8] sm:%s72] %v85
      %v87 = vld [vmem:[%s79 + $0xc] sm:%s72]
      %88 = vst [vmem:[%s80 + $0xc] sm:%s72] %v87
      %v89 = vld [vmem:[%s79 + $0x10] sm:%s72]
      %90 = vst [vmem:[%s80 + $0x10] sm:%s72] %v89
      %v91 = vld [vmem:[%s79 + $0x18] sm:%s72]
      %92 = vst [vmem:[%s80 + $0x14] sm:%s72] %v91
      %v93 = vld [vmem:[%s79 + $0x14] sm:%s72]
      %94 = vst [vmem:[%s80 + $0x18] sm:%s72] %v93
      %v95 = vld [vmem:[%s79 + $0x1c] sm:%s72]
      %96 = vst [vmem:[%s80 + $0x1c] sm:%s72] %v95
      %v97 = vld [vmem:[%s79 + $0x20] sm:%s72]
      %98 = vst [vmem:[%s80 + $0x20] sm:%s72] %v97
      %v99 = vld [vmem:[%s79 + $0x28] sm:%s72]
      %100 = vst [vmem:[%s80 + $0x24] sm:%s72] %v99
      %v101 = vld [vmem:[%s79 + $0x24] sm:%s72]
      %102 = vst [vmem:[%s80 + $0x28] sm:%s72] %v101
      %v103 = vld [vmem:[%s79 + $0x2c] sm:%s72]
      %104 = vst [vmem:[%s80 + $0x2c] sm:%s72] %v103
      %v105 = vld [vmem:[%s79 + $0x30] sm:%s72]
      %106 = vst [vmem:[%s80 + $0x30] sm:%s72] %v105
      %v107 = vld [vmem:[%s79 + $0x38] sm:%s72]
      %108 = vst [vmem:[%s80 + $0x34] sm:%s72] %v107
      %v109 = vld [vmem:[%s79 + $0x34] sm:%s72]
      %110 = vst [vmem:[%s80 + $0x38] sm:%s72] %v109
      %v111 = vld [vmem:[%s79 + $0x3c] sm:%s72]
      %112 = vst [vmem:[%s80 + $0x3c] sm:%s72] %v111
      %v113 = vld [vmem:[%s79 + $0x40] sm:%s72]
      %114 = vst [vmem:[%s80 + $0x40] sm:%s72] %v113
      %v115 = vld [vmem:[%s79 + $0x48] sm:%s72]
      %116 = vst [vmem:[%s80 + $0x44] sm:%s72] %v115
      %v117 = vld [vmem:[%s79 + $0x44] sm:%s72]
      %118 = vst [vmem:[%s80 + $0x48] sm:%s72] %v117
      %v119 = vld [vmem:[%s79 + $0x4c] sm:%s72]
      %120 = vst [vmem:[%s80 + $0x4c] sm:%s72] %v119
      %v121 = vld [vmem:[%s79 + $0x50] sm:%s72]
      %122 = vst [vmem:[%s80 + $0x50] sm:%s72] %v121
      %v123 = vld [vmem:[%s79 + $0x58] sm:%s72]
      %124 = vst [vmem:[%s80 + $0x54] sm:%s72] %v123
      %v125 = vld [vmem:[%s79 + $0x54] sm:%s72]
      %126 = vst [vmem:[%s80 + $0x58] sm:%s72] %v125
      %v127 = vld [vmem:[%s79 + $0x5c] sm:%s72]
      %128 = vst [vmem:[%s80 + $0x5c] sm:%s72] %v127
      %v129 = vld [vmem:[%s79 + $0x60] sm:%s72]
      %130 = vst [vmem:[%s80 + $0x60] sm:%s72] %v129
      %v131 = vld [vmem:[%s79 + $0x68] sm:%s72]
      %132 = vst [vmem:[%s80 + $0x64] sm:%s72] %v131
      %v133 = vld [vmem:[%s79 + $0x64] sm:%s72]
      %134 = vst [vmem:[%s80 + $0x68] sm:%s72] %v133
      %v135 = vld [vmem:[%s79 + $0x6c] sm:%s72]
      %136 = vst [vmem:[%s80 + $0x6c] sm:%s72] %v135
      %v137 = vld [vmem:[%s79 + $0x70] sm:%s72]
      %138 = vst [vmem:[%s80 + $0x70] sm:%s72] %v137
      %v139 = vld [vmem:[%s79 + $0x78] sm:%s72]
      %140 = vst [vmem:[%s80 + $0x74] sm:%s72] %v139
      %v141 = vld [vmem:[%s79 + $0x74] sm:%s72]
      %142 = vst [vmem:[%s80 + $0x78] sm:%s72] %v141
      %v143 = vld [vmem:[%s79 + $0x7c] sm:%s72]
      %144 = vst [vmem:[%s80 + $0x7c] sm:%s72] %v143
    $region86: #{kalman_forward.1} parent=80 // loop_footer
      %s78 = sadd.s32 1, %s74
    $region87: #{kalman_forward.1} parent=80 // loop_footer_branch
      %73 = sbr.rel target = $region83
    $region88: #{kalman_forward.1} parent=80 // loop_exit
      _
  $region81: #{kalman_forward.1} parent=0 // pred_fallthru
    _
  // Predicated region
  $region107: #{kalman_forward.1} parent=0 // pred_check
    _
  $region108: #{kalman_forward.1} parent=0 // pred_check_branch
    %238 = sbr.rel (0) target = $region110
  $region109: #{kalman_forward.1} parent=0 // pred_region
    %239 = vsyncadd [#allocation4], 2048
  $region110: #{kalman_forward.1} parent=0 // pred_fallthru
    _
  %s240 = scalar_lea.sflag [#allocation4], 1
  %p242 = scmp.lt.u32.totalorder 4, 8
  %p243 = pneg %p242
  // Predicated region
  $region111: #{kalman_forward.1} parent=0 // pred_check
    _
  $region112: #{kalman_forward.1} parent=0 // pred_check_branch
    %245 = sbr.rel (%p242) target = $region114
  $region113: #{kalman_forward.1} parent=0 // pred_region
    %s386 = sand.u32 4, 7
    %p387 = scmp.eq.s32.totalorder %s386, 0
    %p388 = pneg %p387
    // Predicated region
    $region126: #{kalman_forward.1} parent=113 // pred_check
      _
    $region127: #{kalman_forward.1} parent=113 // pred_check_branch
      %390 = sbr.rel (%p387) target = $region129
    $region128: #{kalman_forward.1} parent=113 // pred_region
      %s391 = sand.u32 4, 7
      %s392 = ssub.s32 4, %s391
      %s393 = scalar_lea.vmem %s10, %s392
      %s394 = ssub.s32 4, %s391
      %s395 = scalar_lea.vmem [#allocation3], %s394
      loop: start=0, step=1, limit=1
      $region130: #{kalman_forward.1} parent=128 // loop_pre_header
        _
      $region131: #{kalman_forward.1} parent=128 // loop_header
        %s397 = sphi 0, %s401
        %p398 = scmp.ge.s32.totalorder %s397, 1
        %s402 = sphi %s10, %s10
        %s403 = sphi [#allocation3], [#allocation3]
      $region132: #{kalman_forward.1} parent=128 // loop_header_branch
        %400 = sbr.rel (%p398) target = $region136
      $region133: #{kalman_forward.1} parent=128 // loop_body
        _
      $region134: #{kalman_forward.1} parent=128 // loop_footer
        %s401 = sadd.s32 1, %s397
      $region135: #{kalman_forward.1} parent=128 // loop_footer_branch
        %396 = sbr.rel target = $region131
      $region136: #{kalman_forward.1} parent=128 // loop_exit
        _
      %s404 = sshllo.u32 0, %s391
      loop: start=0, step=1, limit=1
      $region137: #{kalman_forward.1} parent=128 // loop_pre_header
        _
      $region138: #{kalman_forward.1} parent=128 // loop_header
        %s406 = sphi 0, %s410
        %p407 = scmp.ge.s32.totalorder %s406, 1
        %s411 = sphi %s393, %s393
        %s412 = sphi %s395, %s395
      $region139: #{kalman_forward.1} parent=128 // loop_header_branch
        %409 = sbr.rel (%p407) target = $region143
      $region140: #{kalman_forward.1} parent=128 // loop_body
        %v413 = vld [vmem:[%s411] sm:%s404]
        %414 = vst [vmem:[%s412] sm:%s404] %v413
        %v415 = vld [vmem:[%s411 + $0x8] sm:%s404]
        %416 = vst [vmem:[%s412 + $0x4] sm:%s404] %v415
        %v417 = vld [vmem:[%s411 + $0x4] sm:%s404]
        %418 = vst [vmem:[%s412 + $0x8] sm:%s404] %v417
        %v419 = vld [vmem:[%s411 + $0xc] sm:%s404]
        %420 = vst [vmem:[%s412 + $0xc] sm:%s404] %v419
        %v421 = vld [vmem:[%s411 + $0x10] sm:%s404]
        %422 = vst [vmem:[%s412 + $0x10] sm:%s404] %v421
        %v423 = vld [vmem:[%s411 + $0x18] sm:%s404]
        %424 = vst [vmem:[%s412 + $0x14] sm:%s404] %v423
        %v425 = vld [vmem:[%s411 + $0x14] sm:%s404]
        %426 = vst [vmem:[%s412 + $0x18] sm:%s404] %v425
        %v427 = vld [vmem:[%s411 + $0x1c] sm:%s404]
        %428 = vst [vmem:[%s412 + $0x1c] sm:%s404] %v427
        %v429 = vld [vmem:[%s411 + $0x20] sm:%s404]
        %430 = vst [vmem:[%s412 + $0x20] sm:%s404] %v429
        %v431 = vld [vmem:[%s411 + $0x28] sm:%s404]
        %432 = vst [vmem:[%s412 + $0x24] sm:%s404] %v431
        %v433 = vld [vmem:[%s411 + $0x24] sm:%s404]
        %434 = vst [vmem:[%s412 + $0x28] sm:%s404] %v433
        %v435 = vld [vmem:[%s411 + $0x2c] sm:%s404]
        %436 = vst [vmem:[%s412 + $0x2c] sm:%s404] %v435
        %v437 = vld [vmem:[%s411 + $0x30] sm:%s404]
        %438 = vst [vmem:[%s412 + $0x30] sm:%s404] %v437
        %v439 = vld [vmem:[%s411 + $0x38] sm:%s404]
        %440 = vst [vmem:[%s412 + $0x34] sm:%s404] %v439
        %v441 = vld [vmem:[%s411 + $0x34] sm:%s404]
        %442 = vst [vmem:[%s412 + $0x38] sm:%s404] %v441
        %v443 = vld [vmem:[%s411 + $0x3c] sm:%s404]
        %444 = vst [vmem:[%s412 + $0x3c] sm:%s404] %v443
        %v445 = vld [vmem:[%s411 + $0x40] sm:%s404]
        %446 = vst [vmem:[%s412 + $0x40] sm:%s404] %v445
        %v447 = vld [vmem:[%s411 + $0x48] sm:%s404]
        %448 = vst [vmem:[%s412 + $0x44] sm:%s404] %v447
        %v449 = vld [vmem:[%s411 + $0x44] sm:%s404]
        %450 = vst [vmem:[%s412 + $0x48] sm:%s404] %v449
        %v451 = vld [vmem:[%s411 + $0x4c] sm:%s404]
        %452 = vst [vmem:[%s412 + $0x4c] sm:%s404] %v451
        %v453 = vld [vmem:[%s411 + $0x50] sm:%s404]
        %454 = vst [vmem:[%s412 + $0x50] sm:%s404] %v453
        %v455 = vld [vmem:[%s411 + $0x58] sm:%s404]
        %456 = vst [vmem:[%s412 + $0x54] sm:%s404] %v455
        %v457 = vld [vmem:[%s411 + $0x54] sm:%s404]
        %458 = vst [vmem:[%s412 + $0x58] sm:%s404] %v457
        %v459 = vld [vmem:[%s411 + $0x5c] sm:%s404]
        %460 = vst [vmem:[%s412 + $0x5c] sm:%s404] %v459
        %v461 = vld [vmem:[%s411 + $0x60] sm:%s404]
        %462 = vst [vmem:[%s412 + $0x60] sm:%s404] %v461
        %v463 = vld [vmem:[%s411 + $0x68] sm:%s404]
        %464 = vst [vmem:[%s412 + $0x64] sm:%s404] %v463
        %v465 = vld [vmem:[%s411 + $0x64] sm:%s404]
        %466 = vst [vmem:[%s412 + $0x68] sm:%s404] %v465
        %v467 = vld [vmem:[%s411 + $0x6c] sm:%s404]
        %468 = vst [vmem:[%s412 + $0x6c] sm:%s404] %v467
        %v469 = vld [vmem:[%s411 + $0x70] sm:%s404]
        %470 = vst [vmem:[%s412 + $0x70] sm:%s404] %v469
        %v471 = vld [vmem:[%s411 + $0x78] sm:%s404]
        %472 = vst [vmem:[%s412 + $0x74] sm:%s404] %v471
        %v473 = vld [vmem:[%s411 + $0x74] sm:%s404]
        %474 = vst [vmem:[%s412 + $0x78] sm:%s404] %v473
        %v475 = vld [vmem:[%s411 + $0x7c] sm:%s404]
        %476 = vst [vmem:[%s412 + $0x7c] sm:%s404] %v475
        %v477 = vld [vmem:[%s411 + $0x80] sm:%s404]
        %478 = vst [vmem:[%s412 + $0x80] sm:%s404] %v477
        %v479 = vld [vmem:[%s411 + $0x88] sm:%s404]
        %480 = vst [vmem:[%s412 + $0x84] sm:%s404] %v479
        %v481 = vld [vmem:[%s411 + $0x84] sm:%s404]
        %482 = vst [vmem:[%s412 + $0x88] sm:%s404] %v481
        %v483 = vld [vmem:[%s411 + $0x8c] sm:%s404]
        %484 = vst [vmem:[%s412 + $0x8c] sm:%s404] %v483
        %v485 = vld [vmem:[%s411 + $0x90] sm:%s404]
        %486 = vst [vmem:[%s412 + $0x90] sm:%s404] %v485
        %v487 = vld [vmem:[%s411 + $0x98] sm:%s404]
        %488 = vst [vmem:[%s412 + $0x94] sm:%s404] %v487
        %v489 = vld [vmem:[%s411 + $0x94] sm:%s404]
        %490 = vst [vmem:[%s412 + $0x98] sm:%s404] %v489
        %v491 = vld [vmem:[%s411 + $0x9c] sm:%s404]
        %492 = vst [vmem:[%s412 + $0x9c] sm:%s404] %v491
        %v493 = vld [vmem:[%s411 + $0xa0] sm:%s404]
        %494 = vst [vmem:[%s412 + $0xa0] sm:%s404] %v493
        %v495 = vld [vmem:[%s411 + $0xa8] sm:%s404]
        %496 = vst [vmem:[%s412 + $0xa4] sm:%s404] %v495
        %v497 = vld [vmem:[%s411 + $0xa4] sm:%s404]
        %498 = vst [vmem:[%s412 + $0xa8] sm:%s404] %v497
        %v499 = vld [vmem:[%s411 + $0xac] sm:%s404]
        %500 = vst [vmem:[%s412 + $0xac] sm:%s404] %v499
        %v501 = vld [vmem:[%s411 + $0xb0] sm:%s404]
        %502 = vst [vmem:[%s412 + $0xb0] sm:%s404] %v501
        %v503 = vld [vmem:[%s411 + $0xb8] sm:%s404]
        %504 = vst [vmem:[%s412 + $0xb4] sm:%s404] %v503
        %v505 = vld [vmem:[%s411 + $0xb4] sm:%s404]
        %506 = vst [vmem:[%s412 + $0xb8] sm:%s404] %v505
        %v507 = vld [vmem:[%s411 + $0xbc] sm:%s404]
        %508 = vst [vmem:[%s412 + $0xbc] sm:%s404] %v507
        %v509 = vld [vmem:[%s411 + $0xc0] sm:%s404]
        %510 = vst [vmem:[%s412 + $0xc0] sm:%s404] %v509
        %v511 = vld [vmem:[%s411 + $0xc8] sm:%s404]
        %512 = vst [vmem:[%s412 + $0xc4] sm:%s404] %v511
        %v513 = vld [vmem:[%s411 + $0xc4] sm:%s404]
        %514 = vst [vmem:[%s412 + $0xc8] sm:%s404] %v513
        %v515 = vld [vmem:[%s411 + $0xcc] sm:%s404]
        %516 = vst [vmem:[%s412 + $0xcc] sm:%s404] %v515
        %v517 = vld [vmem:[%s411 + $0xd0] sm:%s404]
        %518 = vst [vmem:[%s412 + $0xd0] sm:%s404] %v517
        %v519 = vld [vmem:[%s411 + $0xd8] sm:%s404]
        %520 = vst [vmem:[%s412 + $0xd4] sm:%s404] %v519
        %v521 = vld [vmem:[%s411 + $0xd4] sm:%s404]
        %522 = vst [vmem:[%s412 + $0xd8] sm:%s404] %v521
        %v523 = vld [vmem:[%s411 + $0xdc] sm:%s404]
        %524 = vst [vmem:[%s412 + $0xdc] sm:%s404] %v523
        %v525 = vld [vmem:[%s411 + $0xe0] sm:%s404]
        %526 = vst [vmem:[%s412 + $0xe0] sm:%s404] %v525
        %v527 = vld [vmem:[%s411 + $0xe8] sm:%s404]
        %528 = vst [vmem:[%s412 + $0xe4] sm:%s404] %v527
        %v529 = vld [vmem:[%s411 + $0xe4] sm:%s404]
        %530 = vst [vmem:[%s412 + $0xe8] sm:%s404] %v529
        %v531 = vld [vmem:[%s411 + $0xec] sm:%s404]
        %532 = vst [vmem:[%s412 + $0xec] sm:%s404] %v531
        %v533 = vld [vmem:[%s411 + $0xf0] sm:%s404]
        %534 = vst [vmem:[%s412 + $0xf0] sm:%s404] %v533
        %v535 = vld [vmem:[%s411 + $0xf8] sm:%s404]
        %536 = vst [vmem:[%s412 + $0xf4] sm:%s404] %v535
        %v537 = vld [vmem:[%s411 + $0xf4] sm:%s404]
        %538 = vst [vmem:[%s412 + $0xf8] sm:%s404] %v537
        %v539 = vld [vmem:[%s411 + $0xfc] sm:%s404]
        %540 = vst [vmem:[%s412 + $0xfc] sm:%s404] %v539
      $region141: #{kalman_forward.1} parent=128 // loop_footer
        %s410 = sadd.s32 1, %s406
      $region142: #{kalman_forward.1} parent=128 // loop_footer_branch
        %405 = sbr.rel target = $region138
      $region143: #{kalman_forward.1} parent=128 // loop_exit
        _
    $region129: #{kalman_forward.1} parent=113 // pred_fallthru
      _
  $region114: #{kalman_forward.1} parent=0 // pred_fallthru
    _
  // Predicated region
  $region115: #{kalman_forward.1} parent=0 // pred_check
    %p246 = pneg %p242
  $region116: #{kalman_forward.1} parent=0 // pred_check_branch
    %248 = sbr.rel (%p246) target = $region118
  $region117: #{kalman_forward.1} parent=0 // pred_region
    %s249 = sshllo.u32 0, 4
    loop: start=0, step=1, limit=1
    $region119: #{kalman_forward.1} parent=117 // loop_pre_header
      _
    $region120: #{kalman_forward.1} parent=117 // loop_header
      %s251 = sphi 0, %s255
      %p252 = scmp.ge.s32.totalorder %s251, 1
      %s256 = sphi %s10, %s10
      %s257 = sphi [#allocation3], [#allocation3]
    $region121: #{kalman_forward.1} parent=117 // loop_header_branch
      %254 = sbr.rel (%p252) target = $region125
    $region122: #{kalman_forward.1} parent=117 // loop_body
      %v258 = vld [vmem:[%s256] sm:%s249]
      %259 = vst [vmem:[%s257] sm:%s249] %v258
      %v260 = vld [vmem:[%s256 + $0x8] sm:%s249]
      %261 = vst [vmem:[%s257 + $0x4] sm:%s249] %v260
      %v262 = vld [vmem:[%s256 + $0x4] sm:%s249]
      %263 = vst [vmem:[%s257 + $0x8] sm:%s249] %v262
      %v264 = vld [vmem:[%s256 + $0xc] sm:%s249]
      %265 = vst [vmem:[%s257 + $0xc] sm:%s249] %v264
      %v266 = vld [vmem:[%s256 + $0x10] sm:%s249]
      %267 = vst [vmem:[%s257 + $0x10] sm:%s249] %v266
      %v268 = vld [vmem:[%s256 + $0x18] sm:%s249]
      %269 = vst [vmem:[%s257 + $0x14] sm:%s249] %v268
      %v270 = vld [vmem:[%s256 + $0x14] sm:%s249]
      %271 = vst [vmem:[%s257 + $0x18] sm:%s249] %v270
      %v272 = vld [vmem:[%s256 + $0x1c] sm:%s249]
      %273 = vst [vmem:[%s257 + $0x1c] sm:%s249] %v272
      %v274 = vld [vmem:[%s256 + $0x20] sm:%s249]
      %275 = vst [vmem:[%s257 + $0x20] sm:%s249] %v274
      %v276 = vld [vmem:[%s256 + $0x28] sm:%s249]
      %277 = vst [vmem:[%s257 + $0x24] sm:%s249] %v276
      %v278 = vld [vmem:[%s256 + $0x24] sm:%s249]
      %279 = vst [vmem:[%s257 + $0x28] sm:%s249] %v278
      %v280 = vld [vmem:[%s256 + $0x2c] sm:%s249]
      %281 = vst [vmem:[%s257 + $0x2c] sm:%s249] %v280
      %v282 = vld [vmem:[%s256 + $0x30] sm:%s249]
      %283 = vst [vmem:[%s257 + $0x30] sm:%s249] %v282
      %v284 = vld [vmem:[%s256 + $0x38] sm:%s249]
      %285 = vst [vmem:[%s257 + $0x34] sm:%s249] %v284
      %v286 = vld [vmem:[%s256 + $0x34] sm:%s249]
      %287 = vst [vmem:[%s257 + $0x38] sm:%s249] %v286
      %v288 = vld [vmem:[%s256 + $0x3c] sm:%s249]
      %289 = vst [vmem:[%s257 + $0x3c] sm:%s249] %v288
      %v290 = vld [vmem:[%s256 + $0x40] sm:%s249]
      %291 = vst [vmem:[%s257 + $0x40] sm:%s249] %v290
      %v292 = vld [vmem:[%s256 + $0x48] sm:%s249]
      %293 = vst [vmem:[%s257 + $0x44] sm:%s249] %v292
      %v294 = vld [vmem:[%s256 + $0x44] sm:%s249]
      %295 = vst [vmem:[%s257 + $0x48] sm:%s249] %v294
      %v296 = vld [vmem:[%s256 + $0x4c] sm:%s249]
      %297 = vst [vmem:[%s257 + $0x4c] sm:%s249] %v296
      %v298 = vld [vmem:[%s256 + $0x50] sm:%s249]
      %299 = vst [vmem:[%s257 + $0x50] sm:%s249] %v298
      %v300 = vld [vmem:[%s256 + $0x58] sm:%s249]
      %301 = vst [vmem:[%s257 + $0x54] sm:%s249] %v300
      %v302 = vld [vmem:[%s256 + $0x54] sm:%s249]
      %303 = vst [vmem:[%s257 + $0x58] sm:%s249] %v302
      %v304 = vld [vmem:[%s256 + $0x5c] sm:%s249]
      %305 = vst [vmem:[%s257 + $0x5c] sm:%s249] %v304
      %v306 = vld [vmem:[%s256 + $0x60] sm:%s249]
      %307 = vst [vmem:[%s257 + $0x60] sm:%s249] %v306
      %v308 = vld [vmem:[%s256 + $0x68] sm:%s249]
      %309 = vst [vmem:[%s257 + $0x64] sm:%s249] %v308
      %v310 = vld [vmem:[%s256 + $0x64] sm:%s249]
      %311 = vst [vmem:[%s257 + $0x68] sm:%s249] %v310
      %v312 = vld [vmem:[%s256 + $0x6c] sm:%s249]
      %313 = vst [vmem:[%s257 + $0x6c] sm:%s249] %v312
      %v314 = vld [vmem:[%s256 + $0x70] sm:%s249]
      %315 = vst [vmem:[%s257 + $0x70] sm:%s249] %v314
      %v316 = vld [vmem:[%s256 + $0x78] sm:%s249]
      %317 = vst [vmem:[%s257 + $0x74] sm:%s249] %v316
      %v318 = vld [vmem:[%s256 + $0x74] sm:%s249]
      %319 = vst [vmem:[%s257 + $0x78] sm:%s249] %v318
      %v320 = vld [vmem:[%s256 + $0x7c] sm:%s249]
      %321 = vst [vmem:[%s257 + $0x7c] sm:%s249] %v320
      %v322 = vld [vmem:[%s256 + $0x80] sm:%s249]
      %323 = vst [vmem:[%s257 + $0x80] sm:%s249] %v322
      %v324 = vld [vmem:[%s256 + $0x88] sm:%s249]
      %325 = vst [vmem:[%s257 + $0x84] sm:%s249] %v324
      %v326 = vld [vmem:[%s256 + $0x84] sm:%s249]
      %327 = vst [vmem:[%s257 + $0x88] sm:%s249] %v326
      %v328 = vld [vmem:[%s256 + $0x8c] sm:%s249]
      %329 = vst [vmem:[%s257 + $0x8c] sm:%s249] %v328
      %v330 = vld [vmem:[%s256 + $0x90] sm:%s249]
      %331 = vst [vmem:[%s257 + $0x90] sm:%s249] %v330
      %v332 = vld [vmem:[%s256 + $0x98] sm:%s249]
      %333 = vst [vmem:[%s257 + $0x94] sm:%s249] %v332
      %v334 = vld [vmem:[%s256 + $0x94] sm:%s249]
      %335 = vst [vmem:[%s257 + $0x98] sm:%s249] %v334
      %v336 = vld [vmem:[%s256 + $0x9c] sm:%s249]
      %337 = vst [vmem:[%s257 + $0x9c] sm:%s249] %v336
      %v338 = vld [vmem:[%s256 + $0xa0] sm:%s249]
      %339 = vst [vmem:[%s257 + $0xa0] sm:%s249] %v338
      %v340 = vld [vmem:[%s256 + $0xa8] sm:%s249]
      %341 = vst [vmem:[%s257 + $0xa4] sm:%s249] %v340
      %v342 = vld [vmem:[%s256 + $0xa4] sm:%s249]
      %343 = vst [vmem:[%s257 + $0xa8] sm:%s249] %v342
      %v344 = vld [vmem:[%s256 + $0xac] sm:%s249]
      %345 = vst [vmem:[%s257 + $0xac] sm:%s249] %v344
      %v346 = vld [vmem:[%s256 + $0xb0] sm:%s249]
      %347 = vst [vmem:[%s257 + $0xb0] sm:%s249] %v346
      %v348 = vld [vmem:[%s256 + $0xb8] sm:%s249]
      %349 = vst [vmem:[%s257 + $0xb4] sm:%s249] %v348
      %v350 = vld [vmem:[%s256 + $0xb4] sm:%s249]
      %351 = vst [vmem:[%s257 + $0xb8] sm:%s249] %v350
      %v352 = vld [vmem:[%s256 + $0xbc] sm:%s249]
      %353 = vst [vmem:[%s257 + $0xbc] sm:%s249] %v352
      %v354 = vld [vmem:[%s256 + $0xc0] sm:%s249]
      %355 = vst [vmem:[%s257 + $0xc0] sm:%s249] %v354
      %v356 = vld [vmem:[%s256 + $0xc8] sm:%s249]
      %357 = vst [vmem:[%s257 + $0xc4] sm:%s249] %v356
      %v358 = vld [vmem:[%s256 + $0xc4] sm:%s249]
      %359 = vst [vmem:[%s257 + $0xc8] sm:%s249] %v358
      %v360 = vld [vmem:[%s256 + $0xcc] sm:%s249]
      %361 = vst [vmem:[%s257 + $0xcc] sm:%s249] %v360
      %v362 = vld [vmem:[%s256 + $0xd0] sm:%s249]
      %363 = vst [vmem:[%s257 + $0xd0] sm:%s249] %v362
      %v364 = vld [vmem:[%s256 + $0xd8] sm:%s249]
      %365 = vst [vmem:[%s257 + $0xd4] sm:%s249] %v364
      %v366 = vld [vmem:[%s256 + $0xd4] sm:%s249]
      %367 = vst [vmem:[%s257 + $0xd8] sm:%s249] %v366
      %v368 = vld [vmem:[%s256 + $0xdc] sm:%s249]
      %369 = vst [vmem:[%s257 + $0xdc] sm:%s249] %v368
      %v370 = vld [vmem:[%s256 + $0xe0] sm:%s249]
      %371 = vst [vmem:[%s257 + $0xe0] sm:%s249] %v370
      %v372 = vld [vmem:[%s256 + $0xe8] sm:%s249]
      %373 = vst [vmem:[%s257 + $0xe4] sm:%s249] %v372
      %v374 = vld [vmem:[%s256 + $0xe4] sm:%s249]
      %375 = vst [vmem:[%s257 + $0xe8] sm:%s249] %v374
      %v376 = vld [vmem:[%s256 + $0xec] sm:%s249]
      %377 = vst [vmem:[%s257 + $0xec] sm:%s249] %v376
      %v378 = vld [vmem:[%s256 + $0xf0] sm:%s249]
      %379 = vst [vmem:[%s257 + $0xf0] sm:%s249] %v378
      %v380 = vld [vmem:[%s256 + $0xf8] sm:%s249]
      %381 = vst [vmem:[%s257 + $0xf4] sm:%s249] %v380
      %v382 = vld [vmem:[%s256 + $0xf4] sm:%s249]
      %383 = vst [vmem:[%s257 + $0xf8] sm:%s249] %v382
      %v384 = vld [vmem:[%s256 + $0xfc] sm:%s249]
      %385 = vst [vmem:[%s257 + $0xfc] sm:%s249] %v384
    $region123: #{kalman_forward.1} parent=117 // loop_footer
      %s255 = sadd.s32 1, %s251
    $region124: #{kalman_forward.1} parent=117 // loop_footer_branch
      %250 = sbr.rel target = $region120
    $region125: #{kalman_forward.1} parent=117 // loop_exit
      _
  $region118: #{kalman_forward.1} parent=0 // pred_fallthru
    _
  // Predicated region
  $region144: #{kalman_forward.1} parent=0 // pred_check
    _
  $region145: #{kalman_forward.1} parent=0 // pred_check_branch
    %543 = sbr.rel (0) target = $region147
  $region146: #{kalman_forward.1} parent=0 // pred_region
    %544 = vsyncadd %s240, 4096
  $region147: #{kalman_forward.1} parent=0 // pred_fallthru
    _
  %v545 = vld [vmem:[%s0] sm:$0xf]
  %v546 = vld [vmem:[%s0 + $0x4] sm:$0xf]
  %v547 = vld [vmem:[%s0 + $0x8] sm:$0xf]
  %v548 = vld [vmem:[%s0 + $0xc] sm:$0xf]
  %v549 = vld [vmem:[%s2] sm:$0xff]
  %v550 = vld [vmem:[%s2 + $0x8] sm:$0xff]
  %v551 = vld [vmem:[%s2 + $0x10] sm:$0xff]
  %v552 = vld [vmem:[%s2 + $0x18] sm:$0xff]
  %v553 = vld [vmem:[%s2 + $0x20] sm:$0xff]
  %v554 = vld [vmem:[%s2 + $0x28] sm:$0xff]
  %v555 = vld [vmem:[%s2 + $0x30] sm:$0xff]
  %v556 = vld [vmem:[%s2 + $0x38] sm:$0xff]
  %v557 = vld [vmem:[%s3] sm:$0x3]
  %v559 = vlaneseq
  %v560 = vshrl.u32 %v559, 7
  %v561 = vsub.s32 0, %v560
  %v562 = vrot.slane %v557, %v561
  %v563 = vlaneseq
  %v564 = vshrl.u32 %v563, 7
  %v565 = vsub.s32 1, %v564
  %v566 = vrot.slane %v557, %v565
  %v573 = vunpack.c.l.b16 %v545
  %v574 = vunpack.c.l.b16 %v546
  %v575 = vunpack.c.l.b16 %v547
  %v576 = vunpack.c.l.b16 %v548
  %v577 = vpack.c.b16 %v574, %v573
  %v578 = vpack.c.b16 %v576, %v575
  %v587 = vunpack.c.l.b16 %v549
  %v588 = vunpack.c.h.b16 %v549
  %v589 = vunpack.c.l.b16 %v550
  %v590 = vunpack.c.h.b16 %v550
  %v591 = vunpack.c.l.b16 %v551
  %v592 = vunpack.c.h.b16 %v551
  %v593 = vunpack.c.l.b16 %v552
  %v594 = vunpack.c.h.b16 %v552
  %v595 = vunpack.c.l.b16 %v553
  %v596 = vunpack.c.h.b16 %v553
  %v597 = vunpack.c.l.b16 %v554
  %v598 = vunpack.c.h.b16 %v554
  %v599 = vunpack.c.l.b16 %v555
  %v600 = vunpack.c.h.b16 %v555
  %v601 = vunpack.c.l.b16 %v556
  %v602 = vunpack.c.h.b16 %v556
  %v603 = vpack.c.b16 %v589, %v587
  %v604 = vpack.c.b16 %v590, %v588
  %v605 = vpack.c.b16 %v593, %v591
  %v606 = vpack.c.b16 %v594, %v592
  %v607 = vpack.c.b16 %v597, %v595
  %v608 = vpack.c.b16 %v598, %v596
  %v609 = vpack.c.b16 %v601, %v599
  %v610 = vpack.c.b16 %v602, %v600
  %vm619 = vcmask 523264
  %v621 = vsel %vm619, %v577, 0
  %v624 = vsel %vm619, %v578, 0
  %626 = vmatprep.subr.bf16.mxu0 %v604
  %627 = vmatpush1.bf16.msra.mxu0 %v603
  %628 = vmatprep.subr.bf16.mxu0 %v606
  %629 = vmatpush1.bf16.msra.mxu0 %v605
  %630 = vmatprep.subr.bf16.mxu0 %v608
  %631 = vmatpush1.bf16.msra.mxu0 %v607
  %632 = vmatprep.subr.bf16.mxu0 %v610
  %633 = vmatpush1.bf16.msra.mxu0 %v609
  %634 = vmatprep.subr.bf16.mxu0 0
  %635 = vmatpush1.bf16.msra.mxu0 0
  %636 = vmatprep.subr.bf16.mxu0 0
  %637 = vmatpush1.bf16.msra.mxu0 0
  %638 = vmatprep.subr.bf16.mxu0 0
  %639 = vmatpush1.bf16.msra.mxu0 0
  %640 = vmatprep.subr.bf16.mxu0 0
  %641 = vmatpush1.bf16.msra.mxu0 0
  %642 = vmatprep.subr.bf16.mxu0 0
  %643 = vmatpush1.bf16.msra.mxu0 0
  %644 = vmatprep.subr.bf16.mxu0 0
  %645 = vmatpush1.bf16.msra.mxu0 0
  %646 = vmatprep.subr.bf16.mxu0 0
  %647 = vmatpush1.bf16.msra.mxu0 0
  %648 = vmatprep.subr.bf16.mxu0 0
  %649 = vmatpush1.bf16.msra.mxu0 0
  %650 = vmatprep.subr.bf16.mxu0 0
  %651 = vmatpush1.bf16.msra.mxu0 0
  %652 = vmatprep.subr.bf16.mxu0 0
  %653 = vmatpush1.bf16.msra.mxu0 0
  %654 = vmatprep.subr.bf16.mxu0 0
  %655 = vmatpush1.bf16.msra.mxu0 0
  %656 = vmatprep.subr.bf16.mxu0 0
  %657 = vmatpush1.bf16.msra.mxu0 0
  %658 = vmatprep.mubr.bf16.mxu0 0
  %659 = vmatmul.mubr.bf16.gmra.mrb[0].mxu0 %v621
  %v660 = vpop.f32.mrb[0].mxu0
  %v661 = vadd.f32 %v562, %v660
  %v662 = vpop.f32.mrb[0].mxu0
  %v663 = vadd.f32 %v566, %v662
  %v664 = vpop.f32.mrb[0].mxu0
  %v665 = vadd.f32 %v562, %v664
  %v666 = vpop.f32.mrb[0].mxu0
  %v667 = vadd.f32 %v566, %v666
  %668 = vmatprep.mubr.bf16.mxu0 0
  %669 = vmatmul.mubr.bf16.gmra.mrb[0].mxu0 %v624
  %v670 = vpop.f32.mrb[0].mxu0
  %v671 = vadd.f32 %v562, %v670
  %v672 = vpop.f32.mrb[0].mxu0
  %v673 = vadd.f32 %v566, %v672
  %v674 = vpop.f32.mrb[0].mxu0
  %v675 = vadd.f32 %v562, %v674
  %v676 = vpop.f32.mrb[0].mxu0
  %v677 = vadd.f32 %v566, %v676
  %678 = vdwg.mxu0
  %vm679 = vcmp.gt.f32.partialorder %v661, 0.0
  %vm680 = vcmp.gt.f32.partialorder %v663, 0.0
  %vm681 = vcmp.gt.f32.partialorder %v665, 0.0
  %vm682 = vcmp.gt.f32.partialorder %v667, 0.0
  %vm683 = vcmp.gt.f32.partialorder %v671, 0.0
  %vm684 = vcmp.gt.f32.partialorder %v673, 0.0
  %vm685 = vcmp.gt.f32.partialorder %v675, 0.0
  %vm686 = vcmp.gt.f32.partialorder %v677, 0.0
  %v687 = vmul.f32 %v661, 0.01
  %v688 = vmul.f32 %v663, 0.01
  %v689 = vmul.f32 %v665, 0.01
  %v690 = vmul.f32 %v667, 0.01
  %v691 = vmul.f32 %v671, 0.01
  %v692 = vmul.f32 %v673, 0.01
  %v693 = vmul.f32 %v675, 0.01
  %v694 = vmul.f32 %v677, 0.01
  %v695 = vsel %vm679, %v661, %v687
  %v696 = vsel %vm680, %v663, %v688
  %v697 = vsel %vm681, %v665, %v689
  %v698 = vsel %vm682, %v667, %v690
  %v699 = vsel %vm683, %v671, %v691
  %v700 = vsel %vm684, %v673, %v692
  %v701 = vsel %vm685, %v675, %v693
  %v702 = vsel %vm686, %v677, %v694
  %v703 = vpack.c.bf16 %v697, %v695
  %v704 = vpack.c.bf16 %v698, %v696
  %v705 = vpack.c.bf16 %v701, %v699
  %v706 = vpack.c.bf16 %v702, %v700
  %v707 = vld [vmem:[%s4] sm:$0xff]
  %v708 = vld [vmem:[%s4 + $0x8] sm:$0xff]
  %v709 = vld [vmem:[%s4 + $0x10] sm:$0xff]
  %v710 = vld [vmem:[%s4 + $0x18] sm:$0xff]
  %v711 = vld [vmem:[%s4 + $0x20] sm:$0xff]
  %v712 = vld [vmem:[%s4 + $0x28] sm:$0xff]
  %v713 = vld [vmem:[%s4 + $0x30] sm:$0xff]
  %v714 = vld [vmem:[%s4 + $0x38] sm:$0xff]
  %v715 = vld [vmem:[%s4 + $0x40] sm:$0xff]
  %v716 = vld [vmem:[%s4 + $0x48] sm:$0xff]
  %v717 = vld [vmem:[%s4 + $0x50] sm:$0xff]
  %v718 = vld [vmem:[%s4 + $0x58] sm:$0xff]
  %v719 = vld [vmem:[%s4 + $0x60] sm:$0xff]
  %v720 = vld [vmem:[%s4 + $0x68] sm:$0xff]
  %v721 = vld [vmem:[%s4 + $0x70] sm:$0xff]
  %v722 = vld [vmem:[%s4 + $0x78] sm:$0xff]
  %v723 = vld [vmem:[%s4 + $0x80] sm:$0xff]
  %v724 = vld [vmem:[%s4 + $0x88] sm:$0xff]
  %v725 = vld [vmem:[%s4 + $0x90] sm:$0xff]
  %v726 = vld [vmem:[%s4 + $0x98] sm:$0xff]
  %v727 = vld [vmem:[%s4 + $0xa0] sm:$0xff]
  %v728 = vld [vmem:[%s4 + $0xa8] sm:$0xff]
  %v729 = vld [vmem:[%s4 + $0xb0] sm:$0xff]
  %v730 = vld [vmem:[%s4 + $0xb8] sm:$0xff]
  %v731 = vld [vmem:[%s4 + $0xc0] sm:$0xff]
  %v732 = vld [vmem:[%s4 + $0xc8] sm:$0xff]
  %v733 = vld [vmem:[%s4 + $0xd0] sm:$0xff]
  %v734 = vld [vmem:[%s4 + $0xd8] sm:$0xff]
  %v735 = vld [vmem:[%s4 + $0xe0] sm:$0xff]
  %v736 = vld [vmem:[%s4 + $0xe8] sm:$0xff]
  %v737 = vld [vmem:[%s4 + $0xf0] sm:$0xff]
  %v738 = vld [vmem:[%s4 + $0xf8] sm:$0xff]
  %v739 = vld [vmem:[%s4 + $0x100] sm:$0xff]
  %v740 = vld [vmem:[%s4 + $0x108] sm:$0xff]
  %v741 = vld [vmem:[%s4 + $0x110] sm:$0xff]
  %v742 = vld [vmem:[%s4 + $0x118] sm:$0xff]
  %v743 = vld [vmem:[%s4 + $0x120] sm:$0xff]
  %v744 = vld [vmem:[%s4 + $0x128] sm:$0xff]
  %v745 = vld [vmem:[%s4 + $0x130] sm:$0xff]
  %v746 = vld [vmem:[%s4 + $0x138] sm:$0xff]
  %v747 = vld [vmem:[%s4 + $0x140] sm:$0xff]
  %v748 = vld [vmem:[%s4 + $0x148] sm:$0xff]
  %v749 = vld [vmem:[%s4 + $0x150] sm:$0xff]
  %v750 = vld [vmem:[%s4 + $0x158] sm:$0xff]
  %v751 = vld [vmem:[%s4 + $0x160] sm:$0xff]
  %v752 = vld [vmem:[%s4 + $0x168] sm:$0xff]
  %v753 = vld [vmem:[%s4 + $0x170] sm:$0xff]
  %v754 = vld [vmem:[%s4 + $0x178] sm:$0xff]
  %v755 = vld [vmem:[%s4 + $0x180] sm:$0xff]
  %v756 = vld [vmem:[%s4 + $0x188] sm:$0xff]
  %v757 = vld [vmem:[%s4 + $0x190] sm:$0xff]
  %v758 = vld [vmem:[%s4 + $0x198] sm:$0xff]
  %v759 = vld [vmem:[%s4 + $0x1a0] sm:$0xff]
  %v760 = vld [vmem:[%s4 + $0x1a8] sm:$0xff]
  %v761 = vld [vmem:[%s4 + $0x1b0] sm:$0xff]
  %v762 = vld [vmem:[%s4 + $0x1b8] sm:$0xff]
  %v763 = vld [vmem:[%s4 + $0x1c0] sm:$0xff]
  %v764 = vld [vmem:[%s4 + $0x1c8] sm:$0xff]
  %v765 = vld [vmem:[%s4 + $0x1d0] sm:$0xff]
  %v766 = vld [vmem:[%s4 + $0x1d8] sm:$0xff]
  %v767 = vld [vmem:[%s4 + $0x1e0] sm:$0xff]
  %v768 = vld [vmem:[%s4 + $0x1e8] sm:$0xff]
  %v769 = vld [vmem:[%s4 + $0x1f0] sm:$0xff]
  %v770 = vld [vmem:[%s4 + $0x1f8] sm:$0xff]
  %v771 = vld [vmem:[%s5] sm:$0xf]
  %v773 = vlaneseq
  %v774 = vshrl.u32 %v773, 7
  %v775 = vsub.s32 0, %v774
  %v776 = vrot.slane %v771, %v775
  %v777 = vlaneseq
  %v778 = vshrl.u32 %v777, 7
  %v779 = vsub.s32 1, %v778
  %v780 = vrot.slane %v771, %v779
  %v781 = vlaneseq
  %v782 = vshrl.u32 %v781, 7
  %v783 = vsub.s32 2, %v782
  %v784 = vrot.slane %v771, %v783
  %v785 = vlaneseq
  %v786 = vshrl.u32 %v785, 7
  %v787 = vsub.s32 3, %v786
  %v788 = vrot.slane %v771, %v787
  %v857 = vunpack.c.l.b16 %v707
  %v858 = vunpack.c.h.b16 %v707
  %v859 = vunpack.c.l.b16 %v708
  %v860 = vunpack.c.h.b16 %v708
  %v861 = vunpack.c.l.b16 %v709
  %v862 = vunpack.c.h.b16 %v709
  %v863 = vunpack.c.l.b16 %v710
  %v864 = vunpack.c.h.b16 %v710
  %v865 = vunpack.c.l.b16 %v711
  %v866 = vunpack.c.h.b16 %v711
  %v867 = vunpack.c.l.b16 %v712
  %v868 = vunpack.c.h.b16 %v712
  %v869 = vunpack.c.l.b16 %v713
  %v870 = vunpack.c.h.b16 %v713
  %v871 = vunpack.c.l.b16 %v714
  %v872 = vunpack.c.h.b16 %v714
  %v873 = vunpack.c.l.b16 %v715
  %v874 = vunpack.c.h.b16 %v715
  %v875 = vunpack.c.l.b16 %v716
  %v876 = vunpack.c.h.b16 %v716
  %v877 = vunpack.c.l.b16 %v717
  %v878 = vunpack.c.h.b16 %v717
  %v879 = vunpack.c.l.b16 %v718
  %v880 = vunpack.c.h.b16 %v718
  %v881 = vunpack.c.l.b16 %v719
  %v882 = vunpack.c.h.b16 %v719
  %v883 = vunpack.c.l.b16 %v720
  %v884 = vunpack.c.h.b16 %v720
  %v885 = vunpack.c.l.b16 %v721
  %v886 = vunpack.c.h.b16 %v721
  %v887 = vunpack.c.l.b16 %v722
  %v888 = vunpack.c.h.b16 %v722
  %v889 = vunpack.c.l.b16 %v723
  %v890 = vunpack.c.h.b16 %v723
  %v891 = vunpack.c.l.b16 %v724
  %v892 = vunpack.c.h.b16 %v724
  %v893 = vunpack.c.l.b16 %v725
  %v894 = vunpack.c.h.b16 %v725
  %v895 = vunpack.c.l.b16 %v726
  %v896 = vunpack.c.h.b16 %v726
  %v897 = vunpack.c.l.b16 %v727
  %v898 = vunpack.c.h.b16 %v727
  %v899 = vunpack.c.l.b16 %v728
  %v900 = vunpack.c.h.b16 %v728
  %v901 = vunpack.c.l.b16 %v729
  %v902 = vunpack.c.h.b16 %v729
  %v903 = vunpack.c.l.b16 %v730
  %v904 = vunpack.c.h.b16 %v730
  %v905 = vunpack.c.l.b16 %v731
  %v906 = vunpack.c.h.b16 %v731
  %v907 = vunpack.c.l.b16 %v732
  %v908 = vunpack.c.h.b16 %v732
  %v909 = vunpack.c.l.b16 %v733
  %v910 = vunpack.c.h.b16 %v733
  %v911 = vunpack.c.l.b16 %v734
  %v912 = vunpack.c.h.b16 %v734
  %v913 = vunpack.c.l.b16 %v735
  %v914 = vunpack.c.h.b16 %v735
  %v915 = vunpack.c.l.b16 %v736
  %v916 = vunpack.c.h.b16 %v736
  %v917 = vunpack.c.l.b16 %v737
  %v918 = vunpack.c.h.b16 %v737
  %v919 = vunpack.c.l.b16 %v738
  %v920 = vunpack.c.h.b16 %v738
  %v921 = vunpack.c.l.b16 %v739
  %v922 = vunpack.c.h.b16 %v739
  %v923 = vunpack.c.l.b16 %v740
  %v924 = vunpack.c.h.b16 %v740
  %v925 = vunpack.c.l.b16 %v741
  %v926 = vunpack.c.h.b16 %v741
  %v927 = vunpack.c.l.b16 %v742
  %v928 = vunpack.c.h.b16 %v742
  %v929 = vunpack.c.l.b16 %v743
  %v930 = vunpack.c.h.b16 %v743
  %v931 = vunpack.c.l.b16 %v744
  %v932 = vunpack.c.h.b16 %v744
  %v933 = vunpack.c.l.b16 %v745
  %v934 = vunpack.c.h.b16 %v745
  %v935 = vunpack.c.l.b16 %v746
  %v936 = vunpack.c.h.b16 %v746
  %v937 = vunpack.c.l.b16 %v747
  %v938 = vunpack.c.h.b16 %v747
  %v939 = vunpack.c.l.b16 %v748
  %v940 = vunpack.c.h.b16 %v748
  %v941 = vunpack.c.l.b16 %v749
  %v942 = vunpack.c.h.b16 %v749
  %v943 = vunpack.c.l.b16 %v750
  %v944 = vunpack.c.h.b16 %v750
  %v945 = vunpack.c.l.b16 %v751
  %v946 = vunpack.c.h.b16 %v751
  %v947 = vunpack.c.l.b16 %v752
  %v948 = vunpack.c.h.b16 %v752
  %v949 = vunpack.c.l.b16 %v753
  %v950 = vunpack.c.h.b16 %v753
  %v951 = vunpack.c.l.b16 %v754
  %v952 = vunpack.c.h.b16 %v754
  %v953 = vunpack.c.l.b16 %v755
  %v954 = vunpack.c.h.b16 %v755
  %v955 = vunpack.c.l.b16 %v756
  %v956 = vunpack.c.h.b16 %v756
  %v957 = vunpack.c.l.b16 %v757
  %v958 = vunpack.c.h.b16 %v757
  %v959 = vunpack.c.l.b16 %v758
  %v960 = vunpack.c.h.b16 %v758
  %v961 = vunpack.c.l.b16 %v759
  %v962 = vunpack.c.h.b16 %v759
  %v963 = vunpack.c.l.b16 %v760
  %v964 = vunpack.c.h.b16 %v760
  %v965 = vunpack.c.l.b16 %v761
  %v966 = vunpack.c.h.b16 %v761
  %v967 = vunpack.c.l.b16 %v762
  %v968 = vunpack.c.h.b16 %v762
  %v969 = vunpack.c.l.b16 %v763
  %v970 = vunpack.c.h.b16 %v763
  %v971 = vunpack.c.l.b16 %v764
  %v972 = vunpack.c.h.b16 %v764
  %v973 = vunpack.c.l.b16 %v765
  %v974 = vunpack.c.h.b16 %v765
  %v975 = vunpack.c.l.b16 %v766
  %v976 = vunpack.c.h.b16 %v766
  %v977 = vunpack.c.l.b16 %v767
  %v978 = vunpack.c.h.b16 %v767
  %v979 = vunpack.c.l.b16 %v768
  %v980 = vunpack.c.h.b16 %v768
  %v981 = vunpack.c.l.b16 %v769
  %v982 = vunpack.c.h.b16 %v769
  %v983 = vunpack.c.l.b16 %v770
  %v984 = vunpack.c.h.b16 %v770
  %v985 = vpack.c.b16 %v861, %v857
  %v986 = vpack.c.b16 %v862, %v858
  %v987 = vpack.c.b16 %v863, %v859
  %v988 = vpack.c.b16 %v864, %v860
  %v989 = vpack.c.b16 %v869, %v865
  %v990 = vpack.c.b16 %v870, %v866
  %v991 = vpack.c.b16 %v871, %v867
  %v992 = vpack.c.b16 %v872, %v868
  %v993 = vpack.c.b16 %v877, %v873
  %v994 = vpack.c.b16 %v878, %v874
  %v995 = vpack.c.b16 %v879, %v875
  %v996 = vpack.c.b16 %v880, %v876
  %v997 = vpack.c.b16 %v885, %v881
  %v998 = vpack.c.b16 %v886, %v882
  %v999 = vpack.c.b16 %v887, %v883
  %v1000 = vpack.c.b16 %v888, %v884
  %v1001 = vpack.c.b16 %v893, %v889
  %v1002 = vpack.c.b16 %v894, %v890
  %v1003 = vpack.c.b16 %v895, %v891
  %v1004 = vpack.c.b16 %v896, %v892
  %v1005 = vpack.c.b16 %v901, %v897
  %v1006 = vpack.c.b16 %v902, %v898
  %v1007 = vpack.c.b16 %v903, %v899
  %v1008 = vpack.c.b16 %v904, %v900
  %v1009 = vpack.c.b16 %v909, %v905
  %v1010 = vpack.c.b16 %v910, %v906
  %v1011 = vpack.c.b16 %v911, %v907
  %v1012 = vpack.c.b16 %v912, %v908
  %v1013 = vpack.c.b16 %v917, %v913
  %v1014 = vpack.c.b16 %v918, %v914
  %v1015 = vpack.c.b16 %v919, %v915
  %v1016 = vpack.c.b16 %v920, %v916
  %v1017 = vpack.c.b16 %v925, %v921
  %v1018 = vpack.c.b16 %v926, %v922
  %v1019 = vpack.c.b16 %v927, %v923
  %v1020 = vpack.c.b16 %v928, %v924
  %v1021 = vpack.c.b16 %v933, %v929
  %v1022 = vpack.c.b16 %v934, %v930
  %v1023 = vpack.c.b16 %v935, %v931
  %v1024 = vpack.c.b16 %v936, %v932
  %v1025 = vpack.c.b16 %v941, %v937
  %v1026 = vpack.c.b16 %v942, %v938
  %v1027 = vpack.c.b16 %v943, %v939
  %v1028 = vpack.c.b16 %v944, %v940
  %v1029 = vpack.c.b16 %v949, %v945
  %v1030 = vpack.c.b16 %v950, %v946
  %v1031 = vpack.c.b16 %v951, %v947
  %v1032 = vpack.c.b16 %v952, %v948
  %v1033 = vpack.c.b16 %v957, %v953
  %v1034 = vpack.c.b16 %v958, %v954
  %v1035 = vpack.c.b16 %v959, %v955
  %v1036 = vpack.c.b16 %v960, %v956
  %v1037 = vpack.c.b16 %v965, %v961
  %v1038 = vpack.c.b16 %v966, %v962
  %v1039 = vpack.c.b16 %v967, %v963
  %v1040 = vpack.c.b16 %v968, %v964
  %v1041 = vpack.c.b16 %v973, %v969
  %v1042 = vpack.c.b16 %v974, %v970
  %v1043 = vpack.c.b16 %v975, %v971
  %v1044 = vpack.c.b16 %v976, %v972
  %v1045 = vpack.c.b16 %v981, %v977
  %v1046 = vpack.c.b16 %v982, %v978
  %v1047 = vpack.c.b16 %v983, %v979
  %v1048 = vpack.c.b16 %v984, %v980
  %1113 = vmatprep.subr.bf16.mxu0 %v986
  %1114 = vmatpush1.bf16.msra.mxu0 %v985
  %1115 = vmatprep.subr.bf16.mxu0 %v990
  %1116 = vmatpush1.bf16.msra.mxu0 %v989
  %1117 = vmatprep.subr.bf16.mxu0 %v994
  %1118 = vmatpush1.bf16.msra.mxu0 %v993
  %1119 = vmatprep.subr.bf16.mxu0 %v998
  %1120 = vmatpush1.bf16.msra.mxu0 %v997
  %1121 = vmatprep.subr.bf16.mxu0 %v1002
  %1122 = vmatpush1.bf16.msra.mxu0 %v1001
  %1123 = vmatprep.subr.bf16.mxu0 %v1006
  %1124 = vmatpush1.bf16.msra.mxu0 %v1005
  %1125 = vmatprep.subr.bf16.mxu0 %v1010
  %1126 = vmatpush1.bf16.msra.mxu0 %v1009
  %1127 = vmatprep.subr.bf16.mxu0 %v1014
  %1128 = vmatpush1.bf16.msra.mxu0 %v1013
  %1129 = vmatprep.subr.bf16.mxu0 %v1018
  %1130 = vmatpush1.bf16.msra.mxu0 %v1017
  %1131 = vmatprep.subr.bf16.mxu0 %v1022
  %1132 = vmatpush1.bf16.msra.mxu0 %v1021
  %1133 = vmatprep.subr.bf16.mxu0 %v1026
  %1134 = vmatpush1.bf16.msra.mxu0 %v1025
  %1135 = vmatprep.subr.bf16.mxu0 %v1030
  %1136 = vmatpush1.bf16.msra.mxu0 %v1029
  %1137 = vmatprep.subr.bf16.mxu0 %v1034
  %1138 = vmatpush1.bf16.msra.mxu0 %v1033
  %1139 = vmatprep.subr.bf16.mxu0 %v1038
  %1140 = vmatpush1.bf16.msra.mxu0 %v1037
  %1141 = vmatprep.subr.bf16.mxu0 %v1042
  %1142 = vmatpush1.bf16.msra.mxu0 %v1041
  %1143 = vmatprep.subr.bf16.mxu0 %v1046
  %1144 = vmatpush1.bf16.msra.mxu0 %v1045
  %1145 = vmatprep.mubr.bf16.mxu0 %v704
  %1146 = vmatmul.mubr.bf16.gmra.mrb[0].mxu0 %v703
  %v1147 = vpop.f32.mrb[0].mxu0
  %v1148 = vadd.f32 %v776, %v1147
  %v1149 = vpop.f32.mrb[0].mxu0
  %v1150 = vadd.f32 %v780, %v1149
  %v1151 = vpop.f32.mrb[0].mxu0
  %v1152 = vadd.f32 %v776, %v1151
  %v1153 = vpop.f32.mrb[0].mxu0
  %v1154 = vadd.f32 %v780, %v1153
  %1155 = vmatprep.mubr.bf16.mxu0 %v706
  %1156 = vmatmul.mubr.bf16.gmra.mrb[0].mxu0 %v705
  %v1157 = vpop.f32.mrb[0].mxu0
  %v1158 = vadd.f32 %v776, %v1157
  %v1159 = vpop.f32.mrb[0].mxu0
  %v1160 = vadd.f32 %v780, %v1159
  %v1161 = vpop.f32.mrb[0].mxu0
  %v1162 = vadd.f32 %v776, %v1161
  %v1163 = vpop.f32.mrb[0].mxu0
  %v1164 = vadd.f32 %v780, %v1163
  %1165 = vdwg.mxu0
  %1166 = vmatprep.subr.bf16.mxu0 %v988
  %1167 = vmatpush1.bf16.msra.mxu0 %v987
  %1168 = vmatprep.subr.bf16.mxu0 %v992
  %1169 = vmatpush1.bf16.msra.mxu0 %v991
  %1170 = vmatprep.subr.bf16.mxu0 %v996
  %1171 = vmatpush1.bf16.msra.mxu0 %v995
  %1172 = vmatprep.subr.bf16.mxu0 %v1000
  %1173 = vmatpush1.bf16.msra.mxu0 %v999
  %1174 = vmatprep.subr.bf16.mxu0 %v1004
  %1175 = vmatpush1.bf16.msra.mxu0 %v1003
  %1176 = vmatprep.subr.bf16.mxu0 %v1008
  %1177 = vmatpush1.bf16.msra.mxu0 %v1007
  %1178 = vmatprep.subr.bf16.mxu0 %v1012
  %1179 = vmatpush1.bf16.msra.mxu0 %v1011
  %1180 = vmatprep.subr.bf16.mxu0 %v1016
  %1181 = vmatpush1.bf16.msra.mxu0 %v1015
  %1182 = vmatprep.subr.bf16.mxu0 %v1020
  %1183 = vmatpush1.bf16.msra.mxu0 %v1019
  %1184 = vmatprep.subr.bf16.mxu0 %v1024
  %1185 = vmatpush1.bf16.msra.mxu0 %v1023
  %1186 = vmatprep.subr.bf16.mxu0 %v1028
  %1187 = vmatpush1.bf16.msra.mxu0 %v1027
  %1188 = vmatprep.subr.bf16.mxu0 %v1032
  %1189 = vmatpush1.bf16.msra.mxu0 %v1031
  %1190 = vmatprep.subr.bf16.mxu0 %v1036
  %1191 = vmatpush1.bf16.msra.mxu0 %v1035
  %1192 = vmatprep.subr.bf16.mxu0 %v1040
  %1193 = vmatpush1.bf16.msra.mxu0 %v1039
  %1194 = vmatprep.subr.bf16.mxu0 %v1044
  %1195 = vmatpush1.bf16.msra.mxu0 %v1043
  %1196 = vmatprep.subr.bf16.mxu0 %v1048
  %1197 = vmatpush1.bf16.msra.mxu0 %v1047
  %1198 = vmatprep.mubr.bf16.mxu0 %v704
  %1199 = vmatmul.mubr.bf16.gmra.mrb[0].mxu0 %v703
  %v1200 = vpop.f32.mrb[0].mxu0
  %v1201 = vadd.f32 %v784, %v1200
  %v1202 = vpop.f32.mrb[0].mxu0
  %v1203 = vadd.f32 %v788, %v1202
  %v1204 = vpop.f32.mrb[0].mxu0
  %v1205 = vadd.f32 %v784, %v1204
  %v1206 = vpop.f32.mrb[0].mxu0
  %v1207 = vadd.f32 %v788, %v1206
  %1208 = vmatprep.mubr.bf16.mxu0 %v706
  %1209 = vmatmul.mubr.bf16.gmra.mrb[0].mxu0 %v705
  %v1210 = vpop.f32.mrb[0].mxu0
  %v1211 = vadd.f32 %v784, %v1210
  %v1212 = vpop.f32.mrb[0].mxu0
  %v1213 = vadd.f32 %v788, %v1212
  %v1214 = vpop.f32.mrb[0].mxu0
  %v1215 = vadd.f32 %v784, %v1214
  %v1216 = vpop.f32.mrb[0].mxu0
  %v1217 = vadd.f32 %v788, %v1216
  %1218 = vdwg.mxu0
  %vm1219 = vcmp.gt.f32.partialorder %v1148, 0.0
  %vm1220 = vcmp.gt.f32.partialorder %v1150, 0.0
  %vm1221 = vcmp.gt.f32.partialorder %v1201, 0.0
  %vm1222 = vcmp.gt.f32.partialorder %v1203, 0.0
  %vm1223 = vcmp.gt.f32.partialorder %v1152, 0.0
  %vm1224 = vcmp.gt.f32.partialorder %v1154, 0.0
  %vm1225 = vcmp.gt.f32.partialorder %v1205, 0.0
  %vm1226 = vcmp.gt.f32.partialorder %v1207, 0.0
  %vm1227 = vcmp.gt.f32.partialorder %v1158, 0.0
  %vm1228 = vcmp.gt.f32.partialorder %v1160, 0.0
  %vm1229 = vcmp.gt.f32.partialorder %v1211, 0.0
  %vm1230 = vcmp.gt.f32.partialorder %v1213, 0.0
  %vm1231 = vcmp.gt.f32.partialorder %v1162, 0.0
  %vm1232 = vcmp.gt.f32.partialorder %v1164, 0.0
  %vm1233 = vcmp.gt.f32.partialorder %v1215, 0.0
  %vm1234 = vcmp.gt.f32.partialorder %v1217, 0.0
  %v1235 = vmul.f32 %v1148, 0.01
  %v1236 = vmul.f32 %v1150, 0.01
  %v1237 = vmul.f32 %v1201, 0.01
  %v1238 = vmul.f32 %v1203, 0.01
  %v1239 = vmul.f32 %v1152, 0.01
  %v1240 = vmul.f32 %v1154, 0.01
  %v1241 = vmul.f32 %v1205, 0.01
  %v1242 = vmul.f32 %v1207, 0.01
  %v1243 = vmul.f32 %v1158, 0.01
  %v1244 = vmul.f32 %v1160, 0.01
  %v1245 = vmul.f32 %v1211, 0.01
  %v1246 = vmul.f32 %v1213, 0.01
  %v1247 = vmul.f32 %v1162, 0.01
  %v1248 = vmul.f32 %v1164, 0.01
  %v1249 = vmul.f32 %v1215, 0.01
  %v1250 = vmul.f32 %v1217, 0.01
  %v1251 = vsel %vm1219, %v1148, %v1235
  %v1252 = vsel %vm1220, %v1150, %v1236
  %v1253 = vsel %vm1221, %v1201, %v1237
  %v1254 = vsel %vm1222, %v1203, %v1238
  %v1255 = vsel %vm1223, %v1152, %v1239
  %v1256 = vsel %vm1224, %v1154, %v1240
  %v1257 = vsel %vm1225, %v1205, %v1241
  %v1258 = vsel %vm1226, %v1207, %v1242
  %v1259 = vsel %vm1227, %v1158, %v1243
  %v1260 = vsel %vm1228, %v1160, %v1244
  %v1261 = vsel %vm1229, %v1211, %v1245
  %v1262 = vsel %vm1230, %v1213, %v1246
  %v1263 = vsel %vm1231, %v1162, %v1247
  %v1264 = vsel %vm1232, %v1164, %v1248
  %v1265 = vsel %vm1233, %v1215, %v1249
  %v1266 = vsel %vm1234, %v1217, %v1250
  %v1267 = vpack.c.bf16 %v1255, %v1251
  %v1268 = vpack.c.bf16 %v1256, %v1252
  %v1269 = vpack.c.bf16 %v1257, %v1253
  %v1270 = vpack.c.bf16 %v1258, %v1254
  %v1271 = vpack.c.bf16 %v1263, %v1259
  %v1272 = vpack.c.bf16 %v1264, %v1260
  %v1273 = vpack.c.bf16 %v1265, %v1261
  %v1274 = vpack.c.bf16 %v1266, %v1262
  %v1275 = vld [vmem:[%s6] sm:$0xf]
  %v1276 = vld [vmem:[%s6 + $0x4] sm:$0xf]
  %v1277 = vld [vmem:[%s6 + $0x8] sm:$0xf]
  %v1278 = vld [vmem:[%s6 + $0xc] sm:$0xf]
  %v1279 = vld [vmem:[%s6 + $0x10] sm:$0xf]
  %v1280 = vld [vmem:[%s6 + $0x14] sm:$0xf]
  %v1281 = vld [vmem:[%s6 + $0x18] sm:$0xf]
  %v1282 = vld [vmem:[%s6 + $0x1c] sm:$0xf]
  %v1283 = vld [vmem:[%s6 + $0x20] sm:$0xf]
  %v1284 = vld [vmem:[%s6 + $0x24] sm:$0xf]
  %v1285 = vld [vmem:[%s6 + $0x28] sm:$0xf]
  %v1286 = vld [vmem:[%s6 + $0x2c] sm:$0xf]
  %v1287 = vld [vmem:[%s6 + $0x30] sm:$0xf]
  %v1288 = vld [vmem:[%s6 + $0x34] sm:$0xf]
  %v1289 = vld [vmem:[%s6 + $0x38] sm:$0xf]
  %v1290 = vld [vmem:[%s6 + $0x3c] sm:$0xf]
  %v1291 = vld [vmem:[%s6 + $0x40] sm:$0xf]
  %v1292 = vld [vmem:[%s6 + $0x44] sm:$0xf]
  %v1293 = vld [vmem:[%s6 + $0x48] sm:$0xf]
  %v1294 = vld [vmem:[%s6 + $0x4c] sm:$0xf]
  %v1295 = vld [vmem:[%s6 + $0x50] sm:$0xf]
  %v1296 = vld [vmem:[%s6 + $0x54] sm:$0xf]
  %v1297 = vld [vmem:[%s6 + $0x58] sm:$0xf]
  %v1298 = vld [vmem:[%s6 + $0x5c] sm:$0xf]
  %v1299 = vld [vmem:[%s6 + $0x60] sm:$0xf]
  %v1300 = vld [vmem:[%s6 + $0x64] sm:$0xf]
  %v1301 = vld [vmem:[%s6 + $0x68] sm:$0xf]
  %v1302 = vld [vmem:[%s6 + $0x6c] sm:$0xf]
  %v1303 = vld [vmem:[%s6 + $0x70] sm:$0xf]
  %v1304 = vld [vmem:[%s6 + $0x74] sm:$0xf]
  %v1305 = vld [vmem:[%s6 + $0x78] sm:$0xf]
  %v1306 = vld [vmem:[%s6 + $0x7c] sm:$0xf]
  %v1307 = vld [vmem:[%s6 + $0x80] sm:$0xf]
  %v1308 = vld [vmem:[%s6 + $0x84] sm:$0xf]
  %v1309 = vld [vmem:[%s6 + $0x88] sm:$0xf]
  %v1310 = vld [vmem:[%s6 + $0x8c] sm:$0xf]
  %v1311 = vld [vmem:[%s6 + $0x90] sm:$0xf]
  %v1312 = vld [vmem:[%s6 + $0x94] sm:$0xf]
  %v1313 = vld [vmem:[%s6 + $0x98] sm:$0xf]
  %v1314 = vld [vmem:[%s6 + $0x9c] sm:$0xf]
  %v1315 = vld [vmem:[%s6 + $0xa0] sm:$0xf]
  %v1316 = vld [vmem:[%s6 + $0xa4] sm:$0xf]
  %v1317 = vld [vmem:[%s6 + $0xa8] sm:$0xf]
  %v1318 = vld [vmem:[%s6 + $0xac] sm:$0xf]
  %v1319 = vld [vmem:[%s6 + $0xb0] sm:$0xf]
  %v1320 = vld [vmem:[%s6 + $0xb4] sm:$0xf]
  %v1321 = vld [vmem:[%s6 + $0xb8] sm:$0xf]
  %v1322 = vld [vmem:[%s6 + $0xbc] sm:$0xf]
  %v1323 = vld [vmem:[%s6 + $0xc0] sm:$0xf]
  %v1324 = vld [vmem:[%s6 + $0xc4] sm:$0xf]
  %v1325 = vld [vmem:[%s6 + $0xc8] sm:$0xf]
  %v1326 = vld [vmem:[%s6 + $0xcc] sm:$0xf]
  %v1327 = vld [vmem:[%s6 + $0xd0] sm:$0xf]
  %v1328 = vld [vmem:[%s6 + $0xd4] sm:$0xf]
  %v1329 = vld [vmem:[%s6 + $0xd8] sm:$0xf]
  %v1330 = vld [vmem:[%s6 + $0xdc] sm:$0xf]
  %v1331 = vld [vmem:[%s6 + $0xe0] sm:$0xf]
  %v1332 = vld [vmem:[%s6 + $0xe4] sm:$0xf]
  %v1333 = vld [vmem:[%s6 + $0xe8] sm:$0xf]
  %v1334 = vld [vmem:[%s6 + $0xec] sm:$0xf]
  %v1335 = vld [vmem:[%s6 + $0xf0] sm:$0xf]
  %v1336 = vld [vmem:[%s6 + $0xf4] sm:$0xf]
  %v1337 = vld [vmem:[%s6 + $0xf8] sm:$0xf]
  %v1338 = vld [vmem:[%s6 + $0xfc] sm:$0xf]
  %v1339 = vld [vmem:[%s7] sm:$0x1]
  %v1341 = vlaneseq
  %v1342 = vshrl.u32 %v1341, 7
  %v1343 = vsub.s32 0, %v1342
  %v1344 = vrot.slane %v1339, %v1343
  %v1410 = vunpack.c.l.b16 %v1275
  %v1411 = vunpack.c.l.b16 %v1276
  %v1412 = vunpack.c.l.b16 %v1277
  %v1413 = vunpack.c.l.b16 %v1278
  %v1414 = vunpack.c.l.b16 %v1279
  %v1415 = vunpack.c.l.b16 %v1280
  %v1416 = vunpack.c.l.b16 %v1281
  %v1417 = vunpack.c.l.b16 %v1282
  %v1418 = vunpack.c.l.b16 %v1283
  %v1419 = vunpack.c.l.b16 %v1284
  %v1420 = vunpack.c.l.b16 %v1285
  %v1421 = vunpack.c.l.b16 %v1286
  %v1422 = vunpack.c.l.b16 %v1287
  %v1423 = vunpack.c.l.b16 %v1288
  %v1424 = vunpack.c.l.b16 %v1289
  %v1425 = vunpack.c.l.b16 %v1290
  %v1426 = vunpack.c.l.b16 %v1291
  %v1427 = vunpack.c.l.b16 %v1292
  %v1428 = vunpack.c.l.b16 %v1293
  %v1429 = vunpack.c.l.b16 %v1294
  %v1430 = vunpack.c.l.b16 %v1295
  %v1431 = vunpack.c.l.b16 %v1296
  %v1432 = vunpack.c.l.b16 %v1297
  %v1433 = vunpack.c.l.b16 %v1298
  %v1434 = vunpack.c.l.b16 %v1299
  %v1435 = vunpack.c.l.b16 %v1300
  %v1436 = vunpack.c.l.b16 %v1301
  %v1437 = vunpack.c.l.b16 %v1302
  %v1438 = vunpack.c.l.b16 %v1303
  %v1439 = vunpack.c.l.b16 %v1304
  %v1440 = vunpack.c.l.b16 %v1305
  %v1441 = vunpack.c.l.b16 %v1306
  %v1442 = vunpack.c.l.b16 %v1307
  %v1443 = vunpack.c.l.b16 %v1308
  %v1444 = vunpack.c.l.b16 %v1309
  %v1445 = vunpack.c.l.b16 %v1310
  %v1446 = vunpack.c.l.b16 %v1311
  %v1447 = vunpack.c.l.b16 %v1312
  %v1448 = vunpack.c.l.b16 %v1313
  %v1449 = vunpack.c.l.b16 %v1314
  %v1450 = vunpack.c.l.b16 %v1315
  %v1451 = vunpack.c.l.b16 %v1316
  %v1452 = vunpack.c.l.b16 %v1317
  %v1453 = vunpack.c.l.b16 %v1318
  %v1454 = vunpack.c.l.b16 %v1319
  %v1455 = vunpack.c.l.b16 %v1320
  %v1456 = vunpack.c.l.b16 %v1321
  %v1457 = vunpack.c.l.b16 %v1322
  %v1458 = vunpack.c.l.b16 %v1323
  %v1459 = vunpack.c.l.b16 %v1324
  %v1460 = vunpack.c.l.b16 %v1325
  %v1461 = vunpack.c.l.b16 %v1326
  %v1462 = vunpack.c.l.b16 %v1327
  %v1463 = vunpack.c.l.b16 %v1328
  %v1464 = vunpack.c.l.b16 %v1329
  %v1465 = vunpack.c.l.b16 %v1330
  %v1466 = vunpack.c.l.b16 %v1331
  %v1467 = vunpack.c.l.b16 %v1332
  %v1468 = vunpack.c.l.b16 %v1333
  %v1469 = vunpack.c.l.b16 %v1334
  %v1470 = vunpack.c.l.b16 %v1335
  %v1471 = vunpack.c.l.b16 %v1336
  %v1472 = vunpack.c.l.b16 %v1337
  %v1473 = vunpack.c.l.b16 %v1338
  %v1474 = vpack.c.b16 %v1411, %v1410
  %v1475 = vpack.c.b16 %v1413, %v1412
  %v1476 = vpack.c.b16 %v1415, %v1414
  %v1477 = vpack.c.b16 %v1417, %v1416
  %v1478 = vpack.c.b16 %v1419, %v1418
  %v1479 = vpack.c.b16 %v1421, %v1420
  %v1480 = vpack.c.b16 %v1423, %v1422
  %v1481 = vpack.c.b16 %v1425, %v1424
  %v1482 = vpack.c.b16 %v1427, %v1426
  %v1483 = vpack.c.b16 %v1429, %v1428
  %v1484 = vpack.c.b16 %v1431, %v1430
  %v1485 = vpack.c.b16 %v1433, %v1432
  %v1486 = vpack.c.b16 %v1435, %v1434
  %v1487 = vpack.c.b16 %v1437, %v1436
  %v1488 = vpack.c.b16 %v1439, %v1438
  %v1489 = vpack.c.b16 %v1441, %v1440
  %v1490 = vpack.c.b16 %v1443, %v1442
  %v1491 = vpack.c.b16 %v1445, %v1444
  %v1492 = vpack.c.b16 %v1447, %v1446
  %v1493 = vpack.c.b16 %v1449, %v1448
  %v1494 = vpack.c.b16 %v1451, %v1450
  %v1495 = vpack.c.b16 %v1453, %v1452
  %v1496 = vpack.c.b16 %v1455, %v1454
  %v1497 = vpack.c.b16 %v1457, %v1456
  %v1498 = vpack.c.b16 %v1459, %v1458
  %v1499 = vpack.c.b16 %v1461, %v1460
  %v1500 = vpack.c.b16 %v1463, %v1462
  %v1501 = vpack.c.b16 %v1465, %v1464
  %v1502 = vpack.c.b16 %v1467, %v1466
  %v1503 = vpack.c.b16 %v1469, %v1468
  %v1504 = vpack.c.b16 %v1471, %v1470
  %v1505 = vpack.c.b16 %v1473, %v1472
  %1538 = vmatprep.subr.bf16.mxu0 0
  %1539 = vmatpush1.bf16.msra.mxu0 %v1474
  %1540 = vmatprep.subr.bf16.mxu0 0
  %1541 = vmatpush1.bf16.msra.mxu0 %v1475
  %1542 = vmatprep.subr.bf16.mxu0 0
  %1543 = vmatpush1.bf16.msra.mxu0 %v1476
  %1544 = vmatprep.subr.bf16.mxu0 0
  %1545 = vmatpush1.bf16.msra.mxu0 %v1477
  %1546 = vmatprep.subr.bf16.mxu0 0
  %1547 = vmatpush1.bf16.msra.mxu0 %v1478
  %1548 = vmatprep.subr.bf16.mxu0 0
  %1549 = vmatpush1.bf16.msra.mxu0 %v1479
  %1550 = vmatprep.subr.bf16.mxu0 0
  %1551 = vmatpush1.bf16.msra.mxu0 %v1480
  %1552 = vmatprep.subr.bf16.mxu0 0
  %1553 = vmatpush1.bf16.msra.mxu0 %v1481
  %1554 = vmatprep.subr.bf16.mxu0 0
  %1555 = vmatpush1.bf16.msra.mxu0 %v1482
  %1556 = vmatprep.subr.bf16.mxu0 0
  %1557 = vmatpush1.bf16.msra.mxu0 %v1483
  %1558 = vmatprep.subr.bf16.mxu0 0
  %1559 = vmatpush1.bf16.msra.mxu0 %v1484
  %1560 = vmatprep.subr.bf16.mxu0 0
  %1561 = vmatpush1.bf16.msra.mxu0 %v1485
  %1562 = vmatprep.subr.bf16.mxu0 0
  %1563 = vmatpush1.bf16.msra.mxu0 %v1486
  %1564 = vmatprep.subr.bf16.mxu0 0
  %1565 = vmatpush1.bf16.msra.mxu0 %v1487
  %1566 = vmatprep.subr.bf16.mxu0 0
  %1567 = vmatpush1.bf16.msra.mxu0 %v1488
  %1568 = vmatprep.subr.bf16.mxu0 0
  %1569 = vmatpush1.bf16.msra.mxu0 %v1489
  %1570 = vmatprep.mubr.bf16.mxu0 %v1268
  %1571 = vmatmul.mubr.bf16.gmra.mrb[0].mxu0 %v1267
  %v1572 = vpop.f32.mrb[0].mxu0
  %v1573 = vadd.f32 %v1344, %v1572
  %v1574 = vpop.f32.mrb[0].mxu0
  %v1575 = vpop.f32.mrb[0].mxu0
  %v1576 = vadd.f32 %v1344, %v1575
  %v1577 = vpop.f32.mrb[0].mxu0
  %1578 = vmatprep.mubr.bf16.mxu0 %v1272
  %1579 = vmatmul.mubr.bf16.gmra.mrb[0].mxu0 %v1271
  %v1580 = vpop.f32.mrb[0].mxu0
  %v1581 = vadd.f32 %v1344, %v1580
  %v1582 = vpop.f32.mrb[0].mxu0
  %v1583 = vpop.f32.mrb[0].mxu0
  %v1584 = vadd.f32 %v1344, %v1583
  %v1585 = vpop.f32.mrb[0].mxu0
  %1586 = vdwg.mxu0
  %1587 = vmatprep.subr.bf16.mxu0 0
  %1588 = vmatpush1.bf16.msra.mxu0 %v1490
  %1589 = vmatprep.subr.bf16.mxu0 0
  %1590 = vmatpush1.bf16.msra.mxu0 %v1491
  %1591 = vmatprep.subr.bf16.mxu0 0
  %1592 = vmatpush1.bf16.msra.mxu0 %v1492
  %1593 = vmatprep.subr.bf16.mxu0 0
  %1594 = vmatpush1.bf16.msra.mxu0 %v1493
  %1595 = vmatprep.subr.bf16.mxu0 0
  %1596 = vmatpush1.bf16.msra.mxu0 %v1494
  %1597 = vmatprep.subr.bf16.mxu0 0
  %1598 = vmatpush1.bf16.msra.mxu0 %v1495
  %1599 = vmatprep.subr.bf16.mxu0 0
  %1600 = vmatpush1.bf16.msra.mxu0 %v1496
  %1601 = vmatprep.subr.bf16.mxu0 0
  %1602 = vmatpush1.bf16.msra.mxu0 %v1497
  %1603 = vmatprep.subr.bf16.mxu0 0
  %1604 = vmatpush1.bf16.msra.mxu0 %v1498
  %1605 = vmatprep.subr.bf16.mxu0 0
  %1606 = vmatpush1.bf16.msra.mxu0 %v1499
  %1607 = vmatprep.subr.bf16.mxu0 0
  %1608 = vmatpush1.bf16.msra.mxu0 %v1500
  %1609 = vmatprep.subr.bf16.mxu0 0
  %1610 = vmatpush1.bf16.msra.mxu0 %v1501
  %1611 = vmatprep.subr.bf16.mxu0 0
  %1612 = vmatpush1.bf16.msra.mxu0 %v1502
  %1613 = vmatprep.subr.bf16.mxu0 0
  %1614 = vmatpush1.bf16.msra.mxu0 %v1503
  %1615 = vmatprep.subr.bf16.mxu0 0
  %1616 = vmatpush1.bf16.msra.mxu0 %v1504
  %1617 = vmatprep.subr.bf16.mxu0 0
  %1618 = vmatpush1.bf16.msra.mxu0 %v1505
  %1619 = vmatprep.mubr.bf16.mxu0 %v1270
  %1620 = vmatmul.mubr.bf16.gmra.mrb[0].mxu0 %v1269
  %v1621 = vpop.f32.mrb[0].mxu0
  %v1622 = vadd.f32 %v1573, %v1621
  %v1623 = vpop.f32.mrb[0].mxu0
  %v1624 = vpop.f32.mrb[0].mxu0
  %v1625 = vadd.f32 %v1576, %v1624
  %v1626 = vpop.f32.mrb[0].mxu0
  %1627 = vmatprep.mubr.bf16.mxu0 %v1274
  %1628 = vmatmul.mubr.bf16.gmra.mrb[0].mxu0 %v1273
  %v1629 = vpop.f32.mrb[0].mxu0
  %v1630 = vadd.f32 %v1581, %v1629
  %v1631 = vpop.f32.mrb[0].mxu0
  %v1632 = vpop.f32.mrb[0].mxu0
  %v1633 = vadd.f32 %v1584, %v1632
  %v1634 = vpop.f32.mrb[0].mxu0
  %1635 = vdwg.mxu0
  %s1636 = smul.u32 4, 16
  %s1637 = smul.u32 %s1636, 2
  %s1638 = sshll.u32 %s1637, 4
  %1639 = dma.done [#allocation4], %s1638
  %s1640 = smul.u32 4, 32
  %s1641 = smul.u32 %s1640, 2
  %s1642 = sshll.u32 %s1641, 4
  %1643 = dma.done %s240, %s1642
  %v1644 = vld [vmem:[%s1] sm:$0x1]
  %v1645 = vld [vmem:[#allocation2] sm:$0xff]
  %v1646 = vld [vmem:[#allocation2 + $0x8] sm:$0xff]
  %v1647 = vld [vmem:[#allocation2 + $0x10] sm:$0xff]
  %v1648 = vld [vmem:[#allocation2 + $0x18] sm:$0xff]
  %v1649 = vld [vmem:[#allocation2 + $0x20] sm:$0xff]
  %v1650 = vld [vmem:[#allocation2 + $0x28] sm:$0xff]
  %v1651 = vld [vmem:[#allocation2 + $0x30] sm:$0xff]
  %v1652 = vld [vmem:[#allocation2 + $0x38] sm:$0xff]
  %v1653 = vld [vmem:[#allocation2 + $0x40] sm:$0xff]
  %v1654 = vld [vmem:[#allocation2 + $0x48] sm:$0xff]
  %v1655 = vld [vmem:[#allocation2 + $0x50] sm:$0xff]
  %v1656 = vld [vmem:[#allocation2 + $0x58] sm:$0xff]
  %v1657 = vld [vmem:[#allocation2 + $0x60] sm:$0xff]
  %v1658 = vld [vmem:[#allocation2 + $0x68] sm:$0xff]
  %v1659 = vld [vmem:[#allocation2 + $0x70] sm:$0xff]
  %v1660 = vld [vmem:[#allocation2 + $0x78] sm:$0xff]
  %v1661 = vld [vmem:[%s9] sm:$0x3]
  %v1663 = vlaneseq
  %v1664 = vshrl.u32 %v1663, 7
  %v1665 = vsub.s32 0, %v1664
  %v1666 = vrot.slane %v1661, %v1665
  %v1667 = vlaneseq
  %v1668 = vshrl.u32 %v1667, 7
  %v1669 = vsub.s32 1, %v1668
  %v1670 = vrot.slane %v1661, %v1669
  %1673 = vmatprep.subr.bf16.mxu0 %v1646
  %1674 = vmatpush1.bf16.msra.mxu0 %v1645
  %1675 = vmatprep.subr.bf16.mxu0 %v1648
  %1676 = vmatpush1.bf16.msra.mxu0 %v1647
  %1677 = vmatprep.subr.bf16.mxu0 %v1650
  %1678 = vmatpush1.bf16.msra.mxu0 %v1649
  %1679 = vmatprep.subr.bf16.mxu0 %v1652
  %1680 = vmatpush1.bf16.msra.mxu0 %v1651
  %1681 = vmatprep.subr.bf16.mxu0 %v1654
  %1682 = vmatpush1.bf16.msra.mxu0 %v1653
  %1683 = vmatprep.subr.bf16.mxu0 %v1656
  %1684 = vmatpush1.bf16.msra.mxu0 %v1655
  %1685 = vmatprep.subr.bf16.mxu0 %v1658
  %1686 = vmatpush1.bf16.msra.mxu0 %v1657
  %1687 = vmatprep.subr.bf16.mxu0 %v1660
  %1688 = vmatpush1.bf16.msra.mxu0 %v1659
  %1689 = vmatprep.subr.bf16.mxu0 0
  %1690 = vmatpush1.bf16.msra.mxu0 0
  %1691 = vmatprep.subr.bf16.mxu0 0
  %1692 = vmatpush1.bf16.msra.mxu0 0
  %1693 = vmatprep.subr.bf16.mxu0 0
  %1694 = vmatpush1.bf16.msra.mxu0 0
  %1695 = vmatprep.subr.bf16.mxu0 0
  %1696 = vmatpush1.bf16.msra.mxu0 0
  %1697 = vmatprep.subr.bf16.mxu0 0
  %1698 = vmatpush1.bf16.msra.mxu0 0
  %1699 = vmatprep.subr.bf16.mxu0 0
  %1700 = vmatpush1.bf16.msra.mxu0 0
  %1701 = vmatprep.subr.bf16.mxu0 0
  %1702 = vmatpush1.bf16.msra.mxu0 0
  %1703 = vmatprep.subr.bf16.mxu0 0
  %1704 = vmatpush1.bf16.msra.mxu0 0
  %1705 = vmatprep.mubr.bf16.mxu0 0
  %1706 = vmatmul.mubr.bf16.gmra.mrb[0].mxu0 %v1644
  %v1707 = vpop.f32.mrb[0].mxu0
  %v1708 = vadd.f32 %v1666, %v1707
  %v1709 = vpop.f32.mrb[0].mxu0
  %v1710 = vadd.f32 %v1670, %v1709
  %v1711 = vpop.f32.mrb[0].mxu0
  %v1712 = vpop.f32.mrb[0].mxu0
  %1713 = vdwg.mxu0
  %vm1714 = vcmp.gt.f32.partialorder %v1708, 0.0
  %vm1715 = vcmp.gt.f32.partialorder %v1710, 0.0
  %v1716 = vmul.f32 %v1708, 0.01
  %v1717 = vmul.f32 %v1710, 0.01
  %v1718 = vsel %vm1714, %v1708, %v1716
  %v1719 = vsel %vm1715, %v1710, %v1717
  %v1720 = vpack.c.bf16 %v1718, %v1718
  %v1721 = vpack.c.bf16 %v1719, %v1719
  %v1722 = vld [vmem:[#allocation3] sm:$0xff]
  %v1723 = vld [vmem:[#allocation3 + $0x8] sm:$0xff]
  %v1724 = vld [vmem:[#allocation3 + $0x10] sm:$0xff]
  %v1725 = vld [vmem:[#allocation3 + $0x18] sm:$0xff]
  %v1726 = vld [vmem:[#allocation3 + $0x20] sm:$0xff]
  %v1727 = vld [vmem:[#allocation3 + $0x28] sm:$0xff]
  %v1728 = vld [vmem:[#allocation3 + $0x30] sm:$0xff]
  %v1729 = vld [vmem:[#allocation3 + $0x38] sm:$0xff]
  %v1730 = vld [vmem:[#allocation3 + $0x40] sm:$0xff]
  %v1731 = vld [vmem:[#allocation3 + $0x48] sm:$0xff]
  %v1732 = vld [vmem:[#allocation3 + $0x50] sm:$0xff]
  %v1733 = vld [vmem:[#allocation3 + $0x58] sm:$0xff]
  %v1734 = vld [vmem:[#allocation3 + $0x60] sm:$0xff]
  %v1735 = vld [vmem:[#allocation3 + $0x68] sm:$0xff]
  %v1736 = vld [vmem:[#allocation3 + $0x70] sm:$0xff]
  %v1737 = vld [vmem:[#allocation3 + $0x78] sm:$0xff]
  %v1738 = vld [vmem:[#allocation3 + $0x80] sm:$0xff]
  %v1739 = vld [vmem:[#allocation3 + $0x88] sm:$0xff]
  %v1740 = vld [vmem:[#allocation3 + $0x90] sm:$0xff]
  %v1741 = vld [vmem:[#allocation3 + $0x98] sm:$0xff]
  %v1742 = vld [vmem:[#allocation3 + $0xa0] sm:$0xff]
  %v1743 = vld [vmem:[#allocation3 + $0xa8] sm:$0xff]
  %v1744 = vld [vmem:[#allocation3 + $0xb0] sm:$0xff]
  %v1745 = vld [vmem:[#allocation3 + $0xb8] sm:$0xff]
  %v1746 = vld [vmem:[#allocation3 + $0xc0] sm:$0xff]
  %v1747 = vld [vmem:[#allocation3 + $0xc8] sm:$0xff]
  %v1748 = vld [vmem:[#allocation3 + $0xd0] sm:$0xff]
  %v1749 = vld [vmem:[#allocation3 + $0xd8] sm:$0xff]
  %v1750 = vld [vmem:[#allocation3 + $0xe0] sm:$0xff]
  %v1751 = vld [vmem:[#allocation3 + $0xe8] sm:$0xff]
  %v1752 = vld [vmem:[#allocation3 + $0xf0] sm:$0xff]
  %v1753 = vld [vmem:[#allocation3 + $0xf8] sm:$0xff]
  %v1754 = vld [vmem:[%s11] sm:$0x3]
  %v1756 = vlaneseq
  %v1757 = vshrl.u32 %v1756, 7
  %v1758 = vsub.s32 0, %v1757
  %v1759 = vrot.slane %v1754, %v1758
  %v1760 = vlaneseq
  %v1761 = vshrl.u32 %v1760, 7
  %v1762 = vsub.s32 1, %v1761
  %v1763 = vrot.slane %v1754, %v1762
  %1766 = vmatprep.subr.bf16.mxu0 %v1723
  %1767 = vmatpush1.bf16.msra.mxu0 %v1722
  %1768 = vmatprep.subr.bf16.mxu0 %v1725
  %1769 = vmatpush1.bf16.msra.mxu0 %v1724
  %1770 = vmatprep.subr.bf16.mxu0 %v1727
  %1771 = vmatpush1.bf16.msra.mxu0 %v1726
  %1772 = vmatprep.subr.bf16.mxu0 %v1729
  %1773 = vmatpush1.bf16.msra.mxu0 %v1728
  %1774 = vmatprep.subr.bf16.mxu0 %v1731
  %1775 = vmatpush1.bf16.msra.mxu0 %v1730
  %1776 = vmatprep.subr.bf16.mxu0 %v1733
  %1777 = vmatpush1.bf16.msra.mxu0 %v1732
  %1778 = vmatprep.subr.bf16.mxu0 %v1735
  %1779 = vmatpush1.bf16.msra.mxu0 %v1734
  %1780 = vmatprep.subr.bf16.mxu0 %v1737
  %1781 = vmatpush1.bf16.msra.mxu0 %v1736
  %1782 = vmatprep.subr.bf16.mxu0 %v1739
  %1783 = vmatpush1.bf16.msra.mxu0 %v1738
  %1784 = vmatprep.subr.bf16.mxu0 %v1741
  %1785 = vmatpush1.bf16.msra.mxu0 %v1740
  %1786 = vmatprep.subr.bf16.mxu0 %v1743
  %1787 = vmatpush1.bf16.msra.mxu0 %v1742
  %1788 = vmatprep.subr.bf16.mxu0 %v1745
  %1789 = vmatpush1.bf16.msra.mxu0 %v1744
  %1790 = vmatprep.subr.bf16.mxu0 %v1747
  %1791 = vmatpush1.bf16.msra.mxu0 %v1746
  %1792 = vmatprep.subr.bf16.mxu0 %v1749
  %1793 = vmatpush1.bf16.msra.mxu0 %v1748
  %1794 = vmatprep.subr.bf16.mxu0 %v1751
  %1795 = vmatpush1.bf16.msra.mxu0 %v1750
  %1796 = vmatprep.subr.bf16.mxu0 %v1753
  %1797 = vmatpush1.bf16.msra.mxu0 %v1752
  %1798 = vmatprep.mubr.bf16.mxu0 %v1721
  %1799 = vmatmul.mubr.bf16.gmra.mrb[0].mxu0 %v1720
  %v1800 = vpop.f32.mrb[0].mxu0
  %v1801 = vadd.f32 %v1759, %v1800
  %v1802 = vpop.f32.mrb[0].mxu0
  %v1803 = vadd.f32 %v1763, %v1802
  %v1804 = vpop.f32.mrb[0].mxu0
  %v1805 = vpop.f32.mrb[0].mxu0
  %1806 = vdwg.mxu0
  %vm1807 = vcmp.gt.f32.partialorder %v1801, 0.0
  %vm1808 = vcmp.gt.f32.partialorder %v1803, 0.0
  %v1809 = vmul.f32 %v1801, 0.01
  %v1810 = vmul.f32 %v1803, 0.01
  %v1811 = vsel %vm1807, %v1801, %v1809
  %v1812 = vsel %vm1808, %v1803, %v1810
  %v1813 = vpack.c.bf16 %v1811, %v1811
  %v1814 = vpack.c.bf16 %v1812, %v1812
  %v1815 = vld [vmem:[%s12] sm:$0xf]
  %v1816 = vld [vmem:[%s12 + $0x4] sm:$0xf]
  %v1817 = vld [vmem:[%s12 + $0x8] sm:$0xf]
  %v1818 = vld [vmem:[%s12 + $0xc] sm:$0xf]
  %v1819 = vld [vmem:[%s12 + $0x10] sm:$0xf]
  %v1820 = vld [vmem:[%s12 + $0x14] sm:$0xf]
  %v1821 = vld [vmem:[%s12 + $0x18] sm:$0xf]
  %v1822 = vld [vmem:[%s12 + $0x1c] sm:$0xf]
  %v1823 = vld [vmem:[%s12 + $0x20] sm:$0xf]
  %v1824 = vld [vmem:[%s12 + $0x24] sm:$0xf]
  %v1825 = vld [vmem:[%s12 + $0x28] sm:$0xf]
  %v1826 = vld [vmem:[%s12 + $0x2c] sm:$0xf]
  %v1827 = vld [vmem:[%s12 + $0x30] sm:$0xf]
  %v1828 = vld [vmem:[%s12 + $0x34] sm:$0xf]
  %v1829 = vld [vmem:[%s12 + $0x38] sm:$0xf]
  %v1830 = vld [vmem:[%s12 + $0x3c] sm:$0xf]
  %v1831 = vld [vmem:[%s12 + $0x40] sm:$0xf]
  %v1832 = vld [vmem:[%s12 + $0x44] sm:$0xf]
  %v1833 = vld [vmem:[%s12 + $0x48] sm:$0xf]
  %v1834 = vld [vmem:[%s12 + $0x4c] sm:$0xf]
  %v1835 = vld [vmem:[%s12 + $0x50] sm:$0xf]
  %v1836 = vld [vmem:[%s12 + $0x54] sm:$0xf]
  %v1837 = vld [vmem:[%s12 + $0x58] sm:$0xf]
  %v1838 = vld [vmem:[%s12 + $0x5c] sm:$0xf]
  %v1839 = vld [vmem:[%s12 + $0x60] sm:$0xf]
  %v1840 = vld [vmem:[%s12 + $0x64] sm:$0xf]
  %v1841 = vld [vmem:[%s12 + $0x68] sm:$0xf]
  %v1842 = vld [vmem:[%s12 + $0x6c] sm:$0xf]
  %v1843 = vld [vmem:[%s12 + $0x70] sm:$0xf]
  %v1844 = vld [vmem:[%s12 + $0x74] sm:$0xf]
  %v1845 = vld [vmem:[%s12 + $0x78] sm:$0xf]
  %v1846 = vld [vmem:[%s12 + $0x7c] sm:$0xf]
  %v1847 = vld [vmem:[%s13] sm:$0x1]
  %v1849 = vlaneseq
  %v1850 = vshrl.u32 %v1849, 7
  %v1851 = vsub.s32 0, %v1850
  %v1852 = vrot.slane %v1847, %v1851
  %v1886 = vunpack.c.l.b16 %v1815
  %v1887 = vunpack.c.l.b16 %v1816
  %v1888 = vunpack.c.l.b16 %v1817
  %v1889 = vunpack.c.l.b16 %v1818
  %v1890 = vunpack.c.l.b16 %v1819
  %v1891 = vunpack.c.l.b16 %v1820
  %v1892 = vunpack.c.l.b16 %v1821
  %v1893 = vunpack.c.l.b16 %v1822
  %v1894 = vunpack.c.l.b16 %v1823
  %v1895 = vunpack.c.l.b16 %v1824
  %v1896 = vunpack.c.l.b16 %v1825
  %v1897 = vunpack.c.l.b16 %v1826
  %v1898 = vunpack.c.l.b16 %v1827
  %v1899 = vunpack.c.l.b16 %v1828
  %v1900 = vunpack.c.l.b16 %v1829
  %v1901 = vunpack.c.l.b16 %v1830
  %v1902 = vunpack.c.l.b16 %v1831
  %v1903 = vunpack.c.l.b16 %v1832
  %v1904 = vunpack.c.l.b16 %v1833
  %v1905 = vunpack.c.l.b16 %v1834
  %v1906 = vunpack.c.l.b16 %v1835
  %v1907 = vunpack.c.l.b16 %v1836
  %v1908 = vunpack.c.l.b16 %v1837
  %v1909 = vunpack.c.l.b16 %v1838
  %v1910 = vunpack.c.l.b16 %v1839
  %v1911 = vunpack.c.l.b16 %v1840
  %v1912 = vunpack.c.l.b16 %v1841
  %v1913 = vunpack.c.l.b16 %v1842
  %v1914 = vunpack.c.l.b16 %v1843
  %v1915 = vunpack.c.l.b16 %v1844
  %v1916 = vunpack.c.l.b16 %v1845
  %v1917 = vunpack.c.l.b16 %v1846
  %v1918 = vpack.c.b16 %v1887, %v1886
  %v1919 = vpack.c.b16 %v1889, %v1888
  %v1920 = vpack.c.b16 %v1891, %v1890
  %v1921 = vpack.c.b16 %v1893, %v1892
  %v1922 = vpack.c.b16 %v1895, %v1894
  %v1923 = vpack.c.b16 %v1897, %v1896
  %v1924 = vpack.c.b16 %v1899, %v1898
  %v1925 = vpack.c.b16 %v1901, %v1900
  %v1926 = vpack.c.b16 %v1903, %v1902
  %v1927 = vpack.c.b16 %v1905, %v1904
  %v1928 = vpack.c.b16 %v1907, %v1906
  %v1929 = vpack.c.b16 %v1909, %v1908
  %v1930 = vpack.c.b16 %v1911, %v1910
  %v1931 = vpack.c.b16 %v1913, %v1912
  %v1932 = vpack.c.b16 %v1915, %v1914
  %v1933 = vpack.c.b16 %v1917, %v1916
  %1950 = vmatprep.subr.bf16.mxu0 0
  %1951 = vmatpush1.bf16.msra.mxu0 %v1918
  %1952 = vmatprep.subr.bf16.mxu0 0
  %1953 = vmatpush1.bf16.msra.mxu0 %v1919
  %1954 = vmatprep.subr.bf16.mxu0 0
  %1955 = vmatpush1.bf16.msra.mxu0 %v1920
  %1956 = vmatprep.subr.bf16.mxu0 0
  %1957 = vmatpush1.bf16.msra.mxu0 %v1921
  %1958 = vmatprep.subr.bf16.mxu0 0
  %1959 = vmatpush1.bf16.msra.mxu0 %v1922
  %1960 = vmatprep.subr.bf16.mxu0 0
  %1961 = vmatpush1.bf16.msra.mxu0 %v1923
  %1962 = vmatprep.subr.bf16.mxu0 0
  %1963 = vmatpush1.bf16.msra.mxu0 %v1924
  %1964 = vmatprep.subr.bf16.mxu0 0
  %1965 = vmatpush1.bf16.msra.mxu0 %v1925
  %1966 = vmatprep.subr.bf16.mxu0 0
  %1967 = vmatpush1.bf16.msra.mxu0 %v1926
  %1968 = vmatprep.subr.bf16.mxu0 0
  %1969 = vmatpush1.bf16.msra.mxu0 %v1927
  %1970 = vmatprep.subr.bf16.mxu0 0
  %1971 = vmatpush1.bf16.msra.mxu0 %v1928
  %1972 = vmatprep.subr.bf16.mxu0 0
  %1973 = vmatpush1.bf16.msra.mxu0 %v1929
  %1974 = vmatprep.subr.bf16.mxu0 0
  %1975 = vmatpush1.bf16.msra.mxu0 %v1930
  %1976 = vmatprep.subr.bf16.mxu0 0
  %1977 = vmatpush1.bf16.msra.mxu0 %v1931
  %1978 = vmatprep.subr.bf16.mxu0 0
  %1979 = vmatpush1.bf16.msra.mxu0 %v1932
  %1980 = vmatprep.subr.bf16.mxu0 0
  %1981 = vmatpush1.bf16.msra.mxu0 %v1933
  %1982 = vmatprep.mubr.bf16.mxu0 %v1814
  %1983 = vmatmul.mubr.bf16.gmra.mrb[0].mxu0 %v1813
  %v1984 = vpop.f32.mrb[0].mxu0
  %v1985 = vadd.f32 %v1852, %v1984
  %v1986 = vpop.f32.mrb[0].mxu0
  %v1987 = vpop.f32.mrb[0].mxu0
  %v1988 = vpop.f32.mrb[0].mxu0
  %1989 = vdwg.mxu0
  %vm1990 = vcmp.gt.f32.partialorder %v1985, 0.0
  %v1991 = vmul.f32 %v1985, 0.01
  %v1992 = vsel %vm1990, %v1985, %v1991
  %v1993 = vpack.c.bf16 %v1992, %v1992
  %v1994 = vld [vmem:[%s14] sm:$0xf]
  %v1995 = vld [vmem:[%s14 + $0x4] sm:$0xf]
  %v1996 = vld [vmem:[%s14 + $0x8] sm:$0xf]
  %v1997 = vld [vmem:[%s14 + $0xc] sm:$0xf]
  %v1998 = vld [vmem:[%s14 + $0x10] sm:$0xf]
  %v1999 = vld [vmem:[%s14 + $0x14] sm:$0xf]
  %v2000 = vld [vmem:[%s14 + $0x18] sm:$0xf]
  %v2001 = vld [vmem:[%s14 + $0x1c] sm:$0xf]
  %v2002 = vld [vmem:[%s15] sm:$0x1]
  %v2004 = vlaneseq
  %v2005 = vshrl.u32 %v2004, 7
  %v2006 = vsub.s32 0, %v2005
  %v2007 = vrot.slane %v2002, %v2006
  %v2017 = vunpack.c.l.b16 %v1994
  %v2018 = vunpack.c.l.b16 %v1995
  %v2019 = vunpack.c.l.b16 %v1996
  %v2020 = vunpack.c.l.b16 %v1997
  %v2021 = vunpack.c.l.b16 %v1998
  %v2022 = vunpack.c.l.b16 %v1999
  %v2023 = vunpack.c.l.b16 %v2000
  %v2024 = vunpack.c.l.b16 %v2001
  %v2025 = vpack.c.b16 %v2018, %v2017
  %v2026 = vpack.c.b16 %v2020, %v2019
  %v2027 = vpack.c.b16 %v2022, %v2021
  %v2028 = vpack.c.b16 %v2024, %v2023
  %v2034 = vsel %vm619, %v1993, 0
  %2036 = vmatprep.subr.bf16.mxu0 0
  %2037 = vmatpush1.bf16.msra.mxu0 %v2025
  %2038 = vmatprep.subr.bf16.mxu0 0
  %2039 = vmatpush1.bf16.msra.mxu0 %v2026
  %2040 = vmatprep.subr.bf16.mxu0 0
  %2041 = vmatpush1.bf16.msra.mxu0 %v2027
  %2042 = vmatprep.subr.bf16.mxu0 0
  %2043 = vmatpush1.bf16.msra.mxu0 %v2028
  %2044 = vmatprep.subr.bf16.mxu0 0
  %2045 = vmatpush1.bf16.msra.mxu0 0
  %2046 = vmatprep.subr.bf16.mxu0 0
  %2047 = vmatpush1.bf16.msra.mxu0 0
  %2048 = vmatprep.subr.bf16.mxu0 0
  %2049 = vmatpush1.bf16.msra.mxu0 0
  %2050 = vmatprep.subr.bf16.mxu0 0
  %2051 = vmatpush1.bf16.msra.mxu0 0
  %2052 = vmatprep.subr.bf16.mxu0 0
  %2053 = vmatpush1.bf16.msra.mxu0 0
  %2054 = vmatprep.subr.bf16.mxu0 0
  %2055 = vmatpush1.bf16.msra.mxu0 0
  %2056 = vmatprep.subr.bf16.mxu0 0
  %2057 = vmatpush1.bf16.msra.mxu0 0
  %2058 = vmatprep.subr.bf16.mxu0 0
  %2059 = vmatpush1.bf16.msra.mxu0 0
  %2060 = vmatprep.subr.bf16.mxu0 0
  %2061 = vmatpush1.bf16.msra.mxu0 0
  %2062 = vmatprep.subr.bf16.mxu0 0
  %2063 = vmatpush1.bf16.msra.mxu0 0
  %2064 = vmatprep.subr.bf16.mxu0 0
  %2065 = vmatpush1.bf16.msra.mxu0 0
  %2066 = vmatprep.subr.bf16.mxu0 0
  %2067 = vmatpush1.bf16.msra.mxu0 0
  %2068 = vmatprep.mubr.bf16.mxu0 0
  %2069 = vmatmul.mubr.bf16.gmra.mrb[0].mxu0 %v2034
  %v2070 = vpop.f32.mrb[0].mxu0
  %v2071 = vadd.f32 %v2007, %v2070
  %v2072 = vpop.f32.mrb[0].mxu0
  %v2073 = vpop.f32.mrb[0].mxu0
  %v2074 = vpop.f32.mrb[0].mxu0
  %2075 = vdwg.mxu0
  %v2076 = vld [vmem:[%s16] sm:$0xff]
  %v2077 = vld [vmem:[%s17] sm:$0x1]
  %v2079 = vlaneseq
  %v2080 = vshrl.u32 %v2079, 7
  %v2081 = vsub.s32 0, %v2080
  %v2082 = vrot.slane %v2077, %v2081
  %vm2084 = vcmask 64512
  %v2086 = vsel %vm2084, %v2071, 0
  %2088 = vmatprep.subr.mxu0 0.0
  %2089 = vmatpush1.msra.mxu0 %v2076
  %2090 = vmatprep.subr.mxu0 0.0
  %2091 = vmatpush1.msra.mxu0 0.0
  %2092 = vmatprep.subr.mxu0 0.0
  %2093 = vmatpush1.msra.mxu0 0.0
  %2094 = vmatprep.subr.mxu0 0.0
  %2095 = vmatpush1.msra.mxu0 0.0
  %2096 = vmatprep.subr.mxu0 0.0
  %2097 = vmatpush1.msra.mxu0 0.0
  %2098 = vmatprep.subr.mxu0 0.0
  %2099 = vmatpush1.msra.mxu0 0.0
  %2100 = vmatprep.subr.mxu0 0.0
  %2101 = vmatpush1.msra.mxu0 0.0
  %2102 = vmatprep.subr.mxu0 0.0
  %2103 = vmatpush1.msra.mxu0 0.0
  %2104 = vmatprep.subr.mxu0 0.0
  %2105 = vmatpush1.msra.mxu0 0.0
  %2106 = vmatprep.subr.mxu0 0.0
  %2107 = vmatpush1.msra.mxu0 0.0
  %2108 = vmatprep.subr.mxu0 0.0
  %2109 = vmatpush1.msra.mxu0 0.0
  %2110 = vmatprep.subr.mxu0 0.0
  %2111 = vmatpush1.msra.mxu0 0.0
  %2112 = vmatprep.subr.mxu0 0.0
  %2113 = vmatpush1.msra.mxu0 0.0
  %2114 = vmatprep.subr.mxu0 0.0
  %2115 = vmatpush1.msra.mxu0 0.0
  %2116 = vmatprep.subr.mxu0 0.0
  %2117 = vmatpush1.msra.mxu0 0.0
  %2118 = vmatprep.subr.mxu0 0.0
  %2119 = vmatpush1.msra.mxu0 0.0
  %2120 = vmatprep.subr.mxu0 0.0
  %2121 = vmatpush1.msra.mxu0 0.0
  %2122 = vmatprep.subr.mxu0 0.0
  %2123 = vmatpush1.msra.mxu0 0.0
  %2124 = vmatprep.subr.mxu0 0.0
  %2125 = vmatpush1.msra.mxu0 0.0
  %2126 = vmatprep.subr.mxu0 0.0
  %2127 = vmatpush1.msra.mxu0 0.0
  %2128 = vmatprep.subr.mxu0 0.0
  %2129 = vmatpush1.msra.mxu0 0.0
  %2130 = vmatprep.subr.mxu0 0.0
  %2131 = vmatpush1.msra.mxu0 0.0
  %2132 = vmatprep.subr.mxu0 0.0
  %2133 = vmatpush1.msra.mxu0 0.0
  %2134 = vmatprep.subr.mxu0 0.0
  %2135 = vmatpush1.msra.mxu0 0.0
  %2136 = vmatprep.subr.mxu0 0.0
  %2137 = vmatpush1.msra.mxu0 0.0
  %2138 = vmatprep.subr.mxu0 0.0
  %2139 = vmatpush1.msra.mxu0 0.0
  %2140 = vmatprep.subr.mxu0 0.0
  %2141 = vmatpush1.msra.mxu0 0.0
  %2142 = vmatprep.subr.mxu0 0.0
  %2143 = vmatpush1.msra.mxu0 0.0
  %2144 = vmatprep.subr.mxu0 0.0
  %2145 = vmatpush1.msra.mxu0 0.0
  %2146 = vmatprep.subr.mxu0 0.0
  %2147 = vmatpush1.msra.mxu0 0.0
  %2148 = vmatprep.subr.mxu0 0.0
  %2149 = vmatpush1.msra.mxu0 0.0
  %2150 = vmatprep.subr.mxu0 0.0
  %2151 = vmatpush1.msra.mxu0 0.0
  %2152 = vmatprep.mubr.f32.mxu0 0.0
  %2153 = vmatmul.mubr.f32.gmra.mrb[0].mxu0 %v2086
  %v2154 = vpop.f32.mrb[0].mxu0
  %v2155 = vadd.f32 %v2082, %v2154
  %v2156 = vpop.f32.mrb[0].mxu0
  %2157 = vdwg.mxu0
  %v2158 = vmax.f32 %v2155, 0.0
  %v2159 = vld [vmem:[%s18] sm:$0xff]
  %v2160 = vld [vmem:[%s18 + $0x8] sm:$0xff]
  %v2161 = vld [vmem:[%s18 + $0x10] sm:$0xff]
  %v2162 = vld [vmem:[%s18 + $0x18] sm:$0xff]
  %v2163 = vld [vmem:[%s19] sm:$0x1]
  %v2165 = vlaneseq
  %v2166 = vshrl.u32 %v2165, 7
  %v2167 = vsub.s32 0, %v2166
  %v2168 = vrot.slane %v2163, %v2167
  %vm2170 = vcmask 261120
  %v2172 = vsel %vm2170, %v2158, 0
  %2174 = vmatprep.subr.mxu0 0.0
  %2175 = vmatpush1.msra.mxu0 %v2159
  %2176 = vmatprep.subr.mxu0 0.0
  %2177 = vmatpush1.msra.mxu0 %v2160
  %2178 = vmatprep.subr.mxu0 0.0
  %2179 = vmatpush1.msra.mxu0 %v2161
  %2180 = vmatprep.subr.mxu0 0.0
  %2181 = vmatpush1.msra.mxu0 %v2162
  %2182 = vmatprep.subr.mxu0 0.0
  %2183 = vmatpush1.msra.mxu0 0.0
  %2184 = vmatprep.subr.mxu0 0.0
  %2185 = vmatpush1.msra.mxu0 0.0
  %2186 = vmatprep.subr.mxu0 0.0
  %2187 = vmatpush1.msra.mxu0 0.0
  %2188 = vmatprep.subr.mxu0 0.0
  %2189 = vmatpush1.msra.mxu0 0.0
  %2190 = vmatprep.subr.mxu0 0.0
  %2191 = vmatpush1.msra.mxu0 0.0
  %2192 = vmatprep.subr.mxu0 0.0
  %2193 = vmatpush1.msra.mxu0 0.0
  %2194 = vmatprep.subr.mxu0 0.0
  %2195 = vmatpush1.msra.mxu0 0.0
  %2196 = vmatprep.subr.mxu0 0.0
  %2197 = vmatpush1.msra.mxu0 0.0
  %2198 = vmatprep.subr.mxu0 0.0
  %2199 = vmatpush1.msra.mxu0 0.0
  %2200 = vmatprep.subr.mxu0 0.0
  %2201 = vmatpush1.msra.mxu0 0.0
  %2202 = vmatprep.subr.mxu0 0.0
  %2203 = vmatpush1.msra.mxu0 0.0
  %2204 = vmatprep.subr.mxu0 0.0
  %2205 = vmatpush1.msra.mxu0 0.0
  %2206 = vmatprep.subr.mxu0 0.0
  %2207 = vmatpush1.msra.mxu0 0.0
  %2208 = vmatprep.subr.mxu0 0.0
  %2209 = vmatpush1.msra.mxu0 0.0
  %2210 = vmatprep.subr.mxu0 0.0
  %2211 = vmatpush1.msra.mxu0 0.0
  %2212 = vmatprep.subr.mxu0 0.0
  %2213 = vmatpush1.msra.mxu0 0.0
  %2214 = vmatprep.subr.mxu0 0.0
  %2215 = vmatpush1.msra.mxu0 0.0
  %2216 = vmatprep.subr.mxu0 0.0
  %2217 = vmatpush1.msra.mxu0 0.0
  %2218 = vmatprep.subr.mxu0 0.0
  %2219 = vmatpush1.msra.mxu0 0.0
  %2220 = vmatprep.subr.mxu0 0.0
  %2221 = vmatpush1.msra.mxu0 0.0
  %2222 = vmatprep.subr.mxu0 0.0
  %2223 = vmatpush1.msra.mxu0 0.0
  %2224 = vmatprep.subr.mxu0 0.0
  %2225 = vmatpush1.msra.mxu0 0.0
  %2226 = vmatprep.subr.mxu0 0.0
  %2227 = vmatpush1.msra.mxu0 0.0
  %2228 = vmatprep.subr.mxu0 0.0
  %2229 = vmatpush1.msra.mxu0 0.0
  %2230 = vmatprep.subr.mxu0 0.0
  %2231 = vmatpush1.msra.mxu0 0.0
  %2232 = vmatprep.subr.mxu0 0.0
  %2233 = vmatpush1.msra.mxu0 0.0
  %2234 = vmatprep.subr.mxu0 0.0
  %2235 = vmatpush1.msra.mxu0 0.0
  %2236 = vmatprep.subr.mxu0 0.0
  %2237 = vmatpush1.msra.mxu0 0.0
  %2238 = vmatprep.mubr.f32.mxu0 0.0
  %2239 = vmatmul.mubr.f32.gmra.mrb[0].mxu0 %v2172
  %v2240 = vpop.f32.mrb[0].mxu0
  %v2241 = vadd.f32 %v2168, %v2240
  %v2242 = vpop.f32.mrb[0].mxu0
  %2243 = vdwg.mxu0
  %v2244 = vadd.f32 %v2241, 0.001
  %v2245 = vmul.f32 %v2244, %v2244
  %v2246 = vadd.f32 %v2245, 0.038729835
  %v2247 = vlaneseq
  %v2248 = vshrl.u32 %v2247, 7
  %v2249 = vlaneseq
  %v2250 = vand.u32 %v2249, 127
  %vm2251 = vcmp.eq.s32.totalorder %v2248, %v2250
  %v2252 = vsel %vm2084, %v1622, 0.0
  %v2253 = vsel %vm2084, %v1625, 0.0
  %v2254 = vadd.f32 %v2252, %v2253
  %v2255 = vrot.slane %v2254, 4
  %v2256 = vadd.f32 %v2254, %v2255
  %v2257 = vrot.slane %v2256, 2
  %v2258 = vadd.f32 %v2256, %v2257
  %v2259 = vrot.slane %v2258, 1
  %v2260 = vadd.f32 %v2258, %v2259
  %v2261 = vrcp.pop 16.0
  %v2262 = vmul.f32 %v2260, %v2261
  %v2263 = vsub.f32 %v1622, %v2262
  %v2264 = vsub.f32 %v1625, %v2262
  %2265 = vxpose.xlu0.b32.start [1/16] %v2263, 128
  %2266 = vxpose.xlu0.b32.cont [2/16] %v2264, 128
  %2267 = vxpose.xlu0.b32.cont [3/16] 0.0, 128
  %2268 = vxpose.xlu0.b32.cont [4/16] 0.0, 128
  %2269 = vxpose.xlu0.b32.cont [5/16] 0.0, 128
  %2270 = vxpose.xlu0.b32.cont [6/16] 0.0, 128
  %2271 = vxpose.xlu0.b32.cont [7/16] 0.0, 128
  %2272 = vxpose.xlu0.b32.cont [8/16] 0.0, 128
  %2273 = vxpose.xlu0.b32.cont [9/16] 0.0, 128
  %2274 = vxpose.xlu0.b32.cont [10/16] 0.0, 128
  %2275 = vxpose.xlu0.b32.cont [11/16] 0.0, 128
  %2276 = vxpose.xlu0.b32.cont [12/16] 0.0, 128
  %2277 = vxpose.xlu0.b32.cont [13/16] 0.0, 128
  %2278 = vxpose.xlu0.b32.cont [14/16] 0.0, 128
  %2279 = vxpose.xlu0.b32.cont [15/16] 0.0, 128
  %2280 = vxpose.xlu0.b32.end [16/16] 0.0, 128
  %v2281 = vpop.trf.xlu0
  %v2282 = vpop.trf.xlu0
  %v2283 = vpop.trf.xlu0
  %v2284 = vpop.trf.xlu0
  %v2285 = vpop.trf.xlu0
  %v2286 = vpop.trf.xlu0
  %v2287 = vpop.trf.xlu0
  %v2288 = vpop.trf.xlu0
  %v2289 = vpop.trf.xlu0
  %v2290 = vpop.trf.xlu0
  %v2291 = vpop.trf.xlu0
  %v2292 = vpop.trf.xlu0
  %v2293 = vpop.trf.xlu0
  %v2294 = vpop.trf.xlu0
  %v2295 = vpop.trf.xlu0
  %v2296 = vpop.trf.xlu0
  %vm2297 = vcmask 130048
  %v2299 = vsel %vm2297, %v2281, 0
  %2301 = vmatprep.subr.mxu0 0.0
  %2302 = vmatpush1.msra.mxu0 %v2263
  %2303 = vmatprep.subr.mxu0 0.0
  %2304 = vmatpush1.msra.mxu0 %v2264
  %2305 = vmatprep.subr.mxu0 0.0
  %2306 = vmatpush1.msra.mxu0 0.0
  %2307 = vmatprep.subr.mxu0 0.0
  %2308 = vmatpush1.msra.mxu0 0.0
  %2309 = vmatprep.subr.mxu0 0.0
  %2310 = vmatpush1.msra.mxu0 0.0
  %2311 = vmatprep.subr.mxu0 0.0
  %2312 = vmatpush1.msra.mxu0 0.0
  %2313 = vmatprep.subr.mxu0 0.0
  %2314 = vmatpush1.msra.mxu0 0.0
  %2315 = vmatprep.subr.mxu0 0.0
  %2316 = vmatpush1.msra.mxu0 0.0
  %2317 = vmatprep.subr.mxu0 0.0
  %2318 = vmatpush1.msra.mxu0 0.0
  %2319 = vmatprep.subr.mxu0 0.0
  %2320 = vmatpush1.msra.mxu0 0.0
  %2321 = vmatprep.subr.mxu0 0.0
  %2322 = vmatpush1.msra.mxu0 0.0
  %2323 = vmatprep.subr.mxu0 0.0
  %2324 = vmatpush1.msra.mxu0 0.0
  %2325 = vmatprep.subr.mxu0 0.0
  %2326 = vmatpush1.msra.mxu0 0.0
  %2327 = vmatprep.subr.mxu0 0.0
  %2328 = vmatpush1.msra.mxu0 0.0
  %2329 = vmatprep.subr.mxu0 0.0
  %2330 = vmatpush1.msra.mxu0 0.0
  %2331 = vmatprep.subr.mxu0 0.0
  %2332 = vmatpush1.msra.mxu0 0.0
  %2333 = vmatprep.subr.mxu0 0.0
  %2334 = vmatpush1.msra.mxu0 0.0
  %2335 = vmatprep.subr.mxu0 0.0
  %2336 = vmatpush1.msra.mxu0 0.0
  %2337 = vmatprep.subr.mxu0 0.0
  %2338 = vmatpush1.msra.mxu0 0.0
  %2339 = vmatprep.subr.mxu0 0.0
  %2340 = vmatpush1.msra.mxu0 0.0
  %2341 = vmatprep.subr.mxu0 0.0
  %2342 = vmatpush1.msra.mxu0 0.0
  %2343 = vmatprep.subr.mxu0 0.0
  %2344 = vmatpush1.msra.mxu0 0.0
  %2345 = vmatprep.subr.mxu0 0.0
  %2346 = vmatpush1.msra.mxu0 0.0
  %2347 = vmatprep.subr.mxu0 0.0
  %2348 = vmatpush1.msra.mxu0 0.0
  %2349 = vmatprep.subr.mxu0 0.0
  %2350 = vmatpush1.msra.mxu0 0.0
  %2351 = vmatprep.subr.mxu0 0.0
  %2352 = vmatpush1.msra.mxu0 0.0
  %2353 = vmatprep.subr.mxu0 0.0
  %2354 = vmatpush1.msra.mxu0 0.0
  %2355 = vmatprep.subr.mxu0 0.0
  %2356 = vmatpush1.msra.mxu0 0.0
  %2357 = vmatprep.subr.mxu0 0.0
  %2358 = vmatpush1.msra.mxu0 0.0
  %2359 = vmatprep.subr.mxu0 0.0
  %2360 = vmatpush1.msra.mxu0 0.0
  %2361 = vmatprep.subr.mxu0 0.0
  %2362 = vmatpush1.msra.mxu0 0.0
  %2363 = vmatprep.subr.mxu0 0.0
  %2364 = vmatpush1.msra.mxu0 0.0
  %2365 = vmatprep.mubr.f32.mxu0 0.0
  %2366 = vmatmul.mubr.f32.gmra.mrb[0].mxu0 %v2299
  %v2367 = vpop.f32.mrb[0].mxu0
  %v2368 = vadd.f32 0.0, %v2367
  %v2369 = vpop.f32.mrb[0].mxu0
  %2370 = vdwg.mxu0
  %v2371 = vmul.f32 %v2368, 0.06666667
  %v2372 = vlaneseq
  %v2373 = vshrl.u32 %v2372, 7
  %v2374 = vsub.s32 0, %v2373
  %v2375 = vrot.slane %v2246, %v2374
  %v2376 = vsel %vm2251, %v2375, 0.0
  %v2377 = vadd.f32 %v2371, %v2376
  %v2378 = vsel %vm2084, %v1630, 0.0
  %v2379 = vsel %vm2084, %v1633, 0.0
  %v2380 = vadd.f32 %v2378, %v2379
  %v2381 = vrot.slane %v2380, 4
  %v2382 = vadd.f32 %v2380, %v2381
  %v2383 = vrot.slane %v2382, 2
  %v2384 = vadd.f32 %v2382, %v2383
  %v2385 = vrot.slane %v2384, 1
  %v2386 = vadd.f32 %v2384, %v2385
  %v2387 = vmul.f32 %v2386, %v2261
  %v2388 = vsub.f32 %v1630, %v2387
  %v2389 = vsub.f32 %v1633, %v2387
  %2390 = vxpose.xlu0.b32.start [1/16] %v2388, 128
  %2391 = vxpose.xlu0.b32.cont [2/16] %v2389, 128
  %2392 = vxpose.xlu0.b32.cont [3/16] 0.0, 128
  %2393 = vxpose.xlu0.b32.cont [4/16] 0.0, 128
  %2394 = vxpose.xlu0.b32.cont [5/16] 0.0, 128
  %2395 = vxpose.xlu0.b32.cont [6/16] 0.0, 128
  %2396 = vxpose.xlu0.b32.cont [7/16] 0.0, 128
  %2397 = vxpose.xlu0.b32.cont [8/16] 0.0, 128
  %2398 = vxpose.xlu0.b32.cont [9/16] 0.0, 128
  %2399 = vxpose.xlu0.b32.cont [10/16] 0.0, 128
  %2400 = vxpose.xlu0.b32.cont [11/16] 0.0, 128
  %2401 = vxpose.xlu0.b32.cont [12/16] 0.0, 128
  %2402 = vxpose.xlu0.b32.cont [13/16] 0.0, 128
  %2403 = vxpose.xlu0.b32.cont [14/16] 0.0, 128
  %2404 = vxpose.xlu0.b32.cont [15/16] 0.0, 128
  %2405 = vxpose.xlu0.b32.end [16/16] 0.0, 128
  %v2406 = vpop.trf.xlu0
  %v2407 = vpop.trf.xlu0
  %v2408 = vpop.trf.xlu0
  %v2409 = vpop.trf.xlu0
  %v2410 = vpop.trf.xlu0
  %v2411 = vpop.trf.xlu0
  %v2412 = vpop.trf.xlu0
  %v2413 = vpop.trf.xlu0
  %v2414 = vpop.trf.xlu0
  %v2415 = vpop.trf.xlu0
  %v2416 = vpop.trf.xlu0
  %v2417 = vpop.trf.xlu0
  %v2418 = vpop.trf.xlu0
  %v2419 = vpop.trf.xlu0
  %v2420 = vpop.trf.xlu0
  %v2421 = vpop.trf.xlu0
  %v2423 = vsel %vm2297, %v2406, 0
  %2425 = vmatprep.subr.mxu0 0.0
  %2426 = vmatpush1.msra.mxu0 %v2388
  %2427 = vmatprep.subr.mxu0 0.0
  %2428 = vmatpush1.msra.mxu0 %v2389
  %2429 = vmatprep.subr.mxu0 0.0
  %2430 = vmatpush1.msra.mxu0 0.0
  %2431 = vmatprep.subr.mxu0 0.0
  %2432 = vmatpush1.msra.mxu0 0.0
  %2433 = vmatprep.subr.mxu0 0.0
  %2434 = vmatpush1.msra.mxu0 0.0
  %2435 = vmatprep.subr.mxu0 0.0
  %2436 = vmatpush1.msra.mxu0 0.0
  %2437 = vmatprep.subr.mxu0 0.0
  %2438 = vmatpush1.msra.mxu0 0.0
  %2439 = vmatprep.subr.mxu0 0.0
  %2440 = vmatpush1.msra.mxu0 0.0
  %2441 = vmatprep.subr.mxu0 0.0
  %2442 = vmatpush1.msra.mxu0 0.0
  %2443 = vmatprep.subr.mxu0 0.0
  %2444 = vmatpush1.msra.mxu0 0.0
  %2445 = vmatprep.subr.mxu0 0.0
  %2446 = vmatpush1.msra.mxu0 0.0
  %2447 = vmatprep.subr.mxu0 0.0
  %2448 = vmatpush1.msra.mxu0 0.0
  %2449 = vmatprep.subr.mxu0 0.0
  %2450 = vmatpush1.msra.mxu0 0.0
  %2451 = vmatprep.subr.mxu0 0.0
  %2452 = vmatpush1.msra.mxu0 0.0
  %2453 = vmatprep.subr.mxu0 0.0
  %2454 = vmatpush1.msra.mxu0 0.0
  %2455 = vmatprep.subr.mxu0 0.0
  %2456 = vmatpush1.msra.mxu0 0.0
  %2457 = vmatprep.subr.mxu0 0.0
  %2458 = vmatpush1.msra.mxu0 0.0
  %2459 = vmatprep.subr.mxu0 0.0
  %2460 = vmatpush1.msra.mxu0 0.0
  %2461 = vmatprep.subr.mxu0 0.0
  %2462 = vmatpush1.msra.mxu0 0.0
  %2463 = vmatprep.subr.mxu0 0.0
  %2464 = vmatpush1.msra.mxu0 0.0
  %2465 = vmatprep.subr.mxu0 0.0
  %2466 = vmatpush1.msra.mxu0 0.0
  %2467 = vmatprep.subr.mxu0 0.0
  %2468 = vmatpush1.msra.mxu0 0.0
  %2469 = vmatprep.subr.mxu0 0.0
  %2470 = vmatpush1.msra.mxu0 0.0
  %2471 = vmatprep.subr.mxu0 0.0
  %2472 = vmatpush1.msra.mxu0 0.0
  %2473 = vmatprep.subr.mxu0 0.0
  %2474 = vmatpush1.msra.mxu0 0.0
  %2475 = vmatprep.subr.mxu0 0.0
  %2476 = vmatpush1.msra.mxu0 0.0
  %2477 = vmatprep.subr.mxu0 0.0
  %2478 = vmatpush1.msra.mxu0 0.0
  %2479 = vmatprep.subr.mxu0 0.0
  %2480 = vmatpush1.msra.mxu0 0.0
  %2481 = vmatprep.subr.mxu0 0.0
  %2482 = vmatpush1.msra.mxu0 0.0
  %2483 = vmatprep.subr.mxu0 0.0
  %2484 = vmatpush1.msra.mxu0 0.0
  %2485 = vmatprep.subr.mxu0 0.0
  %2486 = vmatpush1.msra.mxu0 0.0
  %2487 = vmatprep.subr.mxu0 0.0
  %2488 = vmatpush1.msra.mxu0 0.0
  %2489 = vmatprep.mubr.f32.mxu0 0.0
  %2490 = vmatmul.mubr.f32.gmra.mrb[0].mxu0 %v2423
  %v2491 = vpop.f32.mrb[0].mxu0
  %v2492 = vadd.f32 0.0, %v2491
  %v2493 = vpop.f32.mrb[0].mxu0
  %2494 = vdwg.mxu0
  %v2495 = vmul.f32 %v2492, 0.06666667
  %v2496 = vlaneseq
  %v2497 = vshrl.u32 %v2496, 7
  %v2498 = vsub.s32 1, %v2497
  %v2499 = vrot.slane %v2246, %v2498
  %v2500 = vsel %vm2251, %v2499, 0.0
  %v2501 = vadd.f32 %v2495, %v2500
  %v2502 = vrcp.pop %v2377
  %v2503 = vrcp.pop %v2501
  %v2504 = vmul.f32 %v2377, %v2502
  %v2505 = vmul.f32 %v2501, %v2503
  %v2506 = vsub.f32 2.0, %v2504
  %v2507 = vsub.f32 2.0, %v2505
  %v2508 = vmul.f32 %v2502, %v2506
  %v2509 = vmul.f32 %v2503, %v2507
  %2511 = vset.pattern.permute.xlu0 0
  %2512 = vperm.xlu0 %2511, %v2508
  %v2513 = vpop.permute.xlu0 %2512
  %2516 = vset.pattern.permute.xlu0 0
  %2517 = vperm.xlu0 %2516, %v2509
  %v2518 = vpop.permute.xlu0 %2517
  %v2520 = vmul.f32 %v2377, %v2513
  %v2521 = vmul.f32 %v2501, %v2518
  %v2522 = vmul.f32 %v2371, %v2513
  %v2523 = vmul.f32 %v2495, %v2518
  %vm2524 = vcmp.eq.s32.totalorder %v2248, 0
  %2526 = vset.pattern.permute.xlu0 0
  %2527 = vperm.xlu0 %2526, %v2377
  %v2528 = vpop.permute.xlu0 %2527
  %2531 = vset.pattern.permute.xlu0 0
  %2532 = vperm.xlu0 %2531, %v2501
  %v2533 = vpop.permute.xlu0 %2532
  %v2535 = vlaneseq
  %v2536 = vshrl.u32 %v2535, 7
  %v2537 = vsub.s32 0, %v2536
  %v2538 = vrot.slane %v2520, %v2537
  %v2539 = vlaneseq
  %v2540 = vshrl.u32 %v2539, 7
  %v2541 = vsub.s32 0, %v2540
  %v2542 = vrot.slane %v2521, %v2541
  %v2543 = vmul.f32 %v2528, %v2538
  %v2544 = vmul.f32 %v2533, %v2542
  %v2545 = vsub.f32 %v2377, %v2543
  %v2546 = vsub.f32 %v2501, %v2544
  %v2547 = vsel %vm2524, 1, 0
  %vm2548 = vcmp.eq.s32.totalorder %v2547, 1
  %v2549 = vsel %vm2548, %v2538, %v2545
  %v2550 = vsel %vm2548, %v2542, %v2546
  %v2551 = vlaneseq
  %v2552 = vshrl.u32 %v2551, 7
  %v2553 = vsub.s32 0, %v2552
  %v2554 = vrot.slane %v2522, %v2553
  %v2555 = vlaneseq
  %v2556 = vshrl.u32 %v2555, 7
  %v2557 = vsub.s32 0, %v2556
  %v2558 = vrot.slane %v2523, %v2557
  %v2559 = vmul.f32 %v2528, %v2554
  %v2560 = vmul.f32 %v2533, %v2558
  %v2561 = vsub.f32 %v2371, %v2559
  %v2562 = vsub.f32 %v2495, %v2560
  %v2563 = vsel %vm2548, %v2554, %v2561
  %v2564 = vsel %vm2548, %v2558, %v2562
  %v2565 = vrcp.pop %v2549
  %v2566 = vrcp.pop %v2550
  %v2567 = vmul.f32 %v2549, %v2565
  %v2568 = vmul.f32 %v2550, %v2566
  %v2569 = vsub.f32 2.0, %v2567
  %v2570 = vsub.f32 2.0, %v2568
  %v2571 = vmul.f32 %v2565, %v2569
  %v2572 = vmul.f32 %v2566, %v2570
  %2574 = vset.pattern.permute.xlu0 1
  %2575 = vperm.xlu0 %2574, %v2571
  %v2576 = vpop.permute.xlu0 %2575
  %2579 = vset.pattern.permute.xlu0 1
  %2580 = vperm.xlu0 %2579, %v2572
  %v2581 = vpop.permute.xlu0 %2580
  %v2583 = vmul.f32 %v2549, %v2576
  %v2584 = vmul.f32 %v2550, %v2581
  %v2585 = vmul.f32 %v2563, %v2576
  %v2586 = vmul.f32 %v2564, %v2581
  %vm2587 = vcmp.eq.s32.totalorder %v2248, 1
  %2589 = vset.pattern.permute.xlu0 1
  %2590 = vperm.xlu0 %2589, %v2549
  %v2591 = vpop.permute.xlu0 %2590
  %2594 = vset.pattern.permute.xlu0 1
  %2595 = vperm.xlu0 %2594, %v2550
  %v2596 = vpop.permute.xlu0 %2595
  %v2598 = vlaneseq
  %v2599 = vshrl.u32 %v2598, 7
  %v2600 = vsub.s32 1, %v2599
  %v2601 = vrot.slane %v2583, %v2600
  %v2602 = vlaneseq
  %v2603 = vshrl.u32 %v2602, 7
  %v2604 = vsub.s32 1, %v2603
  %v2605 = vrot.slane %v2584, %v2604
  %v2606 = vmul.f32 %v2591, %v2601
  %v2607 = vmul.f32 %v2596, %v2605
  %v2608 = vsub.f32 %v2549, %v2606
  %v2609 = vsub.f32 %v2550, %v2607
  %v2610 = vsel %vm2587, 1, 0
  %vm2611 = vcmp.eq.s32.totalorder %v2610, 1
  %v2612 = vsel %vm2611, %v2601, %v2608
  %v2613 = vsel %vm2611, %v2605, %v2609
  %v2614 = vlaneseq
  %v2615 = vshrl.u32 %v2614, 7
  %v2616 = vsub.s32 1, %v2615
  %v2617 = vrot.slane %v2585, %v2616
  %v2618 = vlaneseq
  %v2619 = vshrl.u32 %v2618, 7
  %v2620 = vsub.s32 1, %v2619
  %v2621 = vrot.slane %v2586, %v2620
  %v2622 = vmul.f32 %v2591, %v2617
  %v2623 = vmul.f32 %v2596, %v2621
  %v2624 = vsub.f32 %v2563, %v2622
  %v2625 = vsub.f32 %v2564, %v2623
  %v2626 = vsel %vm2611, %v2617, %v2624
  %v2627 = vsel %vm2611, %v2621, %v2625
  %v2628 = vrcp.pop %v2612
  %v2629 = vrcp.pop %v2613
  %v2630 = vmul.f32 %v2612, %v2628
  %v2631 = vmul.f32 %v2613, %v2629
  %v2632 = vsub.f32 2.0, %v2630
  %v2633 = vsub.f32 2.0, %v2631
  %v2634 = vmul.f32 %v2628, %v2632
  %v2635 = vmul.f32 %v2629, %v2633
  %2637 = vset.pattern.permute.xlu0 2
  %2638 = vperm.xlu0 %2637, %v2634
  %v2639 = vpop.permute.xlu0 %2638
  %2642 = vset.pattern.permute.xlu0 2
  %2643 = vperm.xlu0 %2642, %v2635
  %v2644 = vpop.permute.xlu0 %2643
  %v2646 = vmul.f32 %v2612, %v2639
  %v2647 = vmul.f32 %v2613, %v2644
  %v2648 = vmul.f32 %v2626, %v2639
  %v2649 = vmul.f32 %v2627, %v2644
  %vm2650 = vcmp.eq.s32.totalorder %v2248, 2
  %2652 = vset.pattern.permute.xlu0 2
  %2653 = vperm.xlu0 %2652, %v2612
  %v2654 = vpop.permute.xlu0 %2653
  %2657 = vset.pattern.permute.xlu0 2
  %2658 = vperm.xlu0 %2657, %v2613
  %v2659 = vpop.permute.xlu0 %2658
  %v2661 = vlaneseq
  %v2662 = vshrl.u32 %v2661, 7
  %v2663 = vsub.s32 2, %v2662
  %v2664 = vrot.slane %v2646, %v2663
  %v2665 = vlaneseq
  %v2666 = vshrl.u32 %v2665, 7
  %v2667 = vsub.s32 2, %v2666
  %v2668 = vrot.slane %v2647, %v2667
  %v2669 = vmul.f32 %v2654, %v2664
  %v2670 = vmul.f32 %v2659, %v2668
  %v2671 = vsub.f32 %v2612, %v2669
  %v2672 = vsub.f32 %v2613, %v2670
  %v2673 = vsel %vm2650, 1, 0
  %vm2674 = vcmp.eq.s32.totalorder %v2673, 1
  %v2675 = vsel %vm2674, %v2664, %v2671
  %v2676 = vsel %vm2674, %v2668, %v2672
  %v2677 = vlaneseq
  %v2678 = vshrl.u32 %v2677, 7
  %v2679 = vsub.s32 2, %v2678
  %v2680 = vrot.slane %v2648, %v2679
  %v2681 = vlaneseq
  %v2682 = vshrl.u32 %v2681, 7
  %v2683 = vsub.s32 2, %v2682
  %v2684 = vrot.slane %v2649, %v2683
  %v2685 = vmul.f32 %v2654, %v2680
  %v2686 = vmul.f32 %v2659, %v2684
  %v2687 = vsub.f32 %v2626, %v2685
  %v2688 = vsub.f32 %v2627, %v2686
  %v2689 = vsel %vm2674, %v2680, %v2687
  %v2690 = vsel %vm2674, %v2684, %v2688
  %v2691 = vrcp.pop %v2675
  %v2692 = vrcp.pop %v2676
  %v2693 = vmul.f32 %v2675, %v2691
  %v2694 = vmul.f32 %v2676, %v2692
  %v2695 = vsub.f32 2.0, %v2693
  %v2696 = vsub.f32 2.0, %v2694
  %v2697 = vmul.f32 %v2691, %v2695
  %v2698 = vmul.f32 %v2692, %v2696
  %2700 = vset.pattern.permute.xlu0 3
  %2701 = vperm.xlu0 %2700, %v2697
  %v2702 = vpop.permute.xlu0 %2701
  %2705 = vset.pattern.permute.xlu0 3
  %2706 = vperm.xlu0 %2705, %v2698
  %v2707 = vpop.permute.xlu0 %2706
  %v2709 = vmul.f32 %v2675, %v2702
  %v2710 = vmul.f32 %v2676, %v2707
  %v2711 = vmul.f32 %v2689, %v2702
  %v2712 = vmul.f32 %v2690, %v2707
  %vm2713 = vcmp.eq.s32.totalorder %v2248, 3
  %2715 = vset.pattern.permute.xlu0 3
  %2716 = vperm.xlu0 %2715, %v2675
  %v2717 = vpop.permute.xlu0 %2716
  %2720 = vset.pattern.permute.xlu0 3
  %2721 = vperm.xlu0 %2720, %v2676
  %v2722 = vpop.permute.xlu0 %2721
  %v2724 = vlaneseq
  %v2725 = vshrl.u32 %v2724, 7
  %v2726 = vsub.s32 3, %v2725
  %v2727 = vrot.slane %v2709, %v2726
  %v2728 = vlaneseq
  %v2729 = vshrl.u32 %v2728, 7
  %v2730 = vsub.s32 3, %v2729
  %v2731 = vrot.slane %v2710, %v2730
  %v2732 = vmul.f32 %v2717, %v2727
  %v2733 = vmul.f32 %v2722, %v2731
  %v2734 = vsub.f32 %v2675, %v2732
  %v2735 = vsub.f32 %v2676, %v2733
  %v2736 = vsel %vm2713, 1, 0
  %vm2737 = vcmp.eq.s32.totalorder %v2736, 1
  %v2738 = vsel %vm2737, %v2727, %v2734
  %v2739 = vsel %vm2737, %v2731, %v2735
  %v2740 = vlaneseq
  %v2741 = vshrl.u32 %v2740, 7
  %v2742 = vsub.s32 3, %v2741
  %v2743 = vrot.slane %v2711, %v2742
  %v2744 = vlaneseq
  %v2745 = vshrl.u32 %v2744, 7
  %v2746 = vsub.s32 3, %v2745
  %v2747 = vrot.slane %v2712, %v2746
  %v2748 = vmul.f32 %v2717, %v2743
  %v2749 = vmul.f32 %v2722, %v2747
  %v2750 = vsub.f32 %v2689, %v2748
  %v2751 = vsub.f32 %v2690, %v2749
  %v2752 = vsel %vm2737, %v2743, %v2750
  %v2753 = vsel %vm2737, %v2747, %v2751
  %v2754 = vrcp.pop %v2738
  %v2755 = vrcp.pop %v2739
  %v2756 = vmul.f32 %v2738, %v2754
  %v2757 = vmul.f32 %v2739, %v2755
  %v2758 = vsub.f32 2.0, %v2756
  %v2759 = vsub.f32 2.0, %v2757
  %v2760 = vmul.f32 %v2754, %v2758
  %v2761 = vmul.f32 %v2755, %v2759
  %2763 = vset.pattern.permute.xlu0 4
  %2764 = vperm.xlu0 %2763, %v2760
  %v2765 = vpop.permute.xlu0 %2764
  %2768 = vset.pattern.permute.xlu0 4
  %2769 = vperm.xlu0 %2768, %v2761
  %v2770 = vpop.permute.xlu0 %2769
  %v2772 = vmul.f32 %v2738, %v2765
  %v2773 = vmul.f32 %v2739, %v2770
  %v2774 = vmul.f32 %v2752, %v2765
  %v2775 = vmul.f32 %v2753, %v2770
  %vm2776 = vcmp.eq.s32.totalorder %v2248, 4
  %2778 = vset.pattern.permute.xlu0 4
  %2779 = vperm.xlu0 %2778, %v2738
  %v2780 = vpop.permute.xlu0 %2779
  %2783 = vset.pattern.permute.xlu0 4
  %2784 = vperm.xlu0 %2783, %v2739
  %v2785 = vpop.permute.xlu0 %2784
  %v2787 = vlaneseq
  %v2788 = vshrl.u32 %v2787, 7
  %v2789 = vsub.s32 4, %v2788
  %v2790 = vrot.slane %v2772, %v2789
  %v2791 = vlaneseq
  %v2792 = vshrl.u32 %v2791, 7
  %v2793 = vsub.s32 4, %v2792
  %v2794 = vrot.slane %v2773, %v2793
  %v2795 = vmul.f32 %v2780, %v2790
  %v2796 = vmul.f32 %v2785, %v2794
  %v2797 = vsub.f32 %v2738, %v2795
  %v2798 = vsub.f32 %v2739, %v2796
  %v2799 = vsel %vm2776, 1, 0
  %vm2800 = vcmp.eq.s32.totalorder %v2799, 1
  %v2801 = vsel %vm2800, %v2790, %v2797
  %v2802 = vsel %vm2800, %v2794, %v2798
  %v2803 = vlaneseq
  %v2804 = vshrl.u32 %v2803, 7
  %v2805 = vsub.s32 4, %v2804
  %v2806 = vrot.slane %v2774, %v2805
  %v2807 = vlaneseq
  %v2808 = vshrl.u32 %v2807, 7
  %v2809 = vsub.s32 4, %v2808
  %v2810 = vrot.slane %v2775, %v2809
  %v2811 = vmul.f32 %v2780, %v2806
  %v2812 = vmul.f32 %v2785, %v2810
  %v2813 = vsub.f32 %v2752, %v2811
  %v2814 = vsub.f32 %v2753, %v2812
  %v2815 = vsel %vm2800, %v2806, %v2813
  %v2816 = vsel %vm2800, %v2810, %v2814
  %v2817 = vrcp.pop %v2801
  %v2818 = vrcp.pop %v2802
  %v2819 = vmul.f32 %v2801, %v2817
  %v2820 = vmul.f32 %v2802, %v2818
  %v2821 = vsub.f32 2.0, %v2819
  %v2822 = vsub.f32 2.0, %v2820
  %v2823 = vmul.f32 %v2817, %v2821
  %v2824 = vmul.f32 %v2818, %v2822
  %2826 = vset.pattern.permute.xlu0 5
  %2827 = vperm.xlu0 %2826, %v2823
  %v2828 = vpop.permute.xlu0 %2827
  %2831 = vset.pattern.permute.xlu0 5
  %2832 = vperm.xlu0 %2831, %v2824
  %v2833 = vpop.permute.xlu0 %2832
  %v2835 = vmul.f32 %v2801, %v2828
  %v2836 = vmul.f32 %v2802, %v2833
  %v2837 = vmul.f32 %v2815, %v2828
  %v2838 = vmul.f32 %v2816, %v2833
  %vm2839 = vcmp.eq.s32.totalorder %v2248, 5
  %2841 = vset.pattern.permute.xlu0 5
  %2842 = vperm.xlu0 %2841, %v2801
  %v2843 = vpop.permute.xlu0 %2842
  %2846 = vset.pattern.permute.xlu0 5
  %2847 = vperm.xlu0 %2846, %v2802
  %v2848 = vpop.permute.xlu0 %2847
  %v2850 = vlaneseq
  %v2851 = vshrl.u32 %v2850, 7
  %v2852 = vsub.s32 5, %v2851
  %v2853 = vrot.slane %v2835, %v2852
  %v2854 = vlaneseq
  %v2855 = vshrl.u32 %v2854, 7
  %v2856 = vsub.s32 5, %v2855
  %v2857 = vrot.slane %v2836, %v2856
  %v2858 = vmul.f32 %v2843, %v2853
  %v2859 = vmul.f32 %v2848, %v2857
  %v2860 = vsub.f32 %v2801, %v2858
  %v2861 = vsub.f32 %v2802, %v2859
  %v2862 = vsel %vm2839, 1, 0
  %vm2863 = vcmp.eq.s32.totalorder %v2862, 1
  %v2864 = vsel %vm2863, %v2853, %v2860
  %v2865 = vsel %vm2863, %v2857, %v2861
  %v2866 = vlaneseq
  %v2867 = vshrl.u32 %v2866, 7
  %v2868 = vsub.s32 5, %v2867
  %v2869 = vrot.slane %v2837, %v2868
  %v2870 = vlaneseq
  %v2871 = vshrl.u32 %v2870, 7
  %v2872 = vsub.s32 5, %v2871
  %v2873 = vrot.slane %v2838, %v2872
  %v2874 = vmul.f32 %v2843, %v2869
  %v2875 = vmul.f32 %v2848, %v2873
  %v2876 = vsub.f32 %v2815, %v2874
  %v2877 = vsub.f32 %v2816, %v2875
  %v2878 = vsel %vm2863, %v2869, %v2876
  %v2879 = vsel %vm2863, %v2873, %v2877
  %v2880 = vrcp.pop %v2864
  %v2881 = vrcp.pop %v2865
  %v2882 = vmul.f32 %v2864, %v2880
  %v2883 = vmul.f32 %v2865, %v2881
  %v2884 = vsub.f32 2.0, %v2882
  %v2885 = vsub.f32 2.0, %v2883
  %v2886 = vmul.f32 %v2880, %v2884
  %v2887 = vmul.f32 %v2881, %v2885
  %2889 = vset.pattern.permute.xlu0 6
  %2890 = vperm.xlu0 %2889, %v2886
  %v2891 = vpop.permute.xlu0 %2890
  %2894 = vset.pattern.permute.xlu0 6
  %2895 = vperm.xlu0 %2894, %v2887
  %v2896 = vpop.permute.xlu0 %2895
  %v2898 = vmul.f32 %v2864, %v2891
  %v2899 = vmul.f32 %v2865, %v2896
  %v2900 = vmul.f32 %v2878, %v2891
  %v2901 = vmul.f32 %v2879, %v2896
  %vm2902 = vcmp.eq.s32.totalorder %v2248, 6
  %2904 = vset.pattern.permute.xlu0 6
  %2905 = vperm.xlu0 %2904, %v2864
  %v2906 = vpop.permute.xlu0 %2905
  %2909 = vset.pattern.permute.xlu0 6
  %2910 = vperm.xlu0 %2909, %v2865
  %v2911 = vpop.permute.xlu0 %2910
  %v2913 = vlaneseq
  %v2914 = vshrl.u32 %v2913, 7
  %v2915 = vsub.s32 6, %v2914
  %v2916 = vrot.slane %v2898, %v2915
  %v2917 = vlaneseq
  %v2918 = vshrl.u32 %v2917, 7
  %v2919 = vsub.s32 6, %v2918
  %v2920 = vrot.slane %v2899, %v2919
  %v2921 = vmul.f32 %v2906, %v2916
  %v2922 = vmul.f32 %v2911, %v2920
  %v2923 = vsub.f32 %v2864, %v2921
  %v2924 = vsub.f32 %v2865, %v2922
  %v2925 = vsel %vm2902, 1, 0
  %vm2926 = vcmp.eq.s32.totalorder %v2925, 1
  %v2927 = vsel %vm2926, %v2916, %v2923
  %v2928 = vsel %vm2926, %v2920, %v2924
  %v2929 = vlaneseq
  %v2930 = vshrl.u32 %v2929, 7
  %v2931 = vsub.s32 6, %v2930
  %v2932 = vrot.slane %v2900, %v2931
  %v2933 = vlaneseq
  %v2934 = vshrl.u32 %v2933, 7
  %v2935 = vsub.s32 6, %v2934
  %v2936 = vrot.slane %v2901, %v2935
  %v2937 = vmul.f32 %v2906, %v2932
  %v2938 = vmul.f32 %v2911, %v2936
  %v2939 = vsub.f32 %v2878, %v2937
  %v2940 = vsub.f32 %v2879, %v2938
  %v2941 = vsel %vm2926, %v2932, %v2939
  %v2942 = vsel %vm2926, %v2936, %v2940
  %v2943 = vrcp.pop %v2927
  %v2944 = vrcp.pop %v2928
  %v2945 = vmul.f32 %v2927, %v2943
  %v2946 = vmul.f32 %v2928, %v2944
  %v2947 = vsub.f32 2.0, %v2945
  %v2948 = vsub.f32 2.0, %v2946
  %v2949 = vmul.f32 %v2943, %v2947
  %v2950 = vmul.f32 %v2944, %v2948
  %2952 = vset.pattern.permute.xlu0 7
  %2953 = vperm.xlu0 %2952, %v2949
  %v2954 = vpop.permute.xlu0 %2953
  %2957 = vset.pattern.permute.xlu0 7
  %2958 = vperm.xlu0 %2957, %v2950
  %v2959 = vpop.permute.xlu0 %2958
  %v2961 = vmul.f32 %v2941, %v2954
  %v2962 = vmul.f32 %v2942, %v2959
  %vm2963 = vcmp.eq.s32.totalorder %v2248, 7
  %2965 = vset.pattern.permute.xlu0 7
  %2966 = vperm.xlu0 %2965, %v2927
  %v2967 = vpop.permute.xlu0 %2966
  %2970 = vset.pattern.permute.xlu0 7
  %2971 = vperm.xlu0 %2970, %v2928
  %v2972 = vpop.permute.xlu0 %2971
  %v2974 = vlaneseq
  %v2975 = vshrl.u32 %v2974, 7
  %v2976 = vsub.s32 7, %v2975
  %v2977 = vrot.slane %v2961, %v2976
  %v2978 = vlaneseq
  %v2979 = vshrl.u32 %v2978, 7
  %v2980 = vsub.s32 7, %v2979
  %v2981 = vrot.slane %v2962, %v2980
  %v2982 = vmul.f32 %v2967, %v2977
  %v2983 = vmul.f32 %v2972, %v2981
  %v2984 = vsub.f32 %v2941, %v2982
  %v2985 = vsub.f32 %v2942, %v2983
  %v2986 = vsel %vm2963, 1, 0
  %vm2987 = vcmp.eq.s32.totalorder %v2986, 1
  %v2988 = vsel %vm2987, %v2977, %v2984
  %v2989 = vsel %vm2987, %v2981, %v2985
  %v2990 = vlaneseq
  %v2991 = vshrl.u32 %v2990, 7
  %v2992 = vsub.s32 0, %v2991
  %v2993 = vrot.slane %v2071, %v2992
  %v2994 = vsub.f32 %v2993, %v1622
  %v2995 = vsub.f32 %v2993, %v1625
  %v2997 = vsel %vm2084, %v2994, 0
  %v3000 = vsel %vm2084, %v2995, 0
  %3002 = vmatprep.subr.mxu0 0.0
  %3003 = vmatpush1.msra.mxu0 %v2988
  %3004 = vmatprep.subr.mxu0 0.0
  %3005 = vmatpush1.msra.mxu0 0.0
  %3006 = vmatprep.subr.mxu0 0.0
  %3007 = vmatpush1.msra.mxu0 0.0
  %3008 = vmatprep.subr.mxu0 0.0
  %3009 = vmatpush1.msra.mxu0 0.0
  %3010 = vmatprep.subr.mxu0 0.0
  %3011 = vmatpush1.msra.mxu0 0.0
  %3012 = vmatprep.subr.mxu0 0.0
  %3013 = vmatpush1.msra.mxu0 0.0
  %3014 = vmatprep.subr.mxu0 0.0
  %3015 = vmatpush1.msra.mxu0 0.0
  %3016 = vmatprep.subr.mxu0 0.0
  %3017 = vmatpush1.msra.mxu0 0.0
  %3018 = vmatprep.subr.mxu0 0.0
  %3019 = vmatpush1.msra.mxu0 0.0
  %3020 = vmatprep.subr.mxu0 0.0
  %3021 = vmatpush1.msra.mxu0 0.0
  %3022 = vmatprep.subr.mxu0 0.0
  %3023 = vmatpush1.msra.mxu0 0.0
  %3024 = vmatprep.subr.mxu0 0.0
  %3025 = vmatpush1.msra.mxu0 0.0
  %3026 = vmatprep.subr.mxu0 0.0
  %3027 = vmatpush1.msra.mxu0 0.0
  %3028 = vmatprep.subr.mxu0 0.0
  %3029 = vmatpush1.msra.mxu0 0.0
  %3030 = vmatprep.subr.mxu0 0.0
  %3031 = vmatpush1.msra.mxu0 0.0
  %3032 = vmatprep.subr.mxu0 0.0
  %3033 = vmatpush1.msra.mxu0 0.0
  %3034 = vmatprep.subr.mxu0 0.0
  %3035 = vmatpush1.msra.mxu0 0.0
  %3036 = vmatprep.subr.mxu0 0.0
  %3037 = vmatpush1.msra.mxu0 0.0
  %3038 = vmatprep.subr.mxu0 0.0
  %3039 = vmatpush1.msra.mxu0 0.0
  %3040 = vmatprep.subr.mxu0 0.0
  %3041 = vmatpush1.msra.mxu0 0.0
  %3042 = vmatprep.subr.mxu0 0.0
  %3043 = vmatpush1.msra.mxu0 0.0
  %3044 = vmatprep.subr.mxu0 0.0
  %3045 = vmatpush1.msra.mxu0 0.0
  %3046 = vmatprep.subr.mxu0 0.0
  %3047 = vmatpush1.msra.mxu0 0.0
  %3048 = vmatprep.subr.mxu0 0.0
  %3049 = vmatpush1.msra.mxu0 0.0
  %3050 = vmatprep.subr.mxu0 0.0
  %3051 = vmatpush1.msra.mxu0 0.0
  %3052 = vmatprep.subr.mxu0 0.0
  %3053 = vmatpush1.msra.mxu0 0.0
  %3054 = vmatprep.subr.mxu0 0.0
  %3055 = vmatpush1.msra.mxu0 0.0
  %3056 = vmatprep.subr.mxu0 0.0
  %3057 = vmatpush1.msra.mxu0 0.0
  %3058 = vmatprep.subr.mxu0 0.0
  %3059 = vmatpush1.msra.mxu0 0.0
  %3060 = vmatprep.subr.mxu0 0.0
  %3061 = vmatpush1.msra.mxu0 0.0
  %3062 = vmatprep.subr.mxu0 0.0
  %3063 = vmatpush1.msra.mxu0 0.0
  %3064 = vmatprep.subr.mxu0 0.0
  %3065 = vmatpush1.msra.mxu0 0.0
  %3066 = vmatprep.mubr.f32.mxu0 0.0
  %3067 = vmatmul.mubr.f32.gmra.mrb[0].mxu0 %v2997
  %v3068 = vpop.f32.mrb[0].mxu0
  %v3069 = vadd.f32 0.0, %v3068
  %v3070 = vpop.f32.mrb[0].mxu0
  %3071 = vmatprep.mubr.f32.mxu0 0.0
  %3072 = vmatmul.mubr.f32.gmra.mrb[0].mxu0 %v3000
  %v3073 = vpop.f32.mrb[0].mxu0
  %v3074 = vadd.f32 0.0, %v3073
  %v3075 = vpop.f32.mrb[0].mxu0
  %3076 = vdwg.mxu0
  %v3077 = vadd.f32 %v1622, %v3069
  %v3078 = vadd.f32 %v1625, %v3074
  %3079 = vst.msk [vmem:[%s20] sm:$0xff] %vm2084, %v3077
  %3080 = vst.msk [vmem:[%s20 + $0x8] sm:$0xff] %vm2084, %v3078
  %v3081 = vsel %vm2084, %v3077, 0.0
  %v3082 = vsel %vm2084, %v3078, 0.0
  %v3083 = vadd.f32 %v3081, %v3082
  %v3084 = vrot.slane %v3083, 4
  %v3085 = vadd.f32 %v3083, %v3084
  %v3086 = vrot.slane %v3085, 2
  %v3087 = vadd.f32 %v3085, %v3086
  %v3088 = vrot.slane %v3087, 1
  %v3089 = vadd.f32 %v3087, %v3088
  %v3090 = vmul.f32 %v3089, %v2261
  %vm3091 = vcmask 57344
  %3092 = vst.msk [vmem:[%s21] sm:$0x1] %vm3091, %v3090
  %3093 = vst.msk [vmem:[%s21 + $0x2] sm:$0x1] %vm3091, %v2262
  %v3094 = vlaneseq
  %v3095 = vshrl.u32 %v3094, 7
  %v3096 = vsub.s32 1, %v3095
  %v3097 = vrot.slane %v2071, %v3096
  %v3098 = vsub.f32 %v3097, %v1630
  %v3099 = vsub.f32 %v3097, %v1633
  %v3101 = vsel %vm2084, %v3098, 0
  %v3104 = vsel %vm2084, %v3099, 0
  %3106 = vmatprep.subr.mxu0 0.0
  %3107 = vmatpush1.msra.mxu0 %v2989
  %3108 = vmatprep.subr.mxu0 0.0
  %3109 = vmatpush1.msra.mxu0 0.0
  %3110 = vmatprep.subr.mxu0 0.0
  %3111 = vmatpush1.msra.mxu0 0.0
  %3112 = vmatprep.subr.mxu0 0.0
  %3113 = vmatpush1.msra.mxu0 0.0
  %3114 = vmatprep.subr.mxu0 0.0
  %3115 = vmatpush1.msra.mxu0 0.0
  %3116 = vmatprep.subr.mxu0 0.0
  %3117 = vmatpush1.msra.mxu0 0.0
  %3118 = vmatprep.subr.mxu0 0.0
  %3119 = vmatpush1.msra.mxu0 0.0
  %3120 = vmatprep.subr.mxu0 0.0
  %3121 = vmatpush1.msra.mxu0 0.0
  %3122 = vmatprep.subr.mxu0 0.0
  %3123 = vmatpush1.msra.mxu0 0.0
  %3124 = vmatprep.subr.mxu0 0.0
  %3125 = vmatpush1.msra.mxu0 0.0
  %3126 = vmatprep.subr.mxu0 0.0
  %3127 = vmatpush1.msra.mxu0 0.0
  %3128 = vmatprep.subr.mxu0 0.0
  %3129 = vmatpush1.msra.mxu0 0.0
  %3130 = vmatprep.subr.mxu0 0.0
  %3131 = vmatpush1.msra.mxu0 0.0
  %3132 = vmatprep.subr.mxu0 0.0
  %3133 = vmatpush1.msra.mxu0 0.0
  %3134 = vmatprep.subr.mxu0 0.0
  %3135 = vmatpush1.msra.mxu0 0.0
  %3136 = vmatprep.subr.mxu0 0.0
  %3137 = vmatpush1.msra.mxu0 0.0
  %3138 = vmatprep.subr.mxu0 0.0
  %3139 = vmatpush1.msra.mxu0 0.0
  %3140 = vmatprep.subr.mxu0 0.0
  %3141 = vmatpush1.msra.mxu0 0.0
  %3142 = vmatprep.subr.mxu0 0.0
  %3143 = vmatpush1.msra.mxu0 0.0
  %3144 = vmatprep.subr.mxu0 0.0
  %3145 = vmatpush1.msra.mxu0 0.0
  %3146 = vmatprep.subr.mxu0 0.0
  %3147 = vmatpush1.msra.mxu0 0.0
  %3148 = vmatprep.subr.mxu0 0.0
  %3149 = vmatpush1.msra.mxu0 0.0
  %3150 = vmatprep.subr.mxu0 0.0
  %3151 = vmatpush1.msra.mxu0 0.0
  %3152 = vmatprep.subr.mxu0 0.0
  %3153 = vmatpush1.msra.mxu0 0.0
  %3154 = vmatprep.subr.mxu0 0.0
  %3155 = vmatpush1.msra.mxu0 0.0
  %3156 = vmatprep.subr.mxu0 0.0
  %3157 = vmatpush1.msra.mxu0 0.0
  %3158 = vmatprep.subr.mxu0 0.0
  %3159 = vmatpush1.msra.mxu0 0.0
  %3160 = vmatprep.subr.mxu0 0.0
  %3161 = vmatpush1.msra.mxu0 0.0
  %3162 = vmatprep.subr.mxu0 0.0
  %3163 = vmatpush1.msra.mxu0 0.0
  %3164 = vmatprep.subr.mxu0 0.0
  %3165 = vmatpush1.msra.mxu0 0.0
  %3166 = vmatprep.subr.mxu0 0.0
  %3167 = vmatpush1.msra.mxu0 0.0
  %3168 = vmatprep.subr.mxu0 0.0
  %3169 = vmatpush1.msra.mxu0 0.0
  %3170 = vmatprep.mubr.f32.mxu0 0.0
  %3171 = vmatmul.mubr.f32.gmra.mrb[0].mxu0 %v3101
  %v3172 = vpop.f32.mrb[0].mxu0
  %v3173 = vadd.f32 0.0, %v3172
  %v3174 = vpop.f32.mrb[0].mxu0
  %3175 = vmatprep.mubr.f32.mxu0 0.0
  %3176 = vmatmul.mubr.f32.gmra.mrb[0].mxu0 %v3104
  %v3177 = vpop.f32.mrb[0].mxu0
  %v3178 = vadd.f32 0.0, %v3177
  %v3179 = vpop.f32.mrb[0].mxu0
  %3180 = vdwg.mxu0
  %v3181 = vadd.f32 %v1630, %v3173
  %v3182 = vadd.f32 %v1633, %v3178
  %3183 = vst.msk [vmem:[%s20 + $0x10] sm:$0xff] %vm2084, %v3181
  %3184 = vst.msk [vmem:[%s20 + $0x18] sm:$0xff] %vm2084, %v3182
  %v3185 = vsel %vm2084, %v3181, 0.0
  %v3186 = vsel %vm2084, %v3182, 0.0
  %v3187 = vadd.f32 %v3185, %v3186
  %v3188 = vrot.slane %v3187, 4
  %v3189 = vadd.f32 %v3187, %v3188
  %v3190 = vrot.slane %v3189, 2
  %v3191 = vadd.f32 %v3189, %v3190
  %v3192 = vrot.slane %v3191, 1
  %v3193 = vadd.f32 %v3191, %v3192
  %v3194 = vmul.f32 %v3193, %v2261
  %3195 = vst.msk [vmem:[%s21 + $0x1] sm:$0x1] %vm3091, %v3194
  %3196 = vst.msk [vmem:[%s21 + $0x3] sm:$0x1] %vm3091, %v2387
  %vm3197 = vcmask 58368
  %3198 = vst.msk [vmem:[%s21 + $0x4] sm:$0x3] %vm3197, %v2071
  // Predicated region
  $region148: #{kalman_forward.1} parent=0 // pred_check
    _
  $region149: #{kalman_forward.1} parent=0 // pred_check_branch
    %3200 = sbr.rel (0) target = $region151
  $region150: #{kalman_forward.1} parent=0 // pred_region
    _
  $region151: #{kalman_forward.1} parent=0 // pred_fallthru
    _
  // Predicated region
  $region152: #{kalman_forward.1} parent=0 // pred_check
    _
  $region153: #{kalman_forward.1} parent=0 // pred_check_branch
    %3202 = sbr.rel (0) target = $region155
  $region154: #{kalman_forward.1} parent=0 // pred_region
    _
  $region155: #{kalman_forward.1} parent=0 // pred_fallthru
    _
  // Predicated region
  $region156: #{kalman_forward.1} parent=0 // pred_check
    _
  $region157: #{kalman_forward.1} parent=0 // pred_check_branch
    %3204 = sbr.rel (0) target = $region159
  $region158: #{kalman_forward.1} parent=0 // pred_region
    _
  $region159: #{kalman_forward.1} parent=0 // pred_fallthru
    _
  // Predicated region
  $region160: #{kalman_forward.1} parent=0 // pred_check
    _
  $region161: #{kalman_forward.1} parent=0 // pred_check_branch
    %3206 = sbr.rel (0) target = $region163
  $region162: #{kalman_forward.1} parent=0 // pred_region
    _
  $region163: #{kalman_forward.1} parent=0 // pred_fallthru
    _
  %3207 = vsyncmov [#allocation4]
  %s3208 = vpop.sfrf %3207
  %p3209 = scmp.eq.s32.totalorder %s3208, 0
  %p3210 = pneg %p3209
  %3212 = shalt.err (%p3210)
  %s3213 = scalar_lea.sflag [#allocation4], 1
  %3214 = vsyncmov %s3213
  %s3215 = vpop.sfrf %3214
  %p3216 = scmp.eq.s32.totalorder %s3215, 0
  %p3217 = pneg %p3216
  %3219 = shalt.err (%p3217)

</llo_original>
